<compile_context>
chip_gen: v7x
topology: tpu7x:2x2x1
jax: 0.10.0
libtpu: 0.0.40
codegen_flags: <defaults>
</compile_context>

<pallas_src>
import functools
import math

import jax
import jax.numpy as jnp
from jax.experimental import pallas as pl
from jax.experimental.pallas import tpu as pltpu

CH = 32  # model channel width


# ----------------------------------------------------------------------------
# Fused Pallas kernel: one grid step == full CNNP forward for one image.
# ----------------------------------------------------------------------------
def cnnp_fused_kernel(xT_ref, wf_ref, bf_ref, wA_ref, bA_ref,
                      w33_ref, b33_ref, w5_ref, b5_ref, o_ref, *, HO, WO):
    """Full CNNP forward for one batch element (channels-on-sublanes layout).

    xT_ref : (1, 83, M)  bf16  im2col taps of the raw image (3x3|5x5|7x7)
    wf_ref : (96, 83)    bf16  block-diagonal first-conv weight
    bf_ref : (96, 1)     f32   first-conv biases (b1a|b2a|b3a)
    wA_ref : (32, 864)   bf16  fused c1b+c2b+c3b weight (tap-major, Cin=96)
    bA_ref : (32, 1)     f32   b1b + b2b + b3b
    w33_ref: (3, 32, 288) bf16 c4a / c4b / c5a weights (tap-major, Cin=32)
    b33_ref: (3, 32, 1)  f32   their biases
    w5_ref : (1, 288)    bf16  final Conv(32 -> 1, 3, 1, 1) weight
    b5_ref : (1, 1)      f32   its bias
    o_ref  : (1, 1, M)   f32   network output, flat spatial on lanes
    """
    M = HO * WO
    PAD = WO + 1                      # max |flat shift| of a 3x3 tap
    f32 = jnp.float32
    bf16 = jnp.bfloat16

    def leaky(v):                     # nn.LeakyReLU default slope = 0.01
        return jnp.where(v >= 0.0, v, 0.01 * v)

    # Horizontal-boundary masks (1, M), computed once: a flat 1-D shift by
    # dw = +/-1 would wrap into the neighbouring image row, so those taps are
    # zeroed at the left / right image edge.  Vertical boundaries are handled
    # by the zero padding of the flat activation.
    col = jax.lax.broadcasted_iota(jnp.int32, (1, M), 1) % WO
    not_left = (col != 0).astype(f32)         # taps with dw == -1
    not_right = (col != WO - 1).astype(f32)   # taps with dw == +1

    def conv3x3(act, w, bias):
        """3x3 / stride 1 / pad 1 conv as ONE K-concatenated MXU matmul.

        act : (Cin, M) f32, w : (Cout, 9*Cin) bf16, bias : (Cout, 1) f32
        -> (Cout, M) f32.  K index = tap*Cin + ci, tap = kh*3 + kw.
        """
        cin = act.shape[0]
        zpad = jnp.zeros((cin, PAD), dtype=f32)
        ap = jnp.concatenate([zpad, act, zpad], axis=1)    # (Cin, M + 2*PAD)
        ops = []
        for dh in (-1, 0, 1):
            for dw in (-1, 0, 1):
                s = dh * WO + dw
                op = ap[:, PAD + s: PAD + s + M]           # lane shift (XLU)
                if dw == -1:
                    op = op * not_left
                elif dw == 1:
                    op = op * not_right
                ops.append(op.astype(bf16))
        patches = jnp.concatenate(ops, axis=0)             # (9*Cin, M) bf16
        return jnp.dot(w, patches, preferred_element_type=f32) + bias

    # ---- stage 1: the three 1-channel first convs as one block-diag matmul --
    x = xT_ref[0]                                          # (83, M) bf16
    h123 = leaky(jnp.dot(wf_ref[...], x, preferred_element_type=f32)
                 + bf_ref[...])                            # (96, M) = h1|h2|h3

    # ---- stage 2: c1b + c2b + c3b + residual sum fused (96 -> 32) -----------
    s123 = conv3x3(h123, wA_ref[...], bA_ref[...])         # out1+out2+out3

    # ---- conv4 ---------------------------------------------------------------
    h4 = leaky(conv3x3(s123, w33_ref[0], b33_ref[0]))      # c4a + LeakyReLU
    out4 = conv3x3(h4, w33_ref[1], b33_ref[1])             # c4b (no act)
    s1234 = s123 + out4                                    # residual add (VPU)

    # ---- conv5 ---------------------------------------------------------------
    h5 = leaky(conv3x3(s1234, w33_ref[2], b33_ref[2]))     # c5a + LeakyReLU
    out5 = conv3x3(h5, w5_ref[...], b5_ref[...])           # c5b: (1, M)

    o_ref[...] = out5.reshape(1, 1, M)


# ----------------------------------------------------------------------------
# Wrapper
# ----------------------------------------------------------------------------
def cnnp_forward(images_nchw, params):
    """images_nchw: (B, 1, H, W) f32 -> (B, 1, H-2, W-2) f32 (CNNP.forward)."""
    B, cin, H, W = images_nchw.shape
    assert cin == 1, "CNNP expects single-channel input"
    C = CH
    HO, WO = H - 2, W - 2             # every branch produces (H-2, W-2)
    M = HO * WO
    bf16 = jnp.bfloat16

    # Pad once to the maximum halo (conv3a needs pad=2); per-branch windows
    # below realise effective paddings 0 / 1 / 2.  Taps are stacked on the
    # sublane axis (transposed im2col): xT[b, tap, m].
    x = images_nchw[:, 0, :, :]                              # (B, H, W)
    xpad = jnp.pad(x, ((0, 0), (2, 2), (2, 2)))              # (B, H+4, W+4)

    def taps_T(base, k):
        t = [xpad[:, base + kh: base + kh + HO, base + kw: base + kw + WO]
             .reshape(B, M) for kh in range(k) for kw in range(k)]
        return jnp.stack(t, axis=1)                          # (B, k*k, M)

    xT = jnp.concatenate([taps_T(2, 3), taps_T(1, 5), taps_T(0, 7)],
                         axis=1).astype(bf16)                # (B, 83, M)

    # ---- pack weights into MXU-friendly layouts ------------------------------
    # NOTE: params store conv weights as (kh, kw, cin, cout) [HWIO]; real
    # PyTorch weights (cout, cin, kh, kw) must be permuted (2, 3, 1, 0) first.
    w1a, b1a = params["c1a"]
    w2a, b2a = params["c2a"]
    w3a, b3a = params["c3a"]
    wf = jnp.zeros((3 * C, 83), jnp.float32)
    wf = wf.at[0:C, 0:9].set(w1a.reshape(9, C).T)
    wf = wf.at[C:2 * C, 9:34].set(w2a.reshape(25, C).T)
    wf = wf.at[2 * C:3 * C, 34:83].set(w3a.reshape(49, C).T)
    wf = wf.astype(bf16)                                     # (96, 83)
    bfirst = jnp.concatenate([b1a, b2a, b3a]).reshape(3 * C, 1)

    def pack33(w, cin_, cout_):
        # (3, 3, cin, cout) -> (cout, 9*cin), K index = tap*cin + ci
        return w.reshape(9, cin_, cout_).transpose(2, 0, 1).reshape(cout_,
                                                                    9 * cin_)

    w1b, b1b = params["c1b"]
    w2b, b2b = params["c2b"]
    w3b, b3b = params["c3b"]
    wA = pack33(jnp.concatenate([w1b, w2b, w3b], axis=2),
                3 * C, C).astype(bf16)                       # (32, 864)
    bA = (b1b + b2b + b3b).reshape(C, 1)

    w4a, b4a = params["c4a"]
    w4b, b4b = params["c4b"]
    w5a, b5a = params["c5a"]
    w33 = jnp.stack([pack33(w4a, C, C), pack33(w4b, C, C),
                     pack33(w5a, C, C)]).astype(bf16)        # (3, 32, 288)
    b33 = jnp.stack([b4a, b4b, b5a]).reshape(3, C, 1)

    w5b, b5b = params["c5b"]
    w5 = pack33(w5b, C, 1).astype(bf16)                      # (1, 288)
    b5 = b5b.reshape(1, 1)

    # Advisory cost hint for XLA's scheduler around the custom call.
    macs = M * (3 * C * 83 + C * 27 * C + 3 * C * 9 * C + 9 * C)
    cost = pl.CostEstimate(
        flops=2 * B * macs, transcendentals=0,
        bytes_accessed=(xT.size * 2
                        + (wf.size + wA.size + w33.size + w5.size) * 2
                        + (bfirst.size + bA.size + b33.size + b5.size) * 4
                        + B * M * 4))

    kernel = functools.partial(cnnp_fused_kernel, HO=HO, WO=WO)

    out_flat = pl.pallas_call(
        kernel,
        out_shape=jax.ShapeDtypeStruct((B, 1, M), jnp.float32),
        grid=(B,),
        in_specs=[
            pl.BlockSpec((1, 83, M), lambda b: (b, 0, 0)),       # xT (bf16)
            pl.BlockSpec((3 * C, 83), lambda b: (0, 0)),         # wf
            pl.BlockSpec((3 * C, 1), lambda b: (0, 0)),          # bfirst
            pl.BlockSpec((C, 27 * C), lambda b: (0, 0)),         # wA
            pl.BlockSpec((C, 1), lambda b: (0, 0)),              # bA
            pl.BlockSpec((3, C, 9 * C), lambda b: (0, 0, 0)),    # w33
            pl.BlockSpec((3, C, 1), lambda b: (0, 0, 0)),        # b33
            pl.BlockSpec((1, 9 * C), lambda b: (0, 0)),          # w5
            pl.BlockSpec((1, 1), lambda b: (0, 0)),              # b5
        ],
        out_specs=pl.BlockSpec((1, 1, M), lambda b: (b, 0, 0)),
        compiler_params=pltpu.CompilerParams(
            dimension_semantics=("parallel",)),
        cost_estimate=cost,
    )(xT, wf, bfirst, wA, bA, w33, b33, w5, b5)

    return out_flat.reshape(B, 1, HO, WO)


# ----------------------------------------------------------------------------
# Pure-JAX reference (same bf16-operand / f32-accumulate precision as the MXU)
# ----------------------------------------------------------------------------
def _conv_ref(x, w, b, padding):
    out = jax.lax.conv_general_dilated(
        x.astype(jnp.bfloat16), w.astype(jnp.bfloat16),
        window_strides=(1, 1), padding=[(padding, padding)] * 2,
        dimension_numbers=("NCHW", "HWIO", "NCHW"),
        preferred_element_type=jnp.float32)
    return out + b.reshape(1, -1, 1, 1)


def cnnp_reference(images, params):
    lre = lambda v: jnp.where(v >= 0.0, v, 0.01 * v)
    h1 = lre(_conv_ref(images, *params["c1a"], 0))
    out1 = _conv_ref(h1, *params["c1b"], 1)
    h2 = lre(_conv_ref(images, *params["c2a"], 1))
    out2 = _conv_ref(h2, *params["c2b"], 1)
    h3 = lre(_conv_ref(images, *params["c3a"], 2))
    out3 = _conv_ref(h3, *params["c3b"], 1)
    s = out1 + out2 + out3
    out4 = _conv_ref(lre(_conv_ref(s, *params["c4a"], 1)), *params["c4b"], 1)
    s2 = s + out4
    return _conv_ref(lre(_conv_ref(s2, *params["c5a"], 1)), *params["c5b"], 1)


# ----------------------------------------------------------------------------
# Parameter init (deterministic, PyTorch-default-like uniform bounds)
# ----------------------------------------------------------------------------
def init_conv(key, kh, kw, cin, cout):
    k_w, k_b = jax.random.split(key)
    fan_in = cin * kh * kw
    bound = 1.0 / math.sqrt(fan_in)
    w = jax.random.uniform(k_w, (kh, kw, cin, cout), jnp.float32, -bound, bound)
    b = jax.random.uniform(k_b, (cout,), jnp.float32, -bound, bound)
    return w, b


def init_cnnp_params(seed=0):
    channel = CH
    key = jax.random.PRNGKey(seed)
    ks = jax.random.split(key, 10)
    return {
        "c1a": init_conv(ks[0], 3, 3, 1, channel),        # Conv2d(1,32,3,1,0)
        "c1b": init_conv(ks[1], 3, 3, channel, channel),  # Conv2d(32,32,3,1,1)
        "c2a": init_conv(ks[2], 5, 5, 1, channel),        # Conv2d(1,32,5,1,1)
        "c2b": init_conv(ks[3], 3, 3, channel, channel),
        "c3a": init_conv(ks[4], 7, 7, 1, channel),        # Conv2d(1,32,7,1,2)
        "c3b": init_conv(ks[5], 3, 3, channel, channel),
        "c4a": init_conv(ks[6], 3, 3, channel, channel),
        "c4b": init_conv(ks[7], 3, 3, channel, channel),
        "c5a": init_conv(ks[8], 3, 3, channel, channel),
        "c5b": init_conv(ks[9], 3, 3, channel, 1),        # Conv2d(32,1,3,1,1)
    }


if __name__ == "__main__":
    B, H, W = 2, 16, 16
    key = jax.random.PRNGKey(0)
    images = jax.random.normal(key, (B, 1, H, W), dtype=jnp.float32)  # NCHW

    params = init_cnnp_params(seed=0)

    fwd = jax.jit(functools.partial(cnnp_forward, params=params))
    out = fwd(images)
    jax.block_until_ready(out)

    # All branches give spatial H-2 = 14; final channels = 1 (matches PyTorch).
    assert out.shape == (B, 1, H - 2, W - 2), out.shape
    assert out.dtype == jnp.float32
    assert bool(jnp.all(jnp.isfinite(out)))

    # Compare against an XLA conv reference at matching MXU precision.
    ref = cnnp_reference(images, params)
    rel = float(jnp.max(jnp.abs(out - ref)) / (jnp.max(jnp.abs(ref)) + 1e-3))
    assert rel < 2e-2, f"mismatch vs reference: rel={rel}"

    print("KERNEL_OK")
</pallas_src>

<mosaic_0001>
module attributes {stable_mosaic.version = 11 : i64} {
  func.func @cnnp_fused_kernel(%arg0: i32, %arg1: memref<1x83x196xbf16, #tpu.memory_space<vmem>>, %arg2: memref<96x83xbf16, #tpu.memory_space<vmem>>, %arg3: memref<96x1xf32, #tpu.memory_space<vmem>>, %arg4: memref<32x864xbf16, #tpu.memory_space<vmem>>, %arg5: memref<32x1xf32, #tpu.memory_space<vmem>>, %arg6: memref<3x32x288xbf16, #tpu.memory_space<vmem>>, %arg7: memref<3x32x1xf32, #tpu.memory_space<vmem>>, %arg8: memref<1x288xbf16, #tpu.memory_space<vmem>>, %arg9: memref<1x1xf32, #tpu.memory_space<vmem>>, %arg10: memref<1x1x196xf32, #tpu.memory_space<vmem>>) attributes {dimension_semantics = [#tpu.dimension_semantics<parallel>], iteration_bounds = array<i64: 2>, scalar_prefetch = 0 : i64, scratch_operands = 0 : i64, tpu.core_type = #tpu.core_type<tc>, window_params = [{transform_indices = @transform_0, window_bounds = array<i64: 1, 83, 196>}, {pipeline_mode = #tpu.pipeline_mode<synchronous>, transform_indices = @transform_1, window_bounds = array<i64: 96, 83>}, {pipeline_mode = #tpu.pipeline_mode<synchronous>, transform_indices = @transform_2, window_bounds = array<i64: 96, 1>}, {pipeline_mode = #tpu.pipeline_mode<synchronous>, transform_indices = @transform_3, window_bounds = array<i64: 32, 864>}, {pipeline_mode = #tpu.pipeline_mode<synchronous>, transform_indices = @transform_4, window_bounds = array<i64: 32, 1>}, {pipeline_mode = #tpu.pipeline_mode<synchronous>, transform_indices = @transform_5, window_bounds = array<i64: 3, 32, 288>}, {pipeline_mode = #tpu.pipeline_mode<synchronous>, transform_indices = @transform_6, window_bounds = array<i64: 3, 32, 1>}, {pipeline_mode = #tpu.pipeline_mode<synchronous>, transform_indices = @transform_7, window_bounds = array<i64: 1, 288>}, {pipeline_mode = #tpu.pipeline_mode<synchronous>, transform_indices = @transform_8, window_bounds = array<i64: 1, 1>}, {transform_indices = @transform_9, window_bounds = array<i64: 1, 1, 196>}]} {
    %0 = tpu.iota {dimensions = array<i32: 1>} : vector<1x196xi32>
    %c14_i32 = arith.constant 14 : i32
    %c0_i32 = arith.constant 0 : i32
    %1 = arith.cmpi eq, %c14_i32, %c0_i32 : i32
    %c1_i32 = arith.constant 1 : i32
    %2 = arith.select %1, %c1_i32, %c14_i32 : i32
    %3 = vector.broadcast %2 : i32 to vector<1x196xi32>
    %4 = arith.remsi %0, %3 : vector<1x196xi32>
    %c0_i32_0 = arith.constant 0 : i32
    %5 = vector.broadcast %c0_i32_0 : i32 to vector<1x196xi32>
    %6 = arith.cmpi ne, %4, %5 : vector<1x196xi32>
    %c0_i32_1 = arith.constant 0 : i32
    %7 = vector.broadcast %c0_i32_1 : i32 to vector<1x196xi32>
    %8 = arith.cmpi slt, %4, %7 : vector<1x196xi32>
    %c0_i32_2 = arith.constant 0 : i32
    %9 = arith.cmpi slt, %2, %c0_i32_2 : i32
    %10 = vector.broadcast %9 : i1 to vector<1x196xi1>
    %11 = vector.broadcast %10 : vector<1x196xi1> to vector<1x196xi1>
    %12 = arith.xori %8, %11 : vector<1x196xi1>
    %13 = arith.andi %12, %6 : vector<1x196xi1>
    %14 = vector.broadcast %2 : i32 to vector<1x196xi32>
    %15 = arith.addi %4, %14 : vector<1x196xi32>
    %16 = arith.select %13, %15, %4 : vector<1x196xi1>, vector<1x196xi32>
    %c0_i32_3 = arith.constant 0 : i32
    %17 = vector.broadcast %c0_i32_3 : i32 to vector<1x196xi32>
    %18 = arith.cmpi ne, %16, %17 : vector<1x196xi32>
    %19 = arith.extui %18 : vector<1x196xi1> to vector<1x196xi32>
    %20 = arith.sitofp %19 : vector<1x196xi32> to vector<1x196xf32>
    %c13_i32 = arith.constant 13 : i32
    %21 = vector.broadcast %c13_i32 : i32 to vector<1x196xi32>
    %22 = arith.cmpi ne, %16, %21 : vector<1x196xi32>
    %23 = arith.extui %22 : vector<1x196xi1> to vector<1x196xi32>
    %24 = arith.sitofp %23 : vector<1x196xi32> to vector<1x196xf32>
    %c0 = arith.constant 0 : index
    %c0_4 = arith.constant 0 : index
    %c0_5 = arith.constant 0 : index
    %25 = vector.load %arg1[%c0, %c0_4, %c0_5] : memref<1x83x196xbf16, #tpu.memory_space<vmem>>, vector<1x83x196xbf16>
    %26 = vector.shape_cast %25 : vector<1x83x196xbf16> to vector<83x196xbf16>
    %c0_6 = arith.constant 0 : index
    %c0_7 = arith.constant 0 : index
    %27 = vector.load %arg2[%c0_6, %c0_7] : memref<96x83xbf16, #tpu.memory_space<vmem>>, vector<96x83xbf16>
    %cst = arith.constant dense<0.000000e+00> : vector<96x196xf32>
    %28 = tpu.matmul %27, %26, %cst {dimension_numbers = #tpu.dot_dimension_numbers<[1], [0], [0], [1], [0, 0, 1, 1], [], []>} : vector<96x83xbf16>, vector<83x196xbf16>, vector<96x196xf32> -> vector<96x196xf32>
    %c0_8 = arith.constant 0 : index
    %c0_9 = arith.constant 0 : index
    %29 = vector.load %arg3[%c0_8, %c0_9] : memref<96x1xf32, #tpu.memory_space<vmem>>, vector<96x1xf32>
    %30 = vector.broadcast %29 : vector<96x1xf32> to vector<96x196xf32>
    %31 = arith.addf %28, %30 : vector<96x196xf32>
    %cst_10 = arith.constant 0.000000e+00 : f32
    %32 = vector.broadcast %cst_10 : f32 to vector<96x196xf32>
    %33 = arith.cmpf oge, %31, %32 : vector<96x196xf32>
    %cst_11 = arith.constant 0.00999999977 : f32
    %34 = vector.broadcast %cst_11 : f32 to vector<96x196xf32>
    %35 = arith.mulf %34, %31 : vector<96x196xf32>
    %36 = arith.select %33, %31, %35 : vector<96x196xi1>, vector<96x196xf32>
    %c0_12 = arith.constant 0 : index
    %c0_13 = arith.constant 0 : index
    %37 = vector.load %arg4[%c0_12, %c0_13] : memref<32x864xbf16, #tpu.memory_space<vmem>>, vector<32x864xbf16>
    %c0_14 = arith.constant 0 : index
    %c0_15 = arith.constant 0 : index
    %38 = vector.load %arg5[%c0_14, %c0_15] : memref<32x1xf32, #tpu.memory_space<vmem>>, vector<32x1xf32>
    %cst_16 = arith.constant 0.000000e+00 : f32
    %39 = vector.broadcast %cst_16 : f32 to vector<96x15xf32>
    %40 = tpu.concatenate %39, %36, %39 in 1 : vector<96x15xf32>, vector<96x196xf32>, vector<96x15xf32> -> vector<96x226xf32>
    %41 = vector.extract_strided_slice %40 {offsets = [0, 0], sizes = [96, 196], strides = [1, 1]} : vector<96x226xf32> to vector<96x196xf32>
    %42 = vector.broadcast %20 : vector<1x196xf32> to vector<96x196xf32>
    %43 = arith.mulf %41, %42 : vector<96x196xf32>
    %44 = arith.truncf %43 : vector<96x196xf32> to vector<96x196xbf16>
    %45 = vector.extract_strided_slice %40 {offsets = [0, 1], sizes = [96, 196], strides = [1, 1]} : vector<96x226xf32> to vector<96x196xf32>
    %46 = arith.truncf %45 : vector<96x196xf32> to vector<96x196xbf16>
    %47 = vector.extract_strided_slice %40 {offsets = [0, 2], sizes = [96, 196], strides = [1, 1]} : vector<96x226xf32> to vector<96x196xf32>
    %48 = vector.broadcast %24 : vector<1x196xf32> to vector<96x196xf32>
    %49 = arith.mulf %47, %48 : vector<96x196xf32>
    %50 = arith.truncf %49 : vector<96x196xf32> to vector<96x196xbf16>
    %51 = vector.extract_strided_slice %40 {offsets = [0, 14], sizes = [96, 196], strides = [1, 1]} : vector<96x226xf32> to vector<96x196xf32>
    %52 = vector.broadcast %20 : vector<1x196xf32> to vector<96x196xf32>
    %53 = arith.mulf %51, %52 : vector<96x196xf32>
    %54 = arith.truncf %53 : vector<96x196xf32> to vector<96x196xbf16>
    %55 = vector.extract_strided_slice %40 {offsets = [0, 15], sizes = [96, 196], strides = [1, 1]} : vector<96x226xf32> to vector<96x196xf32>
    %56 = arith.truncf %55 : vector<96x196xf32> to vector<96x196xbf16>
    %57 = vector.extract_strided_slice %40 {offsets = [0, 16], sizes = [96, 196], strides = [1, 1]} : vector<96x226xf32> to vector<96x196xf32>
    %58 = vector.broadcast %24 : vector<1x196xf32> to vector<96x196xf32>
    %59 = arith.mulf %57, %58 : vector<96x196xf32>
    %60 = arith.truncf %59 : vector<96x196xf32> to vector<96x196xbf16>
    %61 = vector.extract_strided_slice %40 {offsets = [0, 28], sizes = [96, 196], strides = [1, 1]} : vector<96x226xf32> to vector<96x196xf32>
    %62 = vector.broadcast %20 : vector<1x196xf32> to vector<96x196xf32>
    %63 = arith.mulf %61, %62 : vector<96x196xf32>
    %64 = arith.truncf %63 : vector<96x196xf32> to vector<96x196xbf16>
    %65 = vector.extract_strided_slice %40 {offsets = [0, 29], sizes = [96, 196], strides = [1, 1]} : vector<96x226xf32> to vector<96x196xf32>
    %66 = arith.truncf %65 : vector<96x196xf32> to vector<96x196xbf16>
    %67 = vector.extract_strided_slice %40 {offsets = [0, 30], sizes = [96, 196], strides = [1, 1]} : vector<96x226xf32> to vector<96x196xf32>
    %68 = vector.broadcast %24 : vector<1x196xf32> to vector<96x196xf32>
    %69 = arith.mulf %67, %68 : vector<96x196xf32>
    %70 = arith.truncf %69 : vector<96x196xf32> to vector<96x196xbf16>
    %71 = tpu.concatenate %44, %46, %50, %54, %56, %60, %64, %66, %70 in 0 : vector<96x196xbf16>, vector<96x196xbf16>, vector<96x196xbf16>, vector<96x196xbf16>, vector<96x196xbf16>, vector<96x196xbf16>, vector<96x196xbf16>, vector<96x196xbf16>, vector<96x196xbf16> -> vector<864x196xbf16>
    %cst_17 = arith.constant dense<0.000000e+00> : vector<32x196xf32>
    %72 = tpu.matmul %37, %71, %cst_17 {dimension_numbers = #tpu.dot_dimension_numbers<[1], [0], [0], [1], [0, 0, 1, 1], [], []>} : vector<32x864xbf16>, vector<864x196xbf16>, vector<32x196xf32> -> vector<32x196xf32>
    %73 = vector.broadcast %38 : vector<32x1xf32> to vector<32x196xf32>
    %74 = arith.addf %72, %73 : vector<32x196xf32>
    %c0_18 = arith.constant 0 : index
    %c0_19 = arith.constant 0 : index
    %c0_20 = arith.constant 0 : index
    %75 = vector.load %arg6[%c0_18, %c0_19, %c0_20] : memref<3x32x288xbf16, #tpu.memory_space<vmem>>, vector<1x32x288xbf16>
    %76 = vector.shape_cast %75 : vector<1x32x288xbf16> to vector<32x288xbf16>
    %c0_21 = arith.constant 0 : index
    %c0_22 = arith.constant 0 : index
    %c0_23 = arith.constant 0 : index
    %77 = vector.load %arg7[%c0_21, %c0_22, %c0_23] : memref<3x32x1xf32, #tpu.memory_space<vmem>>, vector<1x32x1xf32>
    %78 = vector.shape_cast %77 : vector<1x32x1xf32> to vector<32x1xf32>
    %cst_24 = arith.constant 0.000000e+00 : f32
    %79 = vector.broadcast %cst_24 : f32 to vector<32x15xf32>
    %80 = tpu.concatenate %79, %74, %79 in 1 : vector<32x15xf32>, vector<32x196xf32>, vector<32x15xf32> -> vector<32x226xf32>
    %81 = vector.extract_strided_slice %80 {offsets = [0, 0], sizes = [32, 196], strides = [1, 1]} : vector<32x226xf32> to vector<32x196xf32>
    %82 = vector.broadcast %20 : vector<1x196xf32> to vector<32x196xf32>
    %83 = arith.mulf %81, %82 : vector<32x196xf32>
    %84 = arith.truncf %83 : vector<32x196xf32> to vector<32x196xbf16>
    %85 = vector.extract_strided_slice %80 {offsets = [0, 1], sizes = [32, 196], strides = [1, 1]} : vector<32x226xf32> to vector<32x196xf32>
    %86 = arith.truncf %85 : vector<32x196xf32> to vector<32x196xbf16>
    %87 = vector.extract_strided_slice %80 {offsets = [0, 2], sizes = [32, 196], strides = [1, 1]} : vector<32x226xf32> to vector<32x196xf32>
    %88 = vector.broadcast %24 : vector<1x196xf32> to vector<32x196xf32>
    %89 = arith.mulf %87, %88 : vector<32x196xf32>
    %90 = arith.truncf %89 : vector<32x196xf32> to vector<32x196xbf16>
    %91 = vector.extract_strided_slice %80 {offsets = [0, 14], sizes = [32, 196], strides = [1, 1]} : vector<32x226xf32> to vector<32x196xf32>
    %92 = vector.broadcast %20 : vector<1x196xf32> to vector<32x196xf32>
    %93 = arith.mulf %91, %92 : vector<32x196xf32>
    %94 = arith.truncf %93 : vector<32x196xf32> to vector<32x196xbf16>
    %95 = vector.extract_strided_slice %80 {offsets = [0, 15], sizes = [32, 196], strides = [1, 1]} : vector<32x226xf32> to vector<32x196xf32>
    %96 = arith.truncf %95 : vector<32x196xf32> to vector<32x196xbf16>
    %97 = vector.extract_strided_slice %80 {offsets = [0, 16], sizes = [32, 196], strides = [1, 1]} : vector<32x226xf32> to vector<32x196xf32>
    %98 = vector.broadcast %24 : vector<1x196xf32> to vector<32x196xf32>
    %99 = arith.mulf %97, %98 : vector<32x196xf32>
    %100 = arith.truncf %99 : vector<32x196xf32> to vector<32x196xbf16>
    %101 = vector.extract_strided_slice %80 {offsets = [0, 28], sizes = [32, 196], strides = [1, 1]} : vector<32x226xf32> to vector<32x196xf32>
    %102 = vector.broadcast %20 : vector<1x196xf32> to vector<32x196xf32>
    %103 = arith.mulf %101, %102 : vector<32x196xf32>
    %104 = arith.truncf %103 : vector<32x196xf32> to vector<32x196xbf16>
    %105 = vector.extract_strided_slice %80 {offsets = [0, 29], sizes = [32, 196], strides = [1, 1]} : vector<32x226xf32> to vector<32x196xf32>
    %106 = arith.truncf %105 : vector<32x196xf32> to vector<32x196xbf16>
    %107 = vector.extract_strided_slice %80 {offsets = [0, 30], sizes = [32, 196], strides = [1, 1]} : vector<32x226xf32> to vector<32x196xf32>
    %108 = vector.broadcast %24 : vector<1x196xf32> to vector<32x196xf32>
    %109 = arith.mulf %107, %108 : vector<32x196xf32>
    %110 = arith.truncf %109 : vector<32x196xf32> to vector<32x196xbf16>
    %111 = tpu.concatenate %84, %86, %90, %94, %96, %100, %104, %106, %110 in 0 : vector<32x196xbf16>, vector<32x196xbf16>, vector<32x196xbf16>, vector<32x196xbf16>, vector<32x196xbf16>, vector<32x196xbf16>, vector<32x196xbf16>, vector<32x196xbf16>, vector<32x196xbf16> -> vector<288x196xbf16>
    %cst_25 = arith.constant dense<0.000000e+00> : vector<32x196xf32>
    %112 = tpu.matmul %76, %111, %cst_25 {dimension_numbers = #tpu.dot_dimension_numbers<[1], [0], [0], [1], [0, 0, 1, 1], [], []>} : vector<32x288xbf16>, vector<288x196xbf16>, vector<32x196xf32> -> vector<32x196xf32>
    %113 = vector.broadcast %78 : vector<32x1xf32> to vector<32x196xf32>
    %114 = arith.addf %112, %113 : vector<32x196xf32>
    %cst_26 = arith.constant 0.000000e+00 : f32
    %115 = vector.broadcast %cst_26 : f32 to vector<32x196xf32>
    %116 = arith.cmpf oge, %114, %115 : vector<32x196xf32>
    %cst_27 = arith.constant 0.00999999977 : f32
    %117 = vector.broadcast %cst_27 : f32 to vector<32x196xf32>
    %118 = arith.mulf %117, %114 : vector<32x196xf32>
    %119 = arith.select %116, %114, %118 : vector<32x196xi1>, vector<32x196xf32>
    %c1 = arith.constant 1 : index
    %c0_28 = arith.constant 0 : index
    %c0_29 = arith.constant 0 : index
    %120 = vector.load %arg6[%c1, %c0_28, %c0_29] : memref<3x32x288xbf16, #tpu.memory_space<vmem>>, vector<1x32x288xbf16>
    %121 = vector.shape_cast %120 : vector<1x32x288xbf16> to vector<32x288xbf16>
    %c1_30 = arith.constant 1 : index
    %c0_31 = arith.constant 0 : index
    %c0_32 = arith.constant 0 : index
    %122 = vector.load %arg7[%c1_30, %c0_31, %c0_32] : memref<3x32x1xf32, #tpu.memory_space<vmem>>, vector<1x32x1xf32>
    %123 = vector.shape_cast %122 : vector<1x32x1xf32> to vector<32x1xf32>
    %cst_33 = arith.constant 0.000000e+00 : f32
    %124 = vector.broadcast %cst_33 : f32 to vector<32x15xf32>
    %125 = tpu.concatenate %124, %119, %124 in 1 : vector<32x15xf32>, vector<32x196xf32>, vector<32x15xf32> -> vector<32x226xf32>
    %126 = vector.extract_strided_slice %125 {offsets = [0, 0], sizes = [32, 196], strides = [1, 1]} : vector<32x226xf32> to vector<32x196xf32>
    %127 = vector.broadcast %20 : vector<1x196xf32> to vector<32x196xf32>
    %128 = arith.mulf %126, %127 : vector<32x196xf32>
    %129 = arith.truncf %128 : vector<32x196xf32> to vector<32x196xbf16>
    %130 = vector.extract_strided_slice %125 {offsets = [0, 1], sizes = [32, 196], strides = [1, 1]} : vector<32x226xf32> to vector<32x196xf32>
    %131 = arith.truncf %130 : vector<32x196xf32> to vector<32x196xbf16>
    %132 = vector.extract_strided_slice %125 {offsets = [0, 2], sizes = [32, 196], strides = [1, 1]} : vector<32x226xf32> to vector<32x196xf32>
    %133 = vector.broadcast %24 : vector<1x196xf32> to vector<32x196xf32>
    %134 = arith.mulf %132, %133 : vector<32x196xf32>
    %135 = arith.truncf %134 : vector<32x196xf32> to vector<32x196xbf16>
    %136 = vector.extract_strided_slice %125 {offsets = [0, 14], sizes = [32, 196], strides = [1, 1]} : vector<32x226xf32> to vector<32x196xf32>
    %137 = vector.broadcast %20 : vector<1x196xf32> to vector<32x196xf32>
    %138 = arith.mulf %136, %137 : vector<32x196xf32>
    %139 = arith.truncf %138 : vector<32x196xf32> to vector<32x196xbf16>
    %140 = vector.extract_strided_slice %125 {offsets = [0, 15], sizes = [32, 196], strides = [1, 1]} : vector<32x226xf32> to vector<32x196xf32>
    %141 = arith.truncf %140 : vector<32x196xf32> to vector<32x196xbf16>
    %142 = vector.extract_strided_slice %125 {offsets = [0, 16], sizes = [32, 196], strides = [1, 1]} : vector<32x226xf32> to vector<32x196xf32>
    %143 = vector.broadcast %24 : vector<1x196xf32> to vector<32x196xf32>
    %144 = arith.mulf %142, %143 : vector<32x196xf32>
    %145 = arith.truncf %144 : vector<32x196xf32> to vector<32x196xbf16>
    %146 = vector.extract_strided_slice %125 {offsets = [0, 28], sizes = [32, 196], strides = [1, 1]} : vector<32x226xf32> to vector<32x196xf32>
    %147 = vector.broadcast %20 : vector<1x196xf32> to vector<32x196xf32>
    %148 = arith.mulf %146, %147 : vector<32x196xf32>
    %149 = arith.truncf %148 : vector<32x196xf32> to vector<32x196xbf16>
    %150 = vector.extract_strided_slice %125 {offsets = [0, 29], sizes = [32, 196], strides = [1, 1]} : vector<32x226xf32> to vector<32x196xf32>
    %151 = arith.truncf %150 : vector<32x196xf32> to vector<32x196xbf16>
    %152 = vector.extract_strided_slice %125 {offsets = [0, 30], sizes = [32, 196], strides = [1, 1]} : vector<32x226xf32> to vector<32x196xf32>
    %153 = vector.broadcast %24 : vector<1x196xf32> to vector<32x196xf32>
    %154 = arith.mulf %152, %153 : vector<32x196xf32>
    %155 = arith.truncf %154 : vector<32x196xf32> to vector<32x196xbf16>
    %156 = tpu.concatenate %129, %131, %135, %139, %141, %145, %149, %151, %155 in 0 : vector<32x196xbf16>, vector<32x196xbf16>, vector<32x196xbf16>, vector<32x196xbf16>, vector<32x196xbf16>, vector<32x196xbf16>, vector<32x196xbf16>, vector<32x196xbf16>, vector<32x196xbf16> -> vector<288x196xbf16>
    %cst_34 = arith.constant dense<0.000000e+00> : vector<32x196xf32>
    %157 = tpu.matmul %121, %156, %cst_34 {dimension_numbers = #tpu.dot_dimension_numbers<[1], [0], [0], [1], [0, 0, 1, 1], [], []>} : vector<32x288xbf16>, vector<288x196xbf16>, vector<32x196xf32> -> vector<32x196xf32>
    %158 = vector.broadcast %123 : vector<32x1xf32> to vector<32x196xf32>
    %159 = arith.addf %157, %158 : vector<32x196xf32>
    %160 = arith.addf %74, %159 : vector<32x196xf32>
    %c2 = arith.constant 2 : index
    %c0_35 = arith.constant 0 : index
    %c0_36 = arith.constant 0 : index
    %161 = vector.load %arg6[%c2, %c0_35, %c0_36] : memref<3x32x288xbf16, #tpu.memory_space<vmem>>, vector<1x32x288xbf16>
    %162 = vector.shape_cast %161 : vector<1x32x288xbf16> to vector<32x288xbf16>
    %c2_37 = arith.constant 2 : index
    %c0_38 = arith.constant 0 : index
    %c0_39 = arith.constant 0 : index
    %163 = vector.load %arg7[%c2_37, %c0_38, %c0_39] : memref<3x32x1xf32, #tpu.memory_space<vmem>>, vector<1x32x1xf32>
    %164 = vector.shape_cast %163 : vector<1x32x1xf32> to vector<32x1xf32>
    %cst_40 = arith.constant 0.000000e+00 : f32
    %165 = vector.broadcast %cst_40 : f32 to vector<32x15xf32>
    %166 = tpu.concatenate %165, %160, %165 in 1 : vector<32x15xf32>, vector<32x196xf32>, vector<32x15xf32> -> vector<32x226xf32>
    %167 = vector.extract_strided_slice %166 {offsets = [0, 0], sizes = [32, 196], strides = [1, 1]} : vector<32x226xf32> to vector<32x196xf32>
    %168 = vector.broadcast %20 : vector<1x196xf32> to vector<32x196xf32>
    %169 = arith.mulf %167, %168 : vector<32x196xf32>
    %170 = arith.truncf %169 : vector<32x196xf32> to vector<32x196xbf16>
    %171 = vector.extract_strided_slice %166 {offsets = [0, 1], sizes = [32, 196], strides = [1, 1]} : vector<32x226xf32> to vector<32x196xf32>
    %172 = arith.truncf %171 : vector<32x196xf32> to vector<32x196xbf16>
    %173 = vector.extract_strided_slice %166 {offsets = [0, 2], sizes = [32, 196], strides = [1, 1]} : vector<32x226xf32> to vector<32x196xf32>
    %174 = vector.broadcast %24 : vector<1x196xf32> to vector<32x196xf32>
    %175 = arith.mulf %173, %174 : vector<32x196xf32>
    %176 = arith.truncf %175 : vector<32x196xf32> to vector<32x196xbf16>
    %177 = vector.extract_strided_slice %166 {offsets = [0, 14], sizes = [32, 196], strides = [1, 1]} : vector<32x226xf32> to vector<32x196xf32>
    %178 = vector.broadcast %20 : vector<1x196xf32> to vector<32x196xf32>
    %179 = arith.mulf %177, %178 : vector<32x196xf32>
    %180 = arith.truncf %179 : vector<32x196xf32> to vector<32x196xbf16>
    %181 = vector.extract_strided_slice %166 {offsets = [0, 15], sizes = [32, 196], strides = [1, 1]} : vector<32x226xf32> to vector<32x196xf32>
    %182 = arith.truncf %181 : vector<32x196xf32> to vector<32x196xbf16>
    %183 = vector.extract_strided_slice %166 {offsets = [0, 16], sizes = [32, 196], strides = [1, 1]} : vector<32x226xf32> to vector<32x196xf32>
    %184 = vector.broadcast %24 : vector<1x196xf32> to vector<32x196xf32>
    %185 = arith.mulf %183, %184 : vector<32x196xf32>
    %186 = arith.truncf %185 : vector<32x196xf32> to vector<32x196xbf16>
    %187 = vector.extract_strided_slice %166 {offsets = [0, 28], sizes = [32, 196], strides = [1, 1]} : vector<32x226xf32> to vector<32x196xf32>
    %188 = vector.broadcast %20 : vector<1x196xf32> to vector<32x196xf32>
    %189 = arith.mulf %187, %188 : vector<32x196xf32>
    %190 = arith.truncf %189 : vector<32x196xf32> to vector<32x196xbf16>
    %191 = vector.extract_strided_slice %166 {offsets = [0, 29], sizes = [32, 196], strides = [1, 1]} : vector<32x226xf32> to vector<32x196xf32>
    %192 = arith.truncf %191 : vector<32x196xf32> to vector<32x196xbf16>
    %193 = vector.extract_strided_slice %166 {offsets = [0, 30], sizes = [32, 196], strides = [1, 1]} : vector<32x226xf32> to vector<32x196xf32>
    %194 = vector.broadcast %24 : vector<1x196xf32> to vector<32x196xf32>
    %195 = arith.mulf %193, %194 : vector<32x196xf32>
    %196 = arith.truncf %195 : vector<32x196xf32> to vector<32x196xbf16>
    %197 = tpu.concatenate %170, %172, %176, %180, %182, %186, %190, %192, %196 in 0 : vector<32x196xbf16>, vector<32x196xbf16>, vector<32x196xbf16>, vector<32x196xbf16>, vector<32x196xbf16>, vector<32x196xbf16>, vector<32x196xbf16>, vector<32x196xbf16>, vector<32x196xbf16> -> vector<288x196xbf16>
    %cst_41 = arith.constant dense<0.000000e+00> : vector<32x196xf32>
    %198 = tpu.matmul %162, %197, %cst_41 {dimension_numbers = #tpu.dot_dimension_numbers<[1], [0], [0], [1], [0, 0, 1, 1], [], []>} : vector<32x288xbf16>, vector<288x196xbf16>, vector<32x196xf32> -> vector<32x196xf32>
    %199 = vector.broadcast %164 : vector<32x1xf32> to vector<32x196xf32>
    %200 = arith.addf %198, %199 : vector<32x196xf32>
    %cst_42 = arith.constant 0.000000e+00 : f32
    %201 = vector.broadcast %cst_42 : f32 to vector<32x196xf32>
    %202 = arith.cmpf oge, %200, %201 : vector<32x196xf32>
    %cst_43 = arith.constant 0.00999999977 : f32
    %203 = vector.broadcast %cst_43 : f32 to vector<32x196xf32>
    %204 = arith.mulf %203, %200 : vector<32x196xf32>
    %205 = arith.select %202, %200, %204 : vector<32x196xi1>, vector<32x196xf32>
    %c0_44 = arith.constant 0 : index
    %c0_45 = arith.constant 0 : index
    %206 = vector.load %arg8[%c0_44, %c0_45] : memref<1x288xbf16, #tpu.memory_space<vmem>>, vector<1x288xbf16>
    %c0_46 = arith.constant 0 : index
    %c0_47 = arith.constant 0 : index
    %207 = vector.load %arg9[%c0_46, %c0_47] : memref<1x1xf32, #tpu.memory_space<vmem>>, vector<1x1xf32>
    %cst_48 = arith.constant 0.000000e+00 : f32
    %208 = vector.broadcast %cst_48 : f32 to vector<32x15xf32>
    %209 = tpu.concatenate %208, %205, %208 in 1 : vector<32x15xf32>, vector<32x196xf32>, vector<32x15xf32> -> vector<32x226xf32>
    %210 = vector.extract_strided_slice %209 {offsets = [0, 0], sizes = [32, 196], strides = [1, 1]} : vector<32x226xf32> to vector<32x196xf32>
    %211 = vector.broadcast %20 : vector<1x196xf32> to vector<32x196xf32>
    %212 = arith.mulf %210, %211 : vector<32x196xf32>
    %213 = arith.truncf %212 : vector<32x196xf32> to vector<32x196xbf16>
    %214 = vector.extract_strided_slice %209 {offsets = [0, 1], sizes = [32, 196], strides = [1, 1]} : vector<32x226xf32> to vector<32x196xf32>
    %215 = arith.truncf %214 : vector<32x196xf32> to vector<32x196xbf16>
    %216 = vector.extract_strided_slice %209 {offsets = [0, 2], sizes = [32, 196], strides = [1, 1]} : vector<32x226xf32> to vector<32x196xf32>
    %217 = vector.broadcast %24 : vector<1x196xf32> to vector<32x196xf32>
    %218 = arith.mulf %216, %217 : vector<32x196xf32>
    %219 = arith.truncf %218 : vector<32x196xf32> to vector<32x196xbf16>
    %220 = vector.extract_strided_slice %209 {offsets = [0, 14], sizes = [32, 196], strides = [1, 1]} : vector<32x226xf32> to vector<32x196xf32>
    %221 = vector.broadcast %20 : vector<1x196xf32> to vector<32x196xf32>
    %222 = arith.mulf %220, %221 : vector<32x196xf32>
    %223 = arith.truncf %222 : vector<32x196xf32> to vector<32x196xbf16>
    %224 = vector.extract_strided_slice %209 {offsets = [0, 15], sizes = [32, 196], strides = [1, 1]} : vector<32x226xf32> to vector<32x196xf32>
    %225 = arith.truncf %224 : vector<32x196xf32> to vector<32x196xbf16>
    %226 = vector.extract_strided_slice %209 {offsets = [0, 16], sizes = [32, 196], strides = [1, 1]} : vector<32x226xf32> to vector<32x196xf32>
    %227 = vector.broadcast %24 : vector<1x196xf32> to vector<32x196xf32>
    %228 = arith.mulf %226, %227 : vector<32x196xf32>
    %229 = arith.truncf %228 : vector<32x196xf32> to vector<32x196xbf16>
    %230 = vector.extract_strided_slice %209 {offsets = [0, 28], sizes = [32, 196], strides = [1, 1]} : vector<32x226xf32> to vector<32x196xf32>
    %231 = vector.broadcast %20 : vector<1x196xf32> to vector<32x196xf32>
    %232 = arith.mulf %230, %231 : vector<32x196xf32>
    %233 = arith.truncf %232 : vector<32x196xf32> to vector<32x196xbf16>
    %234 = vector.extract_strided_slice %209 {offsets = [0, 29], sizes = [32, 196], strides = [1, 1]} : vector<32x226xf32> to vector<32x196xf32>
    %235 = arith.truncf %234 : vector<32x196xf32> to vector<32x196xbf16>
    %236 = vector.extract_strided_slice %209 {offsets = [0, 30], sizes = [32, 196], strides = [1, 1]} : vector<32x226xf32> to vector<32x196xf32>
    %237 = vector.broadcast %24 : vector<1x196xf32> to vector<32x196xf32>
    %238 = arith.mulf %236, %237 : vector<32x196xf32>
    %239 = arith.truncf %238 : vector<32x196xf32> to vector<32x196xbf16>
    %240 = tpu.concatenate %213, %215, %219, %223, %225, %229, %233, %235, %239 in 0 : vector<32x196xbf16>, vector<32x196xbf16>, vector<32x196xbf16>, vector<32x196xbf16>, vector<32x196xbf16>, vector<32x196xbf16>, vector<32x196xbf16>, vector<32x196xbf16>, vector<32x196xbf16> -> vector<288x196xbf16>
    %cst_49 = arith.constant dense<0.000000e+00> : vector<1x196xf32>
    %241 = tpu.matmul %206, %240, %cst_49 {dimension_numbers = #tpu.dot_dimension_numbers<[1], [0], [0], [1], [0, 0, 1, 1], [], []>} : vector<1x288xbf16>, vector<288x196xbf16>, vector<1x196xf32> -> vector<1x196xf32>
    %242 = vector.broadcast %207 : vector<1x1xf32> to vector<1x196xf32>
    %243 = arith.addf %241, %242 : vector<1x196xf32>
    %244 = vector.shape_cast %243 : vector<1x196xf32> to vector<1x1x196xf32>
    %c0_50 = arith.constant 0 : index
    %c0_51 = arith.constant 0 : index
    %c0_52 = arith.constant 0 : index
    %245 = vector.load %arg10[%c0_50, %c0_51, %c0_52] : memref<1x1x196xf32, #tpu.memory_space<vmem>>, vector<1x1x196xf32>
    tpu.vector_store %arg10[%c0_50, %c0_51, %c0_52], %244 {strides = array<i32>} : memref<1x1x196xf32, #tpu.memory_space<vmem>>, vector<1x1x196xf32>,
    return
  }
  func.func @transform_0(%arg0: i32) -> (i32, i32, i32) {
    %c0_i32 = arith.constant 0 : i32
    %c0_i32_0 = arith.constant 0 : i32
    %c0_i32_1 = arith.constant 0 : i32
    return %arg0, %c0_i32, %c0_i32_0 : i32, i32, i32
  }
  func.func @transform_1(%arg0: i32) -> (i32, i32) {
    %c0_i32 = arith.constant 0 : i32
    %c0_i32_0 = arith.constant 0 : i32
    %c0_i32_1 = arith.constant 0 : i32
    return %c0_i32, %c0_i32_0 : i32, i32
  }
  func.func @transform_2(%arg0: i32) -> (i32, i32) {
    %c0_i32 = arith.constant 0 : i32
    %c0_i32_0 = arith.constant 0 : i32
    %c0_i32_1 = arith.constant 0 : i32
    return %c0_i32, %c0_i32_0 : i32, i32
  }
  func.func @transform_3(%arg0: i32) -> (i32, i32) {
    %c0_i32 = arith.constant 0 : i32
    %c0_i32_0 = arith.constant 0 : i32
    %c0_i32_1 = arith.constant 0 : i32
    return %c0_i32, %c0_i32_0 : i32, i32
  }
  func.func @transform_4(%arg0: i32) -> (i32, i32) {
    %c0_i32 = arith.constant 0 : i32
    %c0_i32_0 = arith.constant 0 : i32
    %c0_i32_1 = arith.constant 0 : i32
    return %c0_i32, %c0_i32_0 : i32, i32
  }
  func.func @transform_5(%arg0: i32) -> (i32, i32, i32) {
    %c0_i32 = arith.constant 0 : i32
    %c0_i32_0 = arith.constant 0 : i32
    %c0_i32_1 = arith.constant 0 : i32
    %c0_i32_2 = arith.constant 0 : i32
    return %c0_i32, %c0_i32_0, %c0_i32_1 : i32, i32, i32
  }
  func.func @transform_6(%arg0: i32) -> (i32, i32, i32) {
    %c0_i32 = arith.constant 0 : i32
    %c0_i32_0 = arith.constant 0 : i32
    %c0_i32_1 = arith.constant 0 : i32
    %c0_i32_2 = arith.constant 0 : i32
    return %c0_i32, %c0_i32_0, %c0_i32_1 : i32, i32, i32
  }
  func.func @transform_7(%arg0: i32) -> (i32, i32) {
    %c0_i32 = arith.constant 0 : i32
    %c0_i32_0 = arith.constant 0 : i32
    %c0_i32_1 = arith.constant 0 : i32
    return %c0_i32, %c0_i32_0 : i32, i32
  }
  func.func @transform_8(%arg0: i32) -> (i32, i32) {
    %c0_i32 = arith.constant 0 : i32
    %c0_i32_0 = arith.constant 0 : i32
    %c0_i32_1 = arith.constant 0 : i32
    return %c0_i32, %c0_i32_0 : i32, i32
  }
  func.func @transform_9(%arg0: i32) -> (i32, i32, i32) {
    %c0_i32 = arith.constant 0 : i32
    %c0_i32_0 = arith.constant 0 : i32
    %c0_i32_1 = arith.constant 0 : i32
    return %arg0, %c0_i32, %c0_i32_0 : i32, i32, i32
  }
}

</mosaic_0001>

<llo_original>
// kernel: cnnp_forward.1
$region0: #{cnnp_forward.1}
  #allocation0 [shape = 'u32[]', space=smem, size = 0x4, offset = 0x4, fixed_abs, tag = 'smem constant byte address 0x4 - core index']
  #allocation1 [shape = 'u32[144,128]{1,0:T(1,128)}', space=vmem, size = 0x12000, scoped, tag = 'internal scratch']
  #allocation2 [shape = 'f32[1,1]{1,0:T(1,128)S(1)}', space=vmem, size = 0x200, scoped, tag = 'scoped memory for cnnp_forward.1']
  %s0 = inlined_call_operand.vmem [shape: bf16[2,83,196], index: 0, kind: input, shape index: {}]
  %s1 = inlined_call_operand.vmem [shape: bf16[96,83], index: 1, kind: input, shape index: {}]
  %s2 = inlined_call_operand.vmem [shape: f32[96,1], index: 2, kind: input, shape index: {}]
  %s3 = inlined_call_operand.vmem [shape: bf16[32,864], index: 3, kind: input, shape index: {}]
  %s4 = inlined_call_operand.vmem [shape: f32[32,1], index: 4, kind: input, shape index: {}]
  %s5 = inlined_call_operand.vmem [shape: bf16[3,32,288], index: 5, kind: input, shape index: {}]
  %s6 = inlined_call_operand.vmem [shape: f32[3,32,1], index: 6, kind: input, shape index: {}]
  %s7 = inlined_call_operand.vmem [shape: bf16[1,288], index: 7, kind: input, shape index: {}]
  %s8 = inlined_call_operand.<no memory space> [shape: f32[1,1], index: 8, kind: input, shape index: {}]
  %s9 = inlined_call_operand.vmem [shape: f32[2,1,196], index: 9, kind: output, shape index: {}]
  %s10 = sld [smem:[#allocation0]]
  $region69: #{cnnp_forward.1} parent=0
    _
  %s12 = ssub.s32 1, %s10
  %s13 = scalar_select 0, %s12, %s10
  %v14 = vstv %s8
  %15 = vst [vmem:[#allocation2] sm:$0x1] %v14
  loop: start=0, step=1, limit=4
  $region2: #{cnnp_forward.1} parent=0 // loop_pre_header
    _
  $region3: #{cnnp_forward.1} parent=0 // loop_header
    %s17 = sphi 0, %s21
    %p18 = scmp.ge.s32.totalorder %s17, 4
    %s27 = sphi 0, %s29
    %s30 = sphi 0, %s27
    %s31 = sphi 0, %s30
    %s47 = sphi 0, %s31
    %s51 = sphi 0, %s51
    %s53 = sphi 0, %s51
    %s54 = sphi 0, %s53
    %s68 = sphi 0, %s54
    %s72 = sphi 0, %s72
    %s74 = sphi 0, %s72
    %s75 = sphi 0, %s74
    %s89 = sphi 0, %s75
    %s93 = sphi 0, %s93
    %s95 = sphi 0, %s93
    %s96 = sphi 0, %s95
    %s110 = sphi 0, %s96
    %s114 = sphi 0, %s114
    %s116 = sphi 0, %s114
    %s117 = sphi 0, %s116
    %s131 = sphi 0, %s117
    %s135 = sphi 0, %s135
    %s137 = sphi 0, %s135
    %s138 = sphi 0, %s137
    %s152 = sphi 0, %s138
    %s156 = sphi 0, %s156
    %s158 = sphi 0, %s156
    %s159 = sphi 0, %s158
    %s173 = sphi 0, %s159
    %s177 = sphi 0, %s177
    %s179 = sphi 0, %s177
    %s180 = sphi 0, %s179
    %s194 = sphi 0, %s180
    %s198 = sphi 0, %s198
    %s200 = sphi 0, %s198
    %s201 = sphi 0, %s200
    %s215 = sphi 0, %s201
    %s221 = sphi 0, %s223
    %s224 = sphi 0, %s221
    %s225 = sphi 0, %s224
    %s241 = sphi 0, %s225
  $region4: #{cnnp_forward.1} parent=0 // loop_header_branch
    %20 = sbr.rel (%p18) target = $region8
  $region5: #{cnnp_forward.1} parent=0 // loop_body
    %s22 = ssub.s32 %s17, 1
    %s23 = ssub.s32 %s17, 2
    %s24 = sadd.s32 %s17, 1
    %s25 = ssub.s32 %s17, %s24
    %p26 = scmp.eq.s32.totalorder %s25, 0
    %s28 = sadd.s32 %s27, 1
    %s29 = scalar_select %p26, %s27, %s28
    %p32 = pneg %p26
    %p33 = scmp.eq.s32.totalorder %s17, 1
    %p34 = por %p32, %p33
    %p35 = scmp.ne.s32.totalorder %s27, %s30
    %p36 = scmp.eq.s32.totalorder %s17, 0
    %p37 = por %p35, %p36
    %p38 = scmp.ne.s32.totalorder %s27, %s30
    %p39 = scmp.eq.s32.totalorder %s22, 1
    %p40 = por %p38, %p39
    %p41 = scmp.ne.s32.totalorder %s30, %s31
    %p42 = scmp.eq.s32.totalorder %s22, 0
    %p43 = por %p41, %p42
    %p44 = scmp.ne.s32.totalorder %s30, %s31
    %p45 = scmp.eq.s32.totalorder %s23, 1
    %p46 = por %p44, %p45
    %p48 = scmp.ne.s32.totalorder %s31, %s47
    %p49 = scmp.eq.s32.totalorder %s23, 0
    %p50 = por %p48, %p49
    %s52 = sadd.s32 %s51, 1
    %p55 = scmp.eq.s32.totalorder %s17, 1
    %p56 = scmp.ne.s32.totalorder %s51, %s53
    %p57 = scmp.eq.s32.totalorder %s17, 0
    %p58 = por %p56, %p57
    %p59 = scmp.ne.s32.totalorder %s51, %s53
    %p60 = scmp.eq.s32.totalorder %s22, 1
    %p61 = por %p59, %p60
    %p62 = scmp.ne.s32.totalorder %s53, %s54
    %p63 = scmp.eq.s32.totalorder %s22, 0
    %p64 = por %p62, %p63
    %p65 = scmp.ne.s32.totalorder %s53, %s54
    %p66 = scmp.eq.s32.totalorder %s23, 1
    %p67 = por %p65, %p66
    %p69 = scmp.ne.s32.totalorder %s54, %s68
    %p70 = scmp.eq.s32.totalorder %s23, 0
    %p71 = por %p69, %p70
    %s73 = sadd.s32 %s72, 1
    %p76 = scmp.eq.s32.totalorder %s17, 1
    %p77 = scmp.ne.s32.totalorder %s72, %s74
    %p78 = scmp.eq.s32.totalorder %s17, 0
    %p79 = por %p77, %p78
    %p80 = scmp.ne.s32.totalorder %s72, %s74
    %p81 = scmp.eq.s32.totalorder %s22, 1
    %p82 = por %p80, %p81
    %p83 = scmp.ne.s32.totalorder %s74, %s75
    %p84 = scmp.eq.s32.totalorder %s22, 0
    %p85 = por %p83, %p84
    %p86 = scmp.ne.s32.totalorder %s74, %s75
    %p87 = scmp.eq.s32.totalorder %s23, 1
    %p88 = por %p86, %p87
    %p90 = scmp.ne.s32.totalorder %s75, %s89
    %p91 = scmp.eq.s32.totalorder %s23, 0
    %p92 = por %p90, %p91
    %s94 = sadd.s32 %s93, 1
    %p97 = scmp.eq.s32.totalorder %s17, 1
    %p98 = scmp.ne.s32.totalorder %s93, %s95
    %p99 = scmp.eq.s32.totalorder %s17, 0
    %p100 = por %p98, %p99
    %p101 = scmp.ne.s32.totalorder %s93, %s95
    %p102 = scmp.eq.s32.totalorder %s22, 1
    %p103 = por %p101, %p102
    %p104 = scmp.ne.s32.totalorder %s95, %s96
    %p105 = scmp.eq.s32.totalorder %s22, 0
    %p106 = por %p104, %p105
    %p107 = scmp.ne.s32.totalorder %s95, %s96
    %p108 = scmp.eq.s32.totalorder %s23, 1
    %p109 = por %p107, %p108
    %p111 = scmp.ne.s32.totalorder %s96, %s110
    %p112 = scmp.eq.s32.totalorder %s23, 0
    %p113 = por %p111, %p112
    %s115 = sadd.s32 %s114, 1
    %p118 = scmp.eq.s32.totalorder %s17, 1
    %p119 = scmp.ne.s32.totalorder %s114, %s116
    %p120 = scmp.eq.s32.totalorder %s17, 0
    %p121 = por %p119, %p120
    %p122 = scmp.ne.s32.totalorder %s114, %s116
    %p123 = scmp.eq.s32.totalorder %s22, 1
    %p124 = por %p122, %p123
    %p125 = scmp.ne.s32.totalorder %s116, %s117
    %p126 = scmp.eq.s32.totalorder %s22, 0
    %p127 = por %p125, %p126
    %p128 = scmp.ne.s32.totalorder %s116, %s117
    %p129 = scmp.eq.s32.totalorder %s23, 1
    %p130 = por %p128, %p129
    %p132 = scmp.ne.s32.totalorder %s117, %s131
    %p133 = scmp.eq.s32.totalorder %s23, 0
    %p134 = por %p132, %p133
    %s136 = sadd.s32 %s135, 1
    %p139 = scmp.eq.s32.totalorder %s17, 1
    %p140 = scmp.ne.s32.totalorder %s135, %s137
    %p141 = scmp.eq.s32.totalorder %s17, 0
    %p142 = por %p140, %p141
    %p143 = scmp.ne.s32.totalorder %s135, %s137
    %p144 = scmp.eq.s32.totalorder %s22, 1
    %p145 = por %p143, %p144
    %p146 = scmp.ne.s32.totalorder %s137, %s138
    %p147 = scmp.eq.s32.totalorder %s22, 0
    %p148 = por %p146, %p147
    %p149 = scmp.ne.s32.totalorder %s137, %s138
    %p150 = scmp.eq.s32.totalorder %s23, 1
    %p151 = por %p149, %p150
    %p153 = scmp.ne.s32.totalorder %s138, %s152
    %p154 = scmp.eq.s32.totalorder %s23, 0
    %p155 = por %p153, %p154
    %s157 = sadd.s32 %s156, 1
    %p160 = scmp.eq.s32.totalorder %s17, 1
    %p161 = scmp.ne.s32.totalorder %s156, %s158
    %p162 = scmp.eq.s32.totalorder %s17, 0
    %p163 = por %p161, %p162
    %p164 = scmp.ne.s32.totalorder %s156, %s158
    %p165 = scmp.eq.s32.totalorder %s22, 1
    %p166 = por %p164, %p165
    %p167 = scmp.ne.s32.totalorder %s158, %s159
    %p168 = scmp.eq.s32.totalorder %s22, 0
    %p169 = por %p167, %p168
    %p170 = scmp.ne.s32.totalorder %s158, %s159
    %p171 = scmp.eq.s32.totalorder %s23, 1
    %p172 = por %p170, %p171
    %p174 = scmp.ne.s32.totalorder %s159, %s173
    %p175 = scmp.eq.s32.totalorder %s23, 0
    %p176 = por %p174, %p175
    %s178 = sadd.s32 %s177, 1
    %p181 = scmp.eq.s32.totalorder %s17, 1
    %p182 = scmp.ne.s32.totalorder %s177, %s179
    %p183 = scmp.eq.s32.totalorder %s17, 0
    %p184 = por %p182, %p183
    %p185 = scmp.ne.s32.totalorder %s177, %s179
    %p186 = scmp.eq.s32.totalorder %s22, 1
    %p187 = por %p185, %p186
    %p188 = scmp.ne.s32.totalorder %s179, %s180
    %p189 = scmp.eq.s32.totalorder %s22, 0
    %p190 = por %p188, %p189
    %p191 = scmp.ne.s32.totalorder %s179, %s180
    %p192 = scmp.eq.s32.totalorder %s23, 1
    %p193 = por %p191, %p192
    %p195 = scmp.ne.s32.totalorder %s180, %s194
    %p196 = scmp.eq.s32.totalorder %s23, 0
    %p197 = por %p195, %p196
    %s199 = sadd.s32 %s198, 1
    %p202 = scmp.eq.s32.totalorder %s17, 1
    %p203 = scmp.ne.s32.totalorder %s198, %s200
    %p204 = scmp.eq.s32.totalorder %s17, 0
    %p205 = por %p203, %p204
    %p206 = scmp.ne.s32.totalorder %s198, %s200
    %p207 = scmp.eq.s32.totalorder %s22, 1
    %p208 = por %p206, %p207
    %p209 = scmp.ne.s32.totalorder %s200, %s201
    %p210 = scmp.eq.s32.totalorder %s22, 0
    %p211 = por %p209, %p210
    %p212 = scmp.ne.s32.totalorder %s200, %s201
    %p213 = scmp.eq.s32.totalorder %s23, 1
    %p214 = por %p212, %p213
    %p216 = scmp.ne.s32.totalorder %s201, %s215
    %p217 = scmp.eq.s32.totalorder %s23, 0
    %p218 = por %p216, %p217
    %s219 = ssub.s32 %s17, %s24
    %p220 = scmp.eq.s32.totalorder %s219, 0
    %s222 = sadd.s32 %s221, 1
    %s223 = scalar_select %p220, %s221, %s222
    %p226 = pneg %p220
    %p227 = scmp.eq.s32.totalorder %s17, 1
    %p228 = por %p226, %p227
    %p229 = scmp.ne.s32.totalorder %s221, %s224
    %p230 = scmp.eq.s32.totalorder %s17, 0
    %p231 = por %p229, %p230
    %p232 = scmp.ne.s32.totalorder %s221, %s224
    %p233 = scmp.eq.s32.totalorder %s22, 1
    %p234 = por %p232, %p233
    %p235 = scmp.ne.s32.totalorder %s224, %s225
    %p236 = scmp.eq.s32.totalorder %s22, 0
    %p237 = por %p235, %p236
    %p238 = scmp.ne.s32.totalorder %s224, %s225
    %p239 = scmp.eq.s32.totalorder %s23, 1
    %p240 = por %p238, %p239
    %p242 = scmp.ne.s32.totalorder %s225, %s241
    %p243 = scmp.eq.s32.totalorder %s23, 0
    %p244 = por %p242, %p243
    %p245 = scmp.le.s32.totalorder 1, %s17
    %p246 = scmp.lt.s32.totalorder %s17, 3
    %p247 = pnand %p245, %p246
    %p248 = pneg %p247
    // Predicated region
    $region9: #{cnnp_forward.1} parent=5 // pred_check
      _
    $region10: #{cnnp_forward.1} parent=5 // pred_check_branch
      %250 = sbr.rel (%p247) target = $region12
    $region11: #{cnnp_forward.1} parent=5 // pred_region
      %s251 = ssub.s32 %s17, 1
      // Predicated region
      $region13: #{cnnp_forward.1} parent=11 // pred_check
        %p252 = pneg %p64
      $region14: #{cnnp_forward.1} parent=11 // pred_check_branch
        %254 = sbr.rel (%p252) target = $region16
      $region15: #{cnnp_forward.1} parent=11 // pred_region
        _
      $region16: #{cnnp_forward.1} parent=11 // pred_fallthru
        _
      // Predicated region
      $region17: #{cnnp_forward.1} parent=11 // pred_check
        %p255 = pneg %p85
      $region18: #{cnnp_forward.1} parent=11 // pred_check_branch
        %257 = sbr.rel (%p255) target = $region20
      $region19: #{cnnp_forward.1} parent=11 // pred_region
        _
      $region20: #{cnnp_forward.1} parent=11 // pred_fallthru
        _
      // Predicated region
      $region21: #{cnnp_forward.1} parent=11 // pred_check
        %p258 = pneg %p106
      $region22: #{cnnp_forward.1} parent=11 // pred_check_branch
        %260 = sbr.rel (%p258) target = $region24
      $region23: #{cnnp_forward.1} parent=11 // pred_region
        _
      $region24: #{cnnp_forward.1} parent=11 // pred_fallthru
        _
      // Predicated region
      $region25: #{cnnp_forward.1} parent=11 // pred_check
        %p261 = pneg %p127
      $region26: #{cnnp_forward.1} parent=11 // pred_check_branch
        %263 = sbr.rel (%p261) target = $region28
      $region27: #{cnnp_forward.1} parent=11 // pred_region
        _
      $region28: #{cnnp_forward.1} parent=11 // pred_fallthru
        _
      // Predicated region
      $region29: #{cnnp_forward.1} parent=11 // pred_check
        %p264 = pneg %p148
      $region30: #{cnnp_forward.1} parent=11 // pred_check_branch
        %266 = sbr.rel (%p264) target = $region32
      $region31: #{cnnp_forward.1} parent=11 // pred_region
        _
      $region32: #{cnnp_forward.1} parent=11 // pred_fallthru
        _
      // Predicated region
      $region33: #{cnnp_forward.1} parent=11 // pred_check
        %p267 = pneg %p169
      $region34: #{cnnp_forward.1} parent=11 // pred_check_branch
        %269 = sbr.rel (%p267) target = $region36
      $region35: #{cnnp_forward.1} parent=11 // pred_region
        _
      $region36: #{cnnp_forward.1} parent=11 // pred_fallthru
        _
      // Predicated region
      $region37: #{cnnp_forward.1} parent=11 // pred_check
        %p270 = pneg %p190
      $region38: #{cnnp_forward.1} parent=11 // pred_check_branch
        %272 = sbr.rel (%p270) target = $region40
      $region39: #{cnnp_forward.1} parent=11 // pred_region
        _
      $region40: #{cnnp_forward.1} parent=11 // pred_fallthru
        _
      // Predicated region
      $region41: #{cnnp_forward.1} parent=11 // pred_check
        %p273 = pneg %p211
      $region42: #{cnnp_forward.1} parent=11 // pred_check_branch
        %275 = sbr.rel (%p273) target = $region44
      $region43: #{cnnp_forward.1} parent=11 // pred_region
        _
      $region44: #{cnnp_forward.1} parent=11 // pred_fallthru
        _
    $region12: #{cnnp_forward.1} parent=5 // pred_fallthru
      _
    %p276 = scmp.lt.s32.totalorder %s17, 2
    // Predicated region
    $region45: #{cnnp_forward.1} parent=5 // pred_check
      %p277 = pneg %p276
    $region46: #{cnnp_forward.1} parent=5 // pred_check_branch
      %279 = sbr.rel (%p277) target = $region48
    $region47: #{cnnp_forward.1} parent=5 // pred_region
      // Predicated region
      $region49: #{cnnp_forward.1} parent=47 // pred_check
        %p280 = pneg %p37
      $region50: #{cnnp_forward.1} parent=47 // pred_check_branch
        %282 = sbr.rel (%p280) target = $region52
      $region51: #{cnnp_forward.1} parent=47 // pred_region
        %p283 = scmp.lt.s32.totalorder %s17, 1
        %s284 = scalar_select %p283, %s17, 1
        %s285 = smul.addr %s284, 22
        %s286 = smul.addr %s285, 4
        %s287 = scalar_lea.vmem %s0, %s286
      $region52: #{cnnp_forward.1} parent=47 // pred_fallthru
        _
    $region48: #{cnnp_forward.1} parent=5 // pred_fallthru
      _
    %p288 = scmp.le.s32.totalorder 1, %s17
    %p289 = scmp.lt.s32.totalorder %s17, 3
    %p290 = pnand %p288, %p289
    %p291 = pneg %p290
    // Predicated region
    $region53: #{cnnp_forward.1} parent=5 // pred_check
      _
    $region54: #{cnnp_forward.1} parent=5 // pred_check_branch
      %293 = sbr.rel (%p290) target = $region56
    $region55: #{cnnp_forward.1} parent=5 // pred_region
      %s294 = ssub.s32 %s17, 1
      %p295 = scmp.lt.s32.totalorder %s22, 1
      %s296 = scalar_select %p295, %s22, 1
      %s297 = smul.addr %s296, 22
      %s298 = smul.addr %s297, 4
      %s299 = scalar_lea.vmem %s0, %s298
      %p300 = pneg %p43
      %p301 = pneg %p40
      %p302 = pneg %p64
      %p303 = pneg %p61
      %p304 = pneg %p85
      %p305 = pneg %p82
      %p306 = pneg %p106
      %p307 = pneg %p103
      %p308 = pneg %p127
      %p309 = pneg %p124
      %p310 = pneg %p148
      %p311 = pneg %p145
      %p312 = pneg %p169
      %p313 = pneg %p166
      %p314 = pneg %p190
      %p315 = pneg %p187
      %p316 = pneg %p211
      %p317 = pneg %p208
      %p318 = pneg %p237
      %p319 = pneg %p234
      %p320 = scmp.lt.s32.totalorder %s22, 1
      %s321 = scalar_select %p320, %s22, 1
      %s322 = smul.addr %s321, 2
      %s323 = scalar_lea.vmem %s9, %s322
      %p324 = scmp.lt.s32.totalorder %s22, 1
      %s325 = scalar_select %p324, %s22, 1
      %s326 = smul.addr %s325, 22
      %s327 = smul.addr %s326, 4
      %s328 = scalar_lea.vmem %s0, %s327
      %p329 = scmp.lt.s32.totalorder %s22, 1
      %s330 = scalar_select %p329, %s22, 1
      %s331 = smul.addr %s330, 2
      %s332 = scalar_lea.vmem %s9, %s331
      %v334 = vlaneseq
      %v335 = vand.u32 %v334, 127
      %v336 = vadd.s32 %v335, 128
      %vm337 = vcmp.lt.s32.totalorder %v335, 0
      %v338 = vsub.s32 0, %v335
      %v339 = vsel %vm337, %v338, %v335
      %v340 = vmul.u32.u64.compose %v339, 2454267026
      %v341 = vextract.low.u32 %v340
      %v342 = vextract.high.u32 %v340
      %vm343 = vc.u32 %v341, 2454267026
      %v344 = vsel %vm343, 1, 0
      %v345 = vadd.s32 %v342, %v344
      %v346 = vshrl.u32 %v345, 3
      %v347 = vmul.u32 %v346, 14
      %v348 = vsub.s32 %v339, %v347
      %v349 = vsub.s32 0, %v348
      %v350 = vsel %vm337, %v349, %v348
      %vm351 = vcmp.lt.s32.totalorder %v336, 0
      %v352 = vsub.s32 0, %v336
      %v353 = vsel %vm351, %v352, %v336
      %v354 = vmul.u32.u64.compose %v353, 2454267026
      %v355 = vextract.low.u32 %v354
      %v356 = vextract.high.u32 %v354
      %vm357 = vc.u32 %v355, 2454267026
      %v358 = vsel %vm357, 1, 0
      %v359 = vadd.s32 %v356, %v358
      %v360 = vshrl.u32 %v359, 3
      %v361 = vmul.u32 %v360, 14
      %v362 = vsub.s32 %v353, %v361
      %v363 = vsub.s32 0, %v362
      %v364 = vsel %vm351, %v363, %v362
      %vm365 = vcmp.ne.s32.totalorder %v350, 0
      %vm366 = vcmp.ne.s32.totalorder %v364, 0
      %vm367 = vcmp.lt.s32.totalorder %v350, 0
      %vm368 = vcmp.lt.s32.totalorder %v364, 0
      %vm369 = vmand %vm367, %vm365
      %vm370 = vmand %vm368, %vm366
      %v371 = vadd.s32 %v350, 14
      %v372 = vadd.s32 %v364, 14
      %v373 = vsel %vm369, %v371, %v350
      %v374 = vsel %vm370, %v372, %v364
      %vm375 = vcmp.ne.s32.totalorder %v373, 0
      %vm376 = vcmp.ne.s32.totalorder %v374, 0
      %v377 = vsel %vm375, 1, 0
      %v378 = vsel %vm376, 1, 0
      %v379 = vcvt.s32.f32 %v377
      %v380 = vcvt.s32.f32 %v378
      %vm381 = vcmp.ne.s32.totalorder %v373, 13
      %vm382 = vcmp.ne.s32.totalorder %v374, 13
      %v383 = vsel %vm381, 1, 0
      %v384 = vsel %vm382, 1, 0
      %v385 = vcvt.s32.f32 %v383
      %v386 = vcvt.s32.f32 %v384
      %v387 = vld [vmem:[%s328] sm:$0xff]
      %v388 = vld [vmem:[%s328 + $0x8] sm:$0xff]
      %v389 = vld [vmem:[%s328 + $0x10] sm:$0xff]
      %v390 = vld [vmem:[%s328 + $0x18] sm:$0xff]
      %v391 = vld [vmem:[%s328 + $0x20] sm:$0xff]
      %v392 = vld [vmem:[%s328 + $0x28] sm:$0xff]
      %v393 = vld [vmem:[%s328 + $0x30] sm:$0xff]
      %v394 = vld [vmem:[%s328 + $0x38] sm:$0xff]
      %v395 = vld [vmem:[%s328 + $0x40] sm:$0xff]
      %v396 = vld [vmem:[%s328 + $0x48] sm:$0xff]
      %v397 = vld [vmem:[%s328 + $0x50] sm:$0x33]
      %v398 = vld [vmem:[%s1] sm:$0xf]
      %v399 = vld [vmem:[%s1 + $0x4] sm:$0xf]
      %v400 = vld [vmem:[%s1 + $0x8] sm:$0xf]
      %v401 = vld [vmem:[%s1 + $0xc] sm:$0xf]
      %v402 = vld [vmem:[%s1 + $0x10] sm:$0xf]
      %v403 = vld [vmem:[%s1 + $0x14] sm:$0xf]
      %v404 = vld [vmem:[%s1 + $0x18] sm:$0xf]
      %v405 = vld [vmem:[%s1 + $0x1c] sm:$0xf]
      %v406 = vld [vmem:[%s1 + $0x20] sm:$0xf]
      %v407 = vld [vmem:[%s1 + $0x24] sm:$0xf]
      %v408 = vld [vmem:[%s1 + $0x28] sm:$0xf]
      %v409 = vld [vmem:[%s1 + $0x2c] sm:$0xf]
      %v410 = vld [vmem:[%s2] sm:$0xff]
      %v411 = vld [vmem:[%s2 + $0x8] sm:$0xff]
      %v412 = vld [vmem:[%s2 + $0x10] sm:$0xff]
      %v413 = vld [vmem:[%s2 + $0x18] sm:$0xff]
      %v414 = vld [vmem:[%s2 + $0x20] sm:$0xff]
      %v415 = vld [vmem:[%s2 + $0x28] sm:$0xff]
      %v416 = vld [vmem:[%s2 + $0x30] sm:$0xff]
      %v417 = vld [vmem:[%s2 + $0x38] sm:$0xff]
      %v418 = vld [vmem:[%s2 + $0x40] sm:$0xff]
      %v419 = vld [vmem:[%s2 + $0x48] sm:$0xff]
      %v420 = vld [vmem:[%s2 + $0x50] sm:$0xff]
      %v421 = vld [vmem:[%s2 + $0x58] sm:$0xff]
      %423 = vset.pattern.permute.xlu0 0
      %424 = vperm.xlu0 %423, %v410
      %v425 = vpop.permute.xlu0 %424
      %428 = vset.pattern.permute.xlu0 0
      %429 = vperm.xlu0 %428, %v411
      %v430 = vpop.permute.xlu0 %429
      %433 = vset.pattern.permute.xlu0 0
      %434 = vperm.xlu0 %433, %v412
      %v435 = vpop.permute.xlu0 %434
      %438 = vset.pattern.permute.xlu0 0
      %439 = vperm.xlu0 %438, %v413
      %v440 = vpop.permute.xlu0 %439
      %443 = vset.pattern.permute.xlu0 0
      %444 = vperm.xlu0 %443, %v414
      %v445 = vpop.permute.xlu0 %444
      %448 = vset.pattern.permute.xlu0 0
      %449 = vperm.xlu0 %448, %v415
      %v450 = vpop.permute.xlu0 %449
      %453 = vset.pattern.permute.xlu0 0
      %454 = vperm.xlu0 %453, %v416
      %v455 = vpop.permute.xlu0 %454
      %458 = vset.pattern.permute.xlu0 0
      %459 = vperm.xlu0 %458, %v417
      %v460 = vpop.permute.xlu0 %459
      %463 = vset.pattern.permute.xlu0 0
      %464 = vperm.xlu0 %463, %v418
      %v465 = vpop.permute.xlu0 %464
      %468 = vset.pattern.permute.xlu0 0
      %469 = vperm.xlu0 %468, %v419
      %v470 = vpop.permute.xlu0 %469
      %473 = vset.pattern.permute.xlu0 0
      %474 = vperm.xlu0 %473, %v420
      %v475 = vpop.permute.xlu0 %474
      %478 = vset.pattern.permute.xlu0 0
      %479 = vperm.xlu0 %478, %v421
      %v480 = vpop.permute.xlu0 %479
      %v494 = vunpack.c.l.b16 %v398
      %v495 = vunpack.c.l.b16 %v399
      %v496 = vunpack.c.l.b16 %v400
      %v497 = vunpack.c.l.b16 %v401
      %v498 = vunpack.c.l.b16 %v402
      %v499 = vunpack.c.l.b16 %v403
      %v500 = vunpack.c.l.b16 %v404
      %v501 = vunpack.c.l.b16 %v405
      %v502 = vunpack.c.l.b16 %v406
      %v503 = vunpack.c.l.b16 %v407
      %v504 = vunpack.c.l.b16 %v408
      %v505 = vunpack.c.l.b16 %v409
      %v506 = vpack.c.b16 %v495, %v494
      %v507 = vpack.c.b16 %v497, %v496
      %v508 = vpack.c.b16 %v499, %v498
      %v509 = vpack.c.b16 %v501, %v500
      %v510 = vpack.c.b16 %v503, %v502
      %v511 = vpack.c.b16 %v505, %v504
      %v523 = vunpack.c.l.b16 %v387
      %v524 = vunpack.c.h.b16 %v387
      %v525 = vunpack.c.l.b16 %v388
      %v526 = vunpack.c.h.b16 %v388
      %v527 = vunpack.c.l.b16 %v389
      %v528 = vunpack.c.h.b16 %v389
      %v529 = vunpack.c.l.b16 %v390
      %v530 = vunpack.c.h.b16 %v390
      %v531 = vunpack.c.l.b16 %v391
      %v532 = vunpack.c.h.b16 %v391
      %v533 = vunpack.c.l.b16 %v392
      %v534 = vunpack.c.h.b16 %v392
      %v535 = vunpack.c.l.b16 %v393
      %v536 = vunpack.c.h.b16 %v393
      %v537 = vunpack.c.l.b16 %v394
      %v538 = vunpack.c.h.b16 %v394
      %v539 = vunpack.c.l.b16 %v395
      %v540 = vunpack.c.h.b16 %v395
      %v541 = vunpack.c.l.b16 %v396
      %v542 = vunpack.c.h.b16 %v396
      %v543 = vunpack.c.l.b16 %v397
      %v544 = vunpack.c.h.b16 %v397
      %v545 = vpack.c.b16 %v525, %v523
      %v546 = vpack.c.b16 %v526, %v524
      %v547 = vpack.c.b16 %v529, %v527
      %v548 = vpack.c.b16 %v530, %v528
      %v549 = vpack.c.b16 %v533, %v531
      %v550 = vpack.c.b16 %v534, %v532
      %v551 = vpack.c.b16 %v537, %v535
      %v552 = vpack.c.b16 %v538, %v536
      %v553 = vpack.c.b16 %v541, %v539
      %v554 = vpack.c.b16 %v542, %v540
      %v555 = vpack.c.b16 %v543, %v543
      %v556 = vpack.c.b16 %v544, %v544
      %vm567 = vcmask 678912
      %v569 = vsel %vm567, %v506, 0
      %v572 = vsel %vm567, %v507, 0
      %v575 = vsel %vm567, %v508, 0
      %v578 = vsel %vm567, %v509, 0
      %v581 = vsel %vm567, %v510, 0
      %v584 = vsel %vm567, %v511, 0
      %vm586 = vcmask 1040384
      %vm587 = vcmask 1041408
      %v588 = vsel %vm586, 4294967295, 65535
      %v589 = vsel %vm587, %v588, 0
      %v591 = vand.u32 %v555, %v589
      %v594 = vand.u32 %v556, %v589
      %596 = vmatprep.subr.bf16.mxu0 %v546
      %597 = vmatpush1.bf16.msra.mxu0 %v545
      %598 = vmatprep.subr.bf16.mxu0 %v548
      %599 = vmatpush1.bf16.msra.mxu0 %v547
      %600 = vmatprep.subr.bf16.mxu0 %v550
      %601 = vmatpush1.bf16.msra.mxu0 %v549
      %602 = vmatprep.subr.bf16.mxu0 %v552
      %603 = vmatpush1.bf16.msra.mxu0 %v551
      %604 = vmatprep.subr.bf16.mxu0 %v554
      %605 = vmatpush1.bf16.msra.mxu0 %v553
      %606 = vmatprep.subr.bf16.mxu0 %v594
      %607 = vmatpush1.bf16.msra.mxu0 %v591
      %608 = vmatprep.subr.bf16.mxu0 0
      %609 = vmatpush1.bf16.msra.mxu0 0
      %610 = vmatprep.subr.bf16.mxu0 0
      %611 = vmatpush1.bf16.msra.mxu0 0
      %612 = vmatprep.subr.bf16.mxu0 0
      %613 = vmatpush1.bf16.msra.mxu0 0
      %614 = vmatprep.subr.bf16.mxu0 0
      %615 = vmatpush1.bf16.msra.mxu0 0
      %616 = vmatprep.subr.bf16.mxu0 0
      %617 = vmatpush1.bf16.msra.mxu0 0
      %618 = vmatprep.subr.bf16.mxu0 0
      %619 = vmatpush1.bf16.msra.mxu0 0
      %620 = vmatprep.subr.bf16.mxu0 0
      %621 = vmatpush1.bf16.msra.mxu0 0
      %622 = vmatprep.subr.bf16.mxu0 0
      %623 = vmatpush1.bf16.msra.mxu0 0
      %624 = vmatprep.subr.bf16.mxu0 0
      %625 = vmatpush1.bf16.msra.mxu0 0
      %626 = vmatprep.subr.bf16.mxu0 0
      %627 = vmatpush1.bf16.msra.mxu0 0
      %628 = vmatprep.mubr.bf16.mxu0 0
      %629 = vmatmul.mubr.bf16.gmra.mrb[0].mxu0 %v569
      %v630 = vpop.f32.mrb[0].mxu0
      %v631 = vadd.f32 %v425, %v630
      %v632 = vpop.f32.mrb[0].mxu0
      %v633 = vadd.f32 %v425, %v632
      %v634 = vpop.f32.mrb[0].mxu0
      %v635 = vadd.f32 %v430, %v634
      %v636 = vpop.f32.mrb[0].mxu0
      %v637 = vadd.f32 %v430, %v636
      %638 = vmatprep.mubr.bf16.mxu0 0
      %639 = vmatmul.mubr.bf16.gmra.mrb[0].mxu0 %v572
      %v640 = vpop.f32.mrb[0].mxu0
      %v641 = vadd.f32 %v435, %v640
      %v642 = vpop.f32.mrb[0].mxu0
      %v643 = vadd.f32 %v435, %v642
      %v644 = vpop.f32.mrb[0].mxu0
      %v645 = vadd.f32 %v440, %v644
      %v646 = vpop.f32.mrb[0].mxu0
      %v647 = vadd.f32 %v440, %v646
      %648 = vmatprep.mubr.bf16.mxu0 0
      %649 = vmatmul.mubr.bf16.gmra.mrb[0].mxu0 %v575
      %v650 = vpop.f32.mrb[0].mxu0
      %v651 = vadd.f32 %v445, %v650
      %v652 = vpop.f32.mrb[0].mxu0
      %v653 = vadd.f32 %v445, %v652
      %v654 = vpop.f32.mrb[0].mxu0
      %v655 = vadd.f32 %v450, %v654
      %v656 = vpop.f32.mrb[0].mxu0
      %v657 = vadd.f32 %v450, %v656
      %658 = vmatprep.mubr.bf16.mxu0 0
      %659 = vmatmul.mubr.bf16.gmra.mrb[0].mxu0 %v578
      %v660 = vpop.f32.mrb[0].mxu0
      %v661 = vadd.f32 %v455, %v660
      %v662 = vpop.f32.mrb[0].mxu0
      %v663 = vadd.f32 %v455, %v662
      %v664 = vpop.f32.mrb[0].mxu0
      %v665 = vadd.f32 %v460, %v664
      %v666 = vpop.f32.mrb[0].mxu0
      %v667 = vadd.f32 %v460, %v666
      %668 = vmatprep.mubr.bf16.mxu0 0
      %669 = vmatmul.mubr.bf16.gmra.mrb[0].mxu0 %v581
      %v670 = vpop.f32.mrb[0].mxu0
      %v671 = vadd.f32 %v465, %v670
      %v672 = vpop.f32.mrb[0].mxu0
      %v673 = vadd.f32 %v465, %v672
      %v674 = vpop.f32.mrb[0].mxu0
      %v675 = vadd.f32 %v470, %v674
      %v676 = vpop.f32.mrb[0].mxu0
      %v677 = vadd.f32 %v470, %v676
      %678 = vmatprep.mubr.bf16.mxu0 0
      %679 = vmatmul.mubr.bf16.gmra.mrb[0].mxu0 %v584
      %v680 = vpop.f32.mrb[0].mxu0
      %v681 = vadd.f32 %v475, %v680
      %v682 = vpop.f32.mrb[0].mxu0
      %v683 = vadd.f32 %v475, %v682
      %v684 = vpop.f32.mrb[0].mxu0
      %v685 = vadd.f32 %v480, %v684
      %v686 = vpop.f32.mrb[0].mxu0
      %v687 = vadd.f32 %v480, %v686
      %688 = vdwg.mxu0
      %vm689 = vcmp.ge.f32.partialorder %v631, 0.0
      %vm690 = vcmp.ge.f32.partialorder %v633, 0.0
      %vm691 = vcmp.ge.f32.partialorder %v635, 0.0
      %vm692 = vcmp.ge.f32.partialorder %v637, 0.0
      %vm693 = vcmp.ge.f32.partialorder %v641, 0.0
      %vm694 = vcmp.ge.f32.partialorder %v643, 0.0
      %vm695 = vcmp.ge.f32.partialorder %v645, 0.0
      %vm696 = vcmp.ge.f32.partialorder %v647, 0.0
      %vm697 = vcmp.ge.f32.partialorder %v651, 0.0
      %vm698 = vcmp.ge.f32.partialorder %v653, 0.0
      %vm699 = vcmp.ge.f32.partialorder %v655, 0.0
      %vm700 = vcmp.ge.f32.partialorder %v657, 0.0
      %vm701 = vcmp.ge.f32.partialorder %v661, 0.0
      %vm702 = vcmp.ge.f32.partialorder %v663, 0.0
      %vm703 = vcmp.ge.f32.partialorder %v665, 0.0
      %vm704 = vcmp.ge.f32.partialorder %v667, 0.0
      %vm705 = vcmp.ge.f32.partialorder %v671, 0.0
      %vm706 = vcmp.ge.f32.partialorder %v673, 0.0
      %vm707 = vcmp.ge.f32.partialorder %v675, 0.0
      %vm708 = vcmp.ge.f32.partialorder %v677, 0.0
      %vm709 = vcmp.ge.f32.partialorder %v681, 0.0
      %vm710 = vcmp.ge.f32.partialorder %v683, 0.0
      %vm711 = vcmp.ge.f32.partialorder %v685, 0.0
      %vm712 = vcmp.ge.f32.partialorder %v687, 0.0
      %v713 = vmul.f32 %v631, 0.01
      %v714 = vmul.f32 %v633, 0.01
      %v715 = vmul.f32 %v635, 0.01
      %v716 = vmul.f32 %v637, 0.01
      %v717 = vmul.f32 %v641, 0.01
      %v718 = vmul.f32 %v643, 0.01
      %v719 = vmul.f32 %v645, 0.01
      %v720 = vmul.f32 %v647, 0.01
      %v721 = vmul.f32 %v651, 0.01
      %v722 = vmul.f32 %v653, 0.01
      %v723 = vmul.f32 %v655, 0.01
      %v724 = vmul.f32 %v657, 0.01
      %v725 = vmul.f32 %v661, 0.01
      %v726 = vmul.f32 %v663, 0.01
      %v727 = vmul.f32 %v665, 0.01
      %v728 = vmul.f32 %v667, 0.01
      %v729 = vmul.f32 %v671, 0.01
      %v730 = vmul.f32 %v673, 0.01
      %v731 = vmul.f32 %v675, 0.01
      %v732 = vmul.f32 %v677, 0.01
      %v733 = vmul.f32 %v681, 0.01
      %v734 = vmul.f32 %v683, 0.01
      %v735 = vmul.f32 %v685, 0.01
      %v736 = vmul.f32 %v687, 0.01
      %v737 = vsel %vm689, %v631, %v713
      %v738 = vsel %vm690, %v633, %v714
      %v739 = vsel %vm691, %v635, %v715
      %v740 = vsel %vm692, %v637, %v716
      %v741 = vsel %vm693, %v641, %v717
      %v742 = vsel %vm694, %v643, %v718
      %v743 = vsel %vm695, %v645, %v719
      %v744 = vsel %vm696, %v647, %v720
      %v745 = vsel %vm697, %v651, %v721
      %v746 = vsel %vm698, %v653, %v722
      %v747 = vsel %vm699, %v655, %v723
      %v748 = vsel %vm700, %v657, %v724
      %v749 = vsel %vm701, %v661, %v725
      %v750 = vsel %vm702, %v663, %v726
      %v751 = vsel %vm703, %v665, %v727
      %v752 = vsel %vm704, %v667, %v728
      %v753 = vsel %vm705, %v671, %v729
      %v754 = vsel %vm706, %v673, %v730
      %v755 = vsel %vm707, %v675, %v731
      %v756 = vsel %vm708, %v677, %v732
      %v757 = vsel %vm709, %v681, %v733
      %v758 = vsel %vm710, %v683, %v734
      %v759 = vsel %vm711, %v685, %v735
      %v760 = vsel %vm712, %v687, %v736
      %v761 = vld [vmem:[%s3] sm:$0xff]
      %v762 = vld [vmem:[%s3 + $0x8] sm:$0xff]
      %v763 = vld [vmem:[%s3 + $0x10] sm:$0xff]
      %v764 = vld [vmem:[%s3 + $0x18] sm:$0xf]
      %v765 = vld [vmem:[%s3 + $0x1c] sm:$0xff]
      %v766 = vld [vmem:[%s3 + $0x24] sm:$0xff]
      %v767 = vld [vmem:[%s3 + $0x2c] sm:$0xff]
      %v768 = vld [vmem:[%s3 + $0x34] sm:$0xf]
      %v769 = vld [vmem:[%s3 + $0x38] sm:$0xff]
      %v770 = vld [vmem:[%s3 + $0x40] sm:$0xff]
      %v771 = vld [vmem:[%s3 + $0x48] sm:$0xff]
      %v772 = vld [vmem:[%s3 + $0x50] sm:$0xf]
      %v773 = vld [vmem:[%s3 + $0x54] sm:$0xff]
      %v774 = vld [vmem:[%s3 + $0x5c] sm:$0xff]
      %v775 = vld [vmem:[%s3 + $0x64] sm:$0xff]
      %v776 = vld [vmem:[%s3 + $0x6c] sm:$0xf]
      %v777 = vld [vmem:[%s4] sm:$0xff]
      %v778 = vld [vmem:[%s4 + $0x8] sm:$0xff]
      %v779 = vld [vmem:[%s4 + $0x10] sm:$0xff]
      %v780 = vld [vmem:[%s4 + $0x18] sm:$0xff]
      %805 = vrot.lane.b32.xlu0 %v737, 15
      %v806 = vpop.permute.xlu0 %805
      %807 = vrot.lane.b32.xlu0 %v738, 15
      %v808 = vpop.permute.xlu0 %807
      %809 = vrot.lane.b32.xlu0 %v739, 15
      %v810 = vpop.permute.xlu0 %809
      %811 = vrot.lane.b32.xlu0 %v740, 15
      %v812 = vpop.permute.xlu0 %811
      %813 = vrot.lane.b32.xlu0 %v741, 15
      %v814 = vpop.permute.xlu0 %813
      %815 = vrot.lane.b32.xlu0 %v742, 15
      %v816 = vpop.permute.xlu0 %815
      %817 = vrot.lane.b32.xlu0 %v743, 15
      %v818 = vpop.permute.xlu0 %817
      %819 = vrot.lane.b32.xlu0 %v744, 15
      %v820 = vpop.permute.xlu0 %819
      %821 = vrot.lane.b32.xlu0 %v745, 15
      %v822 = vpop.permute.xlu0 %821
      %823 = vrot.lane.b32.xlu0 %v746, 15
      %v824 = vpop.permute.xlu0 %823
      %825 = vrot.lane.b32.xlu0 %v747, 15
      %v826 = vpop.permute.xlu0 %825
      %827 = vrot.lane.b32.xlu0 %v748, 15
      %v828 = vpop.permute.xlu0 %827
      %829 = vrot.lane.b32.xlu0 %v749, 15
      %v830 = vpop.permute.xlu0 %829
      %831 = vrot.lane.b32.xlu0 %v750, 15
      %v832 = vpop.permute.xlu0 %831
      %833 = vrot.lane.b32.xlu0 %v751, 15
      %v834 = vpop.permute.xlu0 %833
      %835 = vrot.lane.b32.xlu0 %v752, 15
      %v836 = vpop.permute.xlu0 %835
      %837 = vrot.lane.b32.xlu0 %v753, 15
      %v838 = vpop.permute.xlu0 %837
      %839 = vrot.lane.b32.xlu0 %v754, 15
      %v840 = vpop.permute.xlu0 %839
      %841 = vrot.lane.b32.xlu0 %v755, 15
      %v842 = vpop.permute.xlu0 %841
      %843 = vrot.lane.b32.xlu0 %v756, 15
      %v844 = vpop.permute.xlu0 %843
      %845 = vrot.lane.b32.xlu0 %v757, 15
      %v846 = vpop.permute.xlu0 %845
      %847 = vrot.lane.b32.xlu0 %v758, 15
      %v848 = vpop.permute.xlu0 %847
      %849 = vrot.lane.b32.xlu0 %v759, 15
      %v850 = vpop.permute.xlu0 %849
      %851 = vrot.lane.b32.xlu0 %v760, 15
      %v852 = vpop.permute.xlu0 %851
      %vm853 = vcmask 121856
      %v854 = vsel %vm853, %v806, %v808
      %v855 = vsel %vm853, %v810, %v812
      %v856 = vsel %vm853, %v814, %v816
      %v857 = vsel %vm853, %v818, %v820
      %v858 = vsel %vm853, %v822, %v824
      %v859 = vsel %vm853, %v826, %v828
      %v860 = vsel %vm853, %v830, %v832
      %v861 = vsel %vm853, %v834, %v836
      %v862 = vsel %vm853, %v838, %v840
      %v863 = vsel %vm853, %v842, %v844
      %v864 = vsel %vm853, %v846, %v848
      %v865 = vsel %vm853, %v850, %v852
      %v890 = vsel %vm853, 0.0, %v806
      %v891 = vsel %vm853, 0.0, %v810
      %v892 = vsel %vm853, 0.0, %v814
      %v893 = vsel %vm853, 0.0, %v818
      %v894 = vsel %vm853, 0.0, %v822
      %v895 = vsel %vm853, 0.0, %v826
      %v896 = vsel %vm853, 0.0, %v830
      %v897 = vsel %vm853, 0.0, %v834
      %v898 = vsel %vm853, 0.0, %v838
      %v899 = vsel %vm853, 0.0, %v842
      %v900 = vsel %vm853, 0.0, %v846
      %v901 = vsel %vm853, 0.0, %v850
      %v902 = vsel %vm567, %v854, 0.0
      %v903 = vsel %vm567, %v855, 0.0
      %v904 = vsel %vm567, %v856, 0.0
      %v905 = vsel %vm567, %v857, 0.0
      %v906 = vsel %vm567, %v858, 0.0
      %v907 = vsel %vm567, %v859, 0.0
      %v908 = vsel %vm567, %v860, 0.0
      %v909 = vsel %vm567, %v861, 0.0
      %v910 = vsel %vm567, %v862, 0.0
      %v911 = vsel %vm567, %v863, 0.0
      %v912 = vsel %vm567, %v864, 0.0
      %v913 = vsel %vm567, %v865, 0.0
      %v914 = vmul.f32 %v890, %v379
      %v915 = vmul.f32 %v902, %v380
      %v916 = vmul.f32 %v891, %v379
      %v917 = vmul.f32 %v903, %v380
      %v918 = vmul.f32 %v892, %v379
      %v919 = vmul.f32 %v904, %v380
      %v920 = vmul.f32 %v893, %v379
      %v921 = vmul.f32 %v905, %v380
      %v922 = vmul.f32 %v894, %v379
      %v923 = vmul.f32 %v906, %v380
      %v924 = vmul.f32 %v895, %v379
      %v925 = vmul.f32 %v907, %v380
      %v926 = vmul.f32 %v896, %v379
      %v927 = vmul.f32 %v908, %v380
      %v928 = vmul.f32 %v897, %v379
      %v929 = vmul.f32 %v909, %v380
      %v930 = vmul.f32 %v898, %v379
      %v931 = vmul.f32 %v910, %v380
      %v932 = vmul.f32 %v899, %v379
      %v933 = vmul.f32 %v911, %v380
      %v934 = vmul.f32 %v900, %v379
      %v935 = vmul.f32 %v912, %v380
      %v936 = vmul.f32 %v901, %v379
      %v937 = vmul.f32 %v913, %v380
      %v938 = vpack.c.bf16 %v916, %v914
      %v939 = vpack.c.bf16 %v917, %v915
      %v940 = vpack.c.bf16 %v920, %v918
      %v941 = vpack.c.bf16 %v921, %v919
      %v942 = vpack.c.bf16 %v924, %v922
      %v943 = vpack.c.bf16 %v925, %v923
      %v944 = vpack.c.bf16 %v928, %v926
      %v945 = vpack.c.bf16 %v929, %v927
      %v946 = vpack.c.bf16 %v932, %v930
      %v947 = vpack.c.bf16 %v933, %v931
      %v948 = vpack.c.bf16 %v936, %v934
      %v949 = vpack.c.bf16 %v937, %v935
      %v950 = vpack.c.bf16 %v891, %v890
      %v951 = vpack.c.bf16 %v903, %v902
      %v952 = vpack.c.bf16 %v893, %v892
      %v953 = vpack.c.bf16 %v905, %v904
      %v954 = vpack.c.bf16 %v895, %v894
      %v955 = vpack.c.bf16 %v907, %v906
      %v956 = vpack.c.bf16 %v897, %v896
      %v957 = vpack.c.bf16 %v909, %v908
      %v958 = vpack.c.bf16 %v899, %v898
      %v959 = vpack.c.bf16 %v911, %v910
      %v960 = vpack.c.bf16 %v901, %v900
      %v961 = vpack.c.bf16 %v913, %v912
      %964 = vrot.lane.b32.xlu0 %v385, 2
      %v965 = vpop.permute.xlu0 %964
      %966 = vrot.lane.b32.xlu0 %v386, 2
      %v967 = vpop.permute.xlu0 %966
      %vm968 = vcmask 15360
      %v969 = vsel %vm968, %v965, %v967
      %v972 = vmul.f32 %v890, %v965
      %v973 = vmul.f32 %v902, %v969
      %v974 = vmul.f32 %v891, %v965
      %v975 = vmul.f32 %v903, %v969
      %v976 = vmul.f32 %v892, %v965
      %v977 = vmul.f32 %v904, %v969
      %v978 = vmul.f32 %v893, %v965
      %v979 = vmul.f32 %v905, %v969
      %v980 = vmul.f32 %v894, %v965
      %v981 = vmul.f32 %v906, %v969
      %v982 = vmul.f32 %v895, %v965
      %v983 = vmul.f32 %v907, %v969
      %v984 = vmul.f32 %v896, %v965
      %v985 = vmul.f32 %v908, %v969
      %v986 = vmul.f32 %v897, %v965
      %v987 = vmul.f32 %v909, %v969
      %v988 = vmul.f32 %v898, %v965
      %v989 = vmul.f32 %v910, %v969
      %v990 = vmul.f32 %v899, %v965
      %v991 = vmul.f32 %v911, %v969
      %v992 = vmul.f32 %v900, %v965
      %v993 = vmul.f32 %v912, %v969
      %v994 = vmul.f32 %v901, %v965
      %v995 = vmul.f32 %v913, %v969
      %v996 = vpack.c.bf16 %v974, %v972
      %v997 = vpack.c.bf16 %v975, %v973
      %v998 = vpack.c.bf16 %v978, %v976
      %v999 = vpack.c.bf16 %v979, %v977
      %v1000 = vpack.c.bf16 %v982, %v980
      %v1001 = vpack.c.bf16 %v983, %v981
      %v1002 = vpack.c.bf16 %v986, %v984
      %v1003 = vpack.c.bf16 %v987, %v985
      %v1004 = vpack.c.bf16 %v990, %v988
      %v1005 = vpack.c.bf16 %v991, %v989
      %v1006 = vpack.c.bf16 %v994, %v992
      %v1007 = vpack.c.bf16 %v995, %v993
      %1010 = vrot.lane.b32.xlu0 %v379, 14
      %v1011 = vpop.permute.xlu0 %1010
      %1012 = vrot.lane.b32.xlu0 %v380, 14
      %v1013 = vpop.permute.xlu0 %1012
      %vm1014 = vcmask 113664
      %v1015 = vsel %vm1014, %v1011, %v1013
      %v1018 = vmul.f32 %v890, %v1011
      %v1019 = vmul.f32 %v902, %v1015
      %v1020 = vmul.f32 %v891, %v1011
      %v1021 = vmul.f32 %v903, %v1015
      %v1022 = vmul.f32 %v892, %v1011
      %v1023 = vmul.f32 %v904, %v1015
      %v1024 = vmul.f32 %v893, %v1011
      %v1025 = vmul.f32 %v905, %v1015
      %v1026 = vmul.f32 %v894, %v1011
      %v1027 = vmul.f32 %v906, %v1015
      %v1028 = vmul.f32 %v895, %v1011
      %v1029 = vmul.f32 %v907, %v1015
      %v1030 = vmul.f32 %v896, %v1011
      %v1031 = vmul.f32 %v908, %v1015
      %v1032 = vmul.f32 %v897, %v1011
      %v1033 = vmul.f32 %v909, %v1015
      %v1034 = vmul.f32 %v898, %v1011
      %v1035 = vmul.f32 %v910, %v1015
      %v1036 = vmul.f32 %v899, %v1011
      %v1037 = vmul.f32 %v911, %v1015
      %v1038 = vmul.f32 %v900, %v1011
      %v1039 = vmul.f32 %v912, %v1015
      %v1040 = vmul.f32 %v901, %v1011
      %v1041 = vmul.f32 %v913, %v1015
      %v1042 = vpack.c.bf16 %v1020, %v1018
      %v1043 = vpack.c.bf16 %v1021, %v1019
      %v1044 = vpack.c.bf16 %v1024, %v1022
      %v1045 = vpack.c.bf16 %v1025, %v1023
      %v1046 = vpack.c.bf16 %v1028, %v1026
      %v1047 = vpack.c.bf16 %v1029, %v1027
      %v1048 = vpack.c.bf16 %v1032, %v1030
      %v1049 = vpack.c.bf16 %v1033, %v1031
      %v1050 = vpack.c.bf16 %v1036, %v1034
      %v1051 = vpack.c.bf16 %v1037, %v1035
      %v1052 = vpack.c.bf16 %v1040, %v1038
      %v1053 = vpack.c.bf16 %v1041, %v1039
      %1054 = vrot.lane.b32.xlu0 %v385, 16
      %v1055 = vpop.permute.xlu0 %1054
      %1056 = vrot.lane.b32.xlu0 %v386, 16
      %v1057 = vpop.permute.xlu0 %1056
      %vm1058 = vcmask 130048
      %v1059 = vsel %vm1058, %v1055, %v1057
      %v1062 = vmul.f32 %v890, %v1055
      %v1063 = vmul.f32 %v902, %v1059
      %v1064 = vmul.f32 %v891, %v1055
      %v1065 = vmul.f32 %v903, %v1059
      %v1066 = vmul.f32 %v892, %v1055
      %v1067 = vmul.f32 %v904, %v1059
      %v1068 = vmul.f32 %v893, %v1055
      %v1069 = vmul.f32 %v905, %v1059
      %v1070 = vmul.f32 %v894, %v1055
      %v1071 = vmul.f32 %v906, %v1059
      %v1072 = vmul.f32 %v895, %v1055
      %v1073 = vmul.f32 %v907, %v1059
      %v1074 = vmul.f32 %v896, %v1055
      %v1075 = vmul.f32 %v908, %v1059
      %v1076 = vmul.f32 %v897, %v1055
      %v1077 = vmul.f32 %v909, %v1059
      %v1078 = vmul.f32 %v898, %v1055
      %v1079 = vmul.f32 %v910, %v1059
      %v1080 = vmul.f32 %v899, %v1055
      %v1081 = vmul.f32 %v911, %v1059
      %v1082 = vmul.f32 %v900, %v1055
      %v1083 = vmul.f32 %v912, %v1059
      %v1084 = vmul.f32 %v901, %v1055
      %v1085 = vmul.f32 %v913, %v1059
      %v1086 = vpack.c.bf16 %v1064, %v1062
      %v1087 = vpack.c.bf16 %v1065, %v1063
      %v1088 = vpack.c.bf16 %v1068, %v1066
      %v1089 = vpack.c.bf16 %v1069, %v1067
      %v1090 = vpack.c.bf16 %v1072, %v1070
      %v1091 = vpack.c.bf16 %v1073, %v1071
      %v1092 = vpack.c.bf16 %v1076, %v1074
      %v1093 = vpack.c.bf16 %v1077, %v1075
      %v1094 = vpack.c.bf16 %v1080, %v1078
      %v1095 = vpack.c.bf16 %v1081, %v1079
      %v1096 = vpack.c.bf16 %v1084, %v1082
      %v1097 = vpack.c.bf16 %v1085, %v1083
      %1098 = vrot.lane.b32.xlu0 %v379, 28
      %v1099 = vpop.permute.xlu0 %1098
      %1100 = vrot.lane.b32.xlu0 %v380, 28
      %v1101 = vpop.permute.xlu0 %1100
      %vm1102 = vcmask 228352
      %v1103 = vsel %vm1102, %v1099, %v1101
      %v1106 = vmul.f32 %v890, %v1099
      %v1107 = vmul.f32 %v902, %v1103
      %v1108 = vmul.f32 %v891, %v1099
      %v1109 = vmul.f32 %v903, %v1103
      %v1110 = vmul.f32 %v892, %v1099
      %v1111 = vmul.f32 %v904, %v1103
      %v1112 = vmul.f32 %v893, %v1099
      %v1113 = vmul.f32 %v905, %v1103
      %v1114 = vmul.f32 %v894, %v1099
      %v1115 = vmul.f32 %v906, %v1103
      %v1116 = vmul.f32 %v895, %v1099
      %v1117 = vmul.f32 %v907, %v1103
      %v1118 = vmul.f32 %v896, %v1099
      %v1119 = vmul.f32 %v908, %v1103
      %v1120 = vmul.f32 %v897, %v1099
      %v1121 = vmul.f32 %v909, %v1103
      %v1122 = vmul.f32 %v898, %v1099
      %v1123 = vmul.f32 %v910, %v1103
      %v1124 = vmul.f32 %v899, %v1099
      %v1125 = vmul.f32 %v911, %v1103
      %v1126 = vmul.f32 %v900, %v1099
      %v1127 = vmul.f32 %v912, %v1103
      %v1128 = vmul.f32 %v901, %v1099
      %v1129 = vmul.f32 %v913, %v1103
      %v1130 = vpack.c.bf16 %v1108, %v1106
      %v1131 = vpack.c.bf16 %v1109, %v1107
      %v1132 = vpack.c.bf16 %v1112, %v1110
      %v1133 = vpack.c.bf16 %v1113, %v1111
      %v1134 = vpack.c.bf16 %v1116, %v1114
      %v1135 = vpack.c.bf16 %v1117, %v1115
      %v1136 = vpack.c.bf16 %v1120, %v1118
      %v1137 = vpack.c.bf16 %v1121, %v1119
      %v1138 = vpack.c.bf16 %v1124, %v1122
      %v1139 = vpack.c.bf16 %v1125, %v1123
      %v1140 = vpack.c.bf16 %v1128, %v1126
      %v1141 = vpack.c.bf16 %v1129, %v1127
      %1142 = vrot.lane.b32.xlu0 %v385, 30
      %v1143 = vpop.permute.xlu0 %1142
      %1144 = vrot.lane.b32.xlu0 %v386, 30
      %v1145 = vpop.permute.xlu0 %1144
      %vm1146 = vcmask 244736
      %v1147 = vsel %vm1146, %v1143, %v1145
      %v1150 = vmul.f32 %v890, %v1143
      %v1151 = vmul.f32 %v902, %v1147
      %v1152 = vmul.f32 %v891, %v1143
      %v1153 = vmul.f32 %v903, %v1147
      %v1154 = vmul.f32 %v892, %v1143
      %v1155 = vmul.f32 %v904, %v1147
      %v1156 = vmul.f32 %v893, %v1143
      %v1157 = vmul.f32 %v905, %v1147
      %v1158 = vmul.f32 %v894, %v1143
      %v1159 = vmul.f32 %v906, %v1147
      %v1160 = vmul.f32 %v895, %v1143
      %v1161 = vmul.f32 %v907, %v1147
      %v1162 = vmul.f32 %v896, %v1143
      %v1163 = vmul.f32 %v908, %v1147
      %v1164 = vmul.f32 %v897, %v1143
      %v1165 = vmul.f32 %v909, %v1147
      %v1166 = vmul.f32 %v898, %v1143
      %v1167 = vmul.f32 %v910, %v1147
      %v1168 = vmul.f32 %v899, %v1143
      %v1169 = vmul.f32 %v911, %v1147
      %v1170 = vmul.f32 %v900, %v1143
      %v1171 = vmul.f32 %v912, %v1147
      %v1172 = vmul.f32 %v901, %v1143
      %v1173 = vmul.f32 %v913, %v1147
      %v1174 = vpack.c.bf16 %v1152, %v1150
      %v1175 = vpack.c.bf16 %v1153, %v1151
      %v1176 = vpack.c.bf16 %v1156, %v1154
      %v1177 = vpack.c.bf16 %v1157, %v1155
      %v1178 = vpack.c.bf16 %v1160, %v1158
      %v1179 = vpack.c.bf16 %v1161, %v1159
      %v1180 = vpack.c.bf16 %v1164, %v1162
      %v1181 = vpack.c.bf16 %v1165, %v1163
      %v1182 = vpack.c.bf16 %v1168, %v1166
      %v1183 = vpack.c.bf16 %v1169, %v1167
      %v1184 = vpack.c.bf16 %v1172, %v1170
      %v1185 = vpack.c.bf16 %v1173, %v1171
      %1198 = vrot.lane.b32.xlu0 %v950, 127
      %v1199 = vpop.permute.xlu0 %1198
      %1200 = vrot.lane.b32.xlu0 %v951, 127
      %v1201 = vpop.permute.xlu0 %1200
      %1202 = vrot.lane.b32.xlu0 %v952, 127
      %v1203 = vpop.permute.xlu0 %1202
      %1204 = vrot.lane.b32.xlu0 %v953, 127
      %v1205 = vpop.permute.xlu0 %1204
      %1206 = vrot.lane.b32.xlu0 %v954, 127
      %v1207 = vpop.permute.xlu0 %1206
      %1208 = vrot.lane.b32.xlu0 %v955, 127
      %v1209 = vpop.permute.xlu0 %1208
      %1210 = vrot.lane.b32.xlu0 %v956, 127
      %v1211 = vpop.permute.xlu0 %1210
      %1212 = vrot.lane.b32.xlu0 %v957, 127
      %v1213 = vpop.permute.xlu0 %1212
      %1214 = vrot.lane.b32.xlu0 %v958, 127
      %v1215 = vpop.permute.xlu0 %1214
      %1216 = vrot.lane.b32.xlu0 %v959, 127
      %v1217 = vpop.permute.xlu0 %1216
      %1218 = vrot.lane.b32.xlu0 %v960, 127
      %v1219 = vpop.permute.xlu0 %1218
      %1220 = vrot.lane.b32.xlu0 %v961, 127
      %v1221 = vpop.permute.xlu0 %1220
      %vm1222 = vcmask 1039360
      %v1223 = vsel %vm1222, %v1199, %v1201
      %v1224 = vsel %vm1222, %v1203, %v1205
      %v1225 = vsel %vm1222, %v1207, %v1209
      %v1226 = vsel %vm1222, %v1211, %v1213
      %v1227 = vsel %vm1222, %v1215, %v1217
      %v1228 = vsel %vm1222, %v1219, %v1221
      %1253 = vrot.lane.b32.xlu0 %v996, 126
      %v1254 = vpop.permute.xlu0 %1253
      %1255 = vrot.lane.b32.xlu0 %v997, 126
      %v1256 = vpop.permute.xlu0 %1255
      %1257 = vrot.lane.b32.xlu0 %v998, 126
      %v1258 = vpop.permute.xlu0 %1257
      %1259 = vrot.lane.b32.xlu0 %v999, 126
      %v1260 = vpop.permute.xlu0 %1259
      %1261 = vrot.lane.b32.xlu0 %v1000, 126
      %v1262 = vpop.permute.xlu0 %1261
      %1263 = vrot.lane.b32.xlu0 %v1001, 126
      %v1264 = vpop.permute.xlu0 %1263
      %1265 = vrot.lane.b32.xlu0 %v1002, 126
      %v1266 = vpop.permute.xlu0 %1265
      %1267 = vrot.lane.b32.xlu0 %v1003, 126
      %v1268 = vpop.permute.xlu0 %1267
      %1269 = vrot.lane.b32.xlu0 %v1004, 126
      %v1270 = vpop.permute.xlu0 %1269
      %1271 = vrot.lane.b32.xlu0 %v1005, 126
      %v1272 = vpop.permute.xlu0 %1271
      %1273 = vrot.lane.b32.xlu0 %v1006, 126
      %v1274 = vpop.permute.xlu0 %1273
      %1275 = vrot.lane.b32.xlu0 %v1007, 126
      %v1276 = vpop.permute.xlu0 %1275
      %vm1277 = vcmask 1031168
      %v1278 = vsel %vm1277, %v1254, %v1256
      %v1279 = vsel %vm1277, %v1258, %v1260
      %v1280 = vsel %vm1277, %v1262, %v1264
      %v1281 = vsel %vm1277, %v1266, %v1268
      %v1282 = vsel %vm1277, %v1270, %v1272
      %v1283 = vsel %vm1277, %v1274, %v1276
      %1308 = vrot.lane.b32.xlu0 %v1042, 114
      %v1309 = vpop.permute.xlu0 %1308
      %1310 = vrot.lane.b32.xlu0 %v1043, 114
      %v1311 = vpop.permute.xlu0 %1310
      %1312 = vrot.lane.b32.xlu0 %v1044, 114
      %v1313 = vpop.permute.xlu0 %1312
      %1314 = vrot.lane.b32.xlu0 %v1045, 114
      %v1315 = vpop.permute.xlu0 %1314
      %1316 = vrot.lane.b32.xlu0 %v1046, 114
      %v1317 = vpop.permute.xlu0 %1316
      %1318 = vrot.lane.b32.xlu0 %v1047, 114
      %v1319 = vpop.permute.xlu0 %1318
      %1320 = vrot.lane.b32.xlu0 %v1048, 114
      %v1321 = vpop.permute.xlu0 %1320
      %1322 = vrot.lane.b32.xlu0 %v1049, 114
      %v1323 = vpop.permute.xlu0 %1322
      %1324 = vrot.lane.b32.xlu0 %v1050, 114
      %v1325 = vpop.permute.xlu0 %1324
      %1326 = vrot.lane.b32.xlu0 %v1051, 114
      %v1327 = vpop.permute.xlu0 %1326
      %1328 = vrot.lane.b32.xlu0 %v1052, 114
      %v1329 = vpop.permute.xlu0 %1328
      %1330 = vrot.lane.b32.xlu0 %v1053, 114
      %v1331 = vpop.permute.xlu0 %1330
      %vm1332 = vcmask 932864
      %v1333 = vsel %vm1332, %v1309, %v1311
      %v1334 = vsel %vm1332, %v1313, %v1315
      %v1335 = vsel %vm1332, %v1317, %v1319
      %v1336 = vsel %vm1332, %v1321, %v1323
      %v1337 = vsel %vm1332, %v1325, %v1327
      %v1338 = vsel %vm1332, %v1329, %v1331
      %1351 = vrot.lane.b32.xlu0 %v950, 113
      %v1352 = vpop.permute.xlu0 %1351
      %1353 = vrot.lane.b32.xlu0 %v951, 113
      %v1354 = vpop.permute.xlu0 %1353
      %1355 = vrot.lane.b32.xlu0 %v952, 113
      %v1356 = vpop.permute.xlu0 %1355
      %1357 = vrot.lane.b32.xlu0 %v953, 113
      %v1358 = vpop.permute.xlu0 %1357
      %1359 = vrot.lane.b32.xlu0 %v954, 113
      %v1360 = vpop.permute.xlu0 %1359
      %1361 = vrot.lane.b32.xlu0 %v955, 113
      %v1362 = vpop.permute.xlu0 %1361
      %1363 = vrot.lane.b32.xlu0 %v956, 113
      %v1364 = vpop.permute.xlu0 %1363
      %1365 = vrot.lane.b32.xlu0 %v957, 113
      %v1366 = vpop.permute.xlu0 %1365
      %1367 = vrot.lane.b32.xlu0 %v958, 113
      %v1368 = vpop.permute.xlu0 %1367
      %1369 = vrot.lane.b32.xlu0 %v959, 113
      %v1370 = vpop.permute.xlu0 %1369
      %1371 = vrot.lane.b32.xlu0 %v960, 113
      %v1372 = vpop.permute.xlu0 %1371
      %1373 = vrot.lane.b32.xlu0 %v961, 113
      %v1374 = vpop.permute.xlu0 %1373
      %vm1375 = vcmask 924672
      %v1376 = vsel %vm1375, %v1352, %v1354
      %v1377 = vsel %vm1375, %v1356, %v1358
      %v1378 = vsel %vm1375, %v1360, %v1362
      %v1379 = vsel %vm1375, %v1364, %v1366
      %v1380 = vsel %vm1375, %v1368, %v1370
      %v1381 = vsel %vm1375, %v1372, %v1374
      %1406 = vrot.lane.b32.xlu0 %v1086, 112
      %v1407 = vpop.permute.xlu0 %1406
      %1408 = vrot.lane.b32.xlu0 %v1087, 112
      %v1409 = vpop.permute.xlu0 %1408
      %1410 = vrot.lane.b32.xlu0 %v1088, 112
      %v1411 = vpop.permute.xlu0 %1410
      %1412 = vrot.lane.b32.xlu0 %v1089, 112
      %v1413 = vpop.permute.xlu0 %1412
      %1414 = vrot.lane.b32.xlu0 %v1090, 112
      %v1415 = vpop.permute.xlu0 %1414
      %1416 = vrot.lane.b32.xlu0 %v1091, 112
      %v1417 = vpop.permute.xlu0 %1416
      %1418 = vrot.lane.b32.xlu0 %v1092, 112
      %v1419 = vpop.permute.xlu0 %1418
      %1420 = vrot.lane.b32.xlu0 %v1093, 112
      %v1421 = vpop.permute.xlu0 %1420
      %1422 = vrot.lane.b32.xlu0 %v1094, 112
      %v1423 = vpop.permute.xlu0 %1422
      %1424 = vrot.lane.b32.xlu0 %v1095, 112
      %v1425 = vpop.permute.xlu0 %1424
      %1426 = vrot.lane.b32.xlu0 %v1096, 112
      %v1427 = vpop.permute.xlu0 %1426
      %1428 = vrot.lane.b32.xlu0 %v1097, 112
      %v1429 = vpop.permute.xlu0 %1428
      %vm1430 = vcmask 916480
      %v1431 = vsel %vm1430, %v1407, %v1409
      %v1432 = vsel %vm1430, %v1411, %v1413
      %v1433 = vsel %vm1430, %v1415, %v1417
      %v1434 = vsel %vm1430, %v1419, %v1421
      %v1435 = vsel %vm1430, %v1423, %v1425
      %v1436 = vsel %vm1430, %v1427, %v1429
      %1461 = vrot.lane.b32.xlu0 %v1130, 100
      %v1462 = vpop.permute.xlu0 %1461
      %1463 = vrot.lane.b32.xlu0 %v1131, 100
      %v1464 = vpop.permute.xlu0 %1463
      %1465 = vrot.lane.b32.xlu0 %v1132, 100
      %v1466 = vpop.permute.xlu0 %1465
      %1467 = vrot.lane.b32.xlu0 %v1133, 100
      %v1468 = vpop.permute.xlu0 %1467
      %1469 = vrot.lane.b32.xlu0 %v1134, 100
      %v1470 = vpop.permute.xlu0 %1469
      %1471 = vrot.lane.b32.xlu0 %v1135, 100
      %v1472 = vpop.permute.xlu0 %1471
      %1473 = vrot.lane.b32.xlu0 %v1136, 100
      %v1474 = vpop.permute.xlu0 %1473
      %1475 = vrot.lane.b32.xlu0 %v1137, 100
      %v1476 = vpop.permute.xlu0 %1475
      %1477 = vrot.lane.b32.xlu0 %v1138, 100
      %v1478 = vpop.permute.xlu0 %1477
      %1479 = vrot.lane.b32.xlu0 %v1139, 100
      %v1480 = vpop.permute.xlu0 %1479
      %1481 = vrot.lane.b32.xlu0 %v1140, 100
      %v1482 = vpop.permute.xlu0 %1481
      %1483 = vrot.lane.b32.xlu0 %v1141, 100
      %v1484 = vpop.permute.xlu0 %1483
      %vm1485 = vcmask 818176
      %v1486 = vsel %vm1485, %v1462, %v1464
      %v1487 = vsel %vm1485, %v1466, %v1468
      %v1488 = vsel %vm1485, %v1470, %v1472
      %v1489 = vsel %vm1485, %v1474, %v1476
      %v1490 = vsel %vm1485, %v1478, %v1480
      %v1491 = vsel %vm1485, %v1482, %v1484
      %1504 = vrot.lane.b32.xlu0 %v950, 99
      %v1505 = vpop.permute.xlu0 %1504
      %1506 = vrot.lane.b32.xlu0 %v951, 99
      %v1507 = vpop.permute.xlu0 %1506
      %1508 = vrot.lane.b32.xlu0 %v952, 99
      %v1509 = vpop.permute.xlu0 %1508
      %1510 = vrot.lane.b32.xlu0 %v953, 99
      %v1511 = vpop.permute.xlu0 %1510
      %1512 = vrot.lane.b32.xlu0 %v954, 99
      %v1513 = vpop.permute.xlu0 %1512
      %1514 = vrot.lane.b32.xlu0 %v955, 99
      %v1515 = vpop.permute.xlu0 %1514
      %1516 = vrot.lane.b32.xlu0 %v956, 99
      %v1517 = vpop.permute.xlu0 %1516
      %1518 = vrot.lane.b32.xlu0 %v957, 99
      %v1519 = vpop.permute.xlu0 %1518
      %1520 = vrot.lane.b32.xlu0 %v958, 99
      %v1521 = vpop.permute.xlu0 %1520
      %1522 = vrot.lane.b32.xlu0 %v959, 99
      %v1523 = vpop.permute.xlu0 %1522
      %1524 = vrot.lane.b32.xlu0 %v960, 99
      %v1525 = vpop.permute.xlu0 %1524
      %1526 = vrot.lane.b32.xlu0 %v961, 99
      %v1527 = vpop.permute.xlu0 %1526
      %vm1528 = vcmask 809984
      %v1529 = vsel %vm1528, %v1505, %v1507
      %v1530 = vsel %vm1528, %v1509, %v1511
      %v1531 = vsel %vm1528, %v1513, %v1515
      %v1532 = vsel %vm1528, %v1517, %v1519
      %v1533 = vsel %vm1528, %v1521, %v1523
      %v1534 = vsel %vm1528, %v1525, %v1527
      %1559 = vrot.lane.b32.xlu0 %v1174, 98
      %v1560 = vpop.permute.xlu0 %1559
      %1561 = vrot.lane.b32.xlu0 %v1175, 98
      %v1562 = vpop.permute.xlu0 %1561
      %1563 = vrot.lane.b32.xlu0 %v1176, 98
      %v1564 = vpop.permute.xlu0 %1563
      %1565 = vrot.lane.b32.xlu0 %v1177, 98
      %v1566 = vpop.permute.xlu0 %1565
      %1567 = vrot.lane.b32.xlu0 %v1178, 98
      %v1568 = vpop.permute.xlu0 %1567
      %1569 = vrot.lane.b32.xlu0 %v1179, 98
      %v1570 = vpop.permute.xlu0 %1569
      %1571 = vrot.lane.b32.xlu0 %v1180, 98
      %v1572 = vpop.permute.xlu0 %1571
      %1573 = vrot.lane.b32.xlu0 %v1181, 98
      %v1574 = vpop.permute.xlu0 %1573
      %1575 = vrot.lane.b32.xlu0 %v1182, 98
      %v1576 = vpop.permute.xlu0 %1575
      %1577 = vrot.lane.b32.xlu0 %v1183, 98
      %v1578 = vpop.permute.xlu0 %1577
      %1579 = vrot.lane.b32.xlu0 %v1184, 98
      %v1580 = vpop.permute.xlu0 %1579
      %1581 = vrot.lane.b32.xlu0 %v1185, 98
      %v1582 = vpop.permute.xlu0 %1581
      %vm1583 = vcmask 801792
      %v1584 = vsel %vm1583, %v1560, %v1562
      %v1585 = vsel %vm1583, %v1564, %v1566
      %v1586 = vsel %vm1583, %v1568, %v1570
      %v1587 = vsel %vm1583, %v1572, %v1574
      %v1588 = vsel %vm1583, %v1576, %v1578
      %v1589 = vsel %vm1583, %v1580, %v1582
      %1603 = vset.pattern.permute.xlu0 0
      %1604 = vperm.xlu0 %1603, %v777
      %v1605 = vpop.permute.xlu0 %1604
      %1608 = vset.pattern.permute.xlu0 0
      %1609 = vperm.xlu0 %1608, %v778
      %v1610 = vpop.permute.xlu0 %1609
      %1613 = vset.pattern.permute.xlu0 0
      %1614 = vperm.xlu0 %1613, %v779
      %v1615 = vpop.permute.xlu0 %1614
      %1618 = vset.pattern.permute.xlu0 0
      %1619 = vperm.xlu0 %1618, %v780
      %v1620 = vpop.permute.xlu0 %1619
      %v1638 = vunpack.c.l.b16 %v761
      %v1639 = vunpack.c.h.b16 %v761
      %v1640 = vunpack.c.l.b16 %v762
      %v1641 = vunpack.c.h.b16 %v762
      %v1642 = vunpack.c.l.b16 %v763
      %v1643 = vunpack.c.h.b16 %v763
      %v1644 = vunpack.c.l.b16 %v764
      %v1645 = vunpack.c.l.b16 %v765
      %v1646 = vunpack.c.h.b16 %v765
      %v1647 = vunpack.c.l.b16 %v766
      %v1648 = vunpack.c.h.b16 %v766
      %v1649 = vunpack.c.l.b16 %v767
      %v1650 = vunpack.c.h.b16 %v767
      %v1651 = vunpack.c.l.b16 %v768
      %v1652 = vunpack.c.l.b16 %v769
      %v1653 = vunpack.c.h.b16 %v769
      %v1654 = vunpack.c.l.b16 %v770
      %v1655 = vunpack.c.h.b16 %v770
      %v1656 = vunpack.c.l.b16 %v771
      %v1657 = vunpack.c.h.b16 %v771
      %v1658 = vunpack.c.l.b16 %v772
      %v1659 = vunpack.c.l.b16 %v773
      %v1660 = vunpack.c.h.b16 %v773
      %v1661 = vunpack.c.l.b16 %v774
      %v1662 = vunpack.c.h.b16 %v774
      %v1663 = vunpack.c.l.b16 %v775
      %v1664 = vunpack.c.h.b16 %v775
      %v1665 = vunpack.c.l.b16 %v776
      %v1666 = vpack.c.b16 %v1645, %v1638
      %v1667 = vpack.c.b16 %v1646, %v1639
      %v1668 = vpack.c.b16 %v1647, %v1640
      %v1669 = vpack.c.b16 %v1648, %v1641
      %v1670 = vpack.c.b16 %v1649, %v1642
      %v1671 = vpack.c.b16 %v1650, %v1643
      %v1672 = vpack.c.b16 %v1651, %v1644
      %v1673 = vpack.c.b16 %v1659, %v1652
      %v1674 = vpack.c.b16 %v1660, %v1653
      %v1675 = vpack.c.b16 %v1661, %v1654
      %v1676 = vpack.c.b16 %v1662, %v1655
      %v1677 = vpack.c.b16 %v1663, %v1656
      %v1678 = vpack.c.b16 %v1664, %v1657
      %v1679 = vpack.c.b16 %v1665, %v1658
      %vm1692 = vcmask 785408
      %v1694 = vsel %vm1692, %v1672, 0
      %v1697 = vsel %vm1692, %v1679, 0
      %1699 = vmatprep.subr.bf16.mxu0 %v939
      %1700 = vmatpush1.bf16.msra.mxu0 %v938
      %1701 = vmatprep.subr.bf16.mxu0 %v941
      %1702 = vmatpush1.bf16.msra.mxu0 %v940
      %1703 = vmatprep.subr.bf16.mxu0 %v943
      %1704 = vmatpush1.bf16.msra.mxu0 %v942
      %1705 = vmatprep.subr.bf16.mxu0 %v945
      %1706 = vmatpush1.bf16.msra.mxu0 %v944
      %1707 = vmatprep.subr.bf16.mxu0 %v947
      %1708 = vmatpush1.bf16.msra.mxu0 %v946
      %1709 = vmatprep.subr.bf16.mxu0 %v949
      %1710 = vmatpush1.bf16.msra.mxu0 %v948
      %1711 = vmatprep.subr.bf16.mxu0 %v1201
      %1712 = vmatpush1.bf16.msra.mxu0 %v1223
      %1713 = vmatprep.subr.bf16.mxu0 %v1205
      %1714 = vmatpush1.bf16.msra.mxu0 %v1224
      %1715 = vmatprep.subr.bf16.mxu0 %v1209
      %1716 = vmatpush1.bf16.msra.mxu0 %v1225
      %1717 = vmatprep.subr.bf16.mxu0 %v1213
      %1718 = vmatpush1.bf16.msra.mxu0 %v1226
      %1719 = vmatprep.subr.bf16.mxu0 %v1217
      %1720 = vmatpush1.bf16.msra.mxu0 %v1227
      %1721 = vmatprep.subr.bf16.mxu0 %v1221
      %1722 = vmatpush1.bf16.msra.mxu0 %v1228
      %1723 = vmatprep.subr.bf16.mxu0 %v1256
      %1724 = vmatpush1.bf16.msra.mxu0 %v1278
      %1725 = vmatprep.subr.bf16.mxu0 %v1260
      %1726 = vmatpush1.bf16.msra.mxu0 %v1279
      %1727 = vmatprep.subr.bf16.mxu0 %v1264
      %1728 = vmatpush1.bf16.msra.mxu0 %v1280
      %1729 = vmatprep.subr.bf16.mxu0 %v1268
      %1730 = vmatpush1.bf16.msra.mxu0 %v1281
      %1731 = vmatprep.mubr.bf16.mxu0 %v1667
      %1732 = vmatmul.mubr.bf16.gmra.mrb[0].mxu0 %v1666
      %v1733 = vpop.f32.mrb[0].mxu0
      %v1734 = vadd.f32 %v1605, %v1733
      %v1735 = vpop.f32.mrb[0].mxu0
      %v1736 = vadd.f32 %v1605, %v1735
      %v1737 = vpop.f32.mrb[0].mxu0
      %v1738 = vadd.f32 %v1610, %v1737
      %v1739 = vpop.f32.mrb[0].mxu0
      %v1740 = vadd.f32 %v1610, %v1739
      %1741 = vmatprep.mubr.bf16.mxu0 %v1674
      %1742 = vmatmul.mubr.bf16.gmra.mrb[0].mxu0 %v1673
      %v1743 = vpop.f32.mrb[0].mxu0
      %v1744 = vadd.f32 %v1615, %v1743
      %v1745 = vpop.f32.mrb[0].mxu0
      %v1746 = vadd.f32 %v1615, %v1745
      %v1747 = vpop.f32.mrb[0].mxu0
      %v1748 = vadd.f32 %v1620, %v1747
      %v1749 = vpop.f32.mrb[0].mxu0
      %v1750 = vadd.f32 %v1620, %v1749
      %1751 = vdwg.mxu0
      %1752 = vmatprep.subr.bf16.mxu0 %v1272
      %1753 = vmatpush1.bf16.msra.mxu0 %v1282
      %1754 = vmatprep.subr.bf16.mxu0 %v1276
      %1755 = vmatpush1.bf16.msra.mxu0 %v1283
      %1756 = vmatprep.subr.bf16.mxu0 %v1311
      %1757 = vmatpush1.bf16.msra.mxu0 %v1333
      %1758 = vmatprep.subr.bf16.mxu0 %v1315
      %1759 = vmatpush1.bf16.msra.mxu0 %v1334
      %1760 = vmatprep.subr.bf16.mxu0 %v1319
      %1761 = vmatpush1.bf16.msra.mxu0 %v1335
      %1762 = vmatprep.subr.bf16.mxu0 %v1323
      %1763 = vmatpush1.bf16.msra.mxu0 %v1336
      %1764 = vmatprep.subr.bf16.mxu0 %v1327
      %1765 = vmatpush1.bf16.msra.mxu0 %v1337
      %1766 = vmatprep.subr.bf16.mxu0 %v1331
      %1767 = vmatpush1.bf16.msra.mxu0 %v1338
      %1768 = vmatprep.subr.bf16.mxu0 %v1354
      %1769 = vmatpush1.bf16.msra.mxu0 %v1376
      %1770 = vmatprep.subr.bf16.mxu0 %v1358
      %1771 = vmatpush1.bf16.msra.mxu0 %v1377
      %1772 = vmatprep.subr.bf16.mxu0 %v1362
      %1773 = vmatpush1.bf16.msra.mxu0 %v1378
      %1774 = vmatprep.subr.bf16.mxu0 %v1366
      %1775 = vmatpush1.bf16.msra.mxu0 %v1379
      %1776 = vmatprep.subr.bf16.mxu0 %v1370
      %1777 = vmatpush1.bf16.msra.mxu0 %v1380
      %1778 = vmatprep.subr.bf16.mxu0 %v1374
      %1779 = vmatpush1.bf16.msra.mxu0 %v1381
      %1780 = vmatprep.subr.bf16.mxu0 %v1409
      %1781 = vmatpush1.bf16.msra.mxu0 %v1431
      %1782 = vmatprep.subr.bf16.mxu0 %v1413
      %1783 = vmatpush1.bf16.msra.mxu0 %v1432
      %1784 = vmatprep.mubr.bf16.mxu0 %v1669
      %1785 = vmatmul.mubr.bf16.gmra.mrb[0].mxu0 %v1668
      %v1786 = vpop.f32.mrb[0].mxu0
      %v1787 = vadd.f32 %v1734, %v1786
      %v1788 = vpop.f32.mrb[0].mxu0
      %v1789 = vadd.f32 %v1736, %v1788
      %v1790 = vpop.f32.mrb[0].mxu0
      %v1791 = vadd.f32 %v1738, %v1790
      %v1792 = vpop.f32.mrb[0].mxu0
      %v1793 = vadd.f32 %v1740, %v1792
      %1794 = vmatprep.mubr.bf16.mxu0 %v1676
      %1795 = vmatmul.mubr.bf16.gmra.mrb[0].mxu0 %v1675
      %v1796 = vpop.f32.mrb[0].mxu0
      %v1797 = vadd.f32 %v1744, %v1796
      %v1798 = vpop.f32.mrb[0].mxu0
      %v1799 = vadd.f32 %v1746, %v1798
      %v1800 = vpop.f32.mrb[0].mxu0
      %v1801 = vadd.f32 %v1748, %v1800
      %v1802 = vpop.f32.mrb[0].mxu0
      %v1803 = vadd.f32 %v1750, %v1802
      %1804 = vdwg.mxu0
      %1805 = vmatprep.subr.bf16.mxu0 %v1417
      %1806 = vmatpush1.bf16.msra.mxu0 %v1433
      %1807 = vmatprep.subr.bf16.mxu0 %v1421
      %1808 = vmatpush1.bf16.msra.mxu0 %v1434
      %1809 = vmatprep.subr.bf16.mxu0 %v1425
      %1810 = vmatpush1.bf16.msra.mxu0 %v1435
      %1811 = vmatprep.subr.bf16.mxu0 %v1429
      %1812 = vmatpush1.bf16.msra.mxu0 %v1436
      %1813 = vmatprep.subr.bf16.mxu0 %v1464
      %1814 = vmatpush1.bf16.msra.mxu0 %v1486
      %1815 = vmatprep.subr.bf16.mxu0 %v1468
      %1816 = vmatpush1.bf16.msra.mxu0 %v1487
      %1817 = vmatprep.subr.bf16.mxu0 %v1472
      %1818 = vmatpush1.bf16.msra.mxu0 %v1488
      %1819 = vmatprep.subr.bf16.mxu0 %v1476
      %1820 = vmatpush1.bf16.msra.mxu0 %v1489
      %1821 = vmatprep.subr.bf16.mxu0 %v1480
      %1822 = vmatpush1.bf16.msra.mxu0 %v1490
      %1823 = vmatprep.subr.bf16.mxu0 %v1484
      %1824 = vmatpush1.bf16.msra.mxu0 %v1491
      %1825 = vmatprep.subr.bf16.mxu0 %v1507
      %1826 = vmatpush1.bf16.msra.mxu0 %v1529
      %1827 = vmatprep.subr.bf16.mxu0 %v1511
      %1828 = vmatpush1.bf16.msra.mxu0 %v1530
      %1829 = vmatprep.subr.bf16.mxu0 %v1515
      %1830 = vmatpush1.bf16.msra.mxu0 %v1531
      %1831 = vmatprep.subr.bf16.mxu0 %v1519
      %1832 = vmatpush1.bf16.msra.mxu0 %v1532
      %1833 = vmatprep.subr.bf16.mxu0 %v1523
      %1834 = vmatpush1.bf16.msra.mxu0 %v1533
      %1835 = vmatprep.subr.bf16.mxu0 %v1527
      %1836 = vmatpush1.bf16.msra.mxu0 %v1534
      %1837 = vmatprep.mubr.bf16.mxu0 %v1671
      %1838 = vmatmul.mubr.bf16.gmra.mrb[0].mxu0 %v1670
      %v1839 = vpop.f32.mrb[0].mxu0
      %v1840 = vadd.f32 %v1787, %v1839
      %v1841 = vpop.f32.mrb[0].mxu0
      %v1842 = vadd.f32 %v1789, %v1841
      %v1843 = vpop.f32.mrb[0].mxu0
      %v1844 = vadd.f32 %v1791, %v1843
      %v1845 = vpop.f32.mrb[0].mxu0
      %v1846 = vadd.f32 %v1793, %v1845
      %1847 = vmatprep.mubr.bf16.mxu0 %v1678
      %1848 = vmatmul.mubr.bf16.gmra.mrb[0].mxu0 %v1677
      %v1849 = vpop.f32.mrb[0].mxu0
      %v1850 = vadd.f32 %v1797, %v1849
      %v1851 = vpop.f32.mrb[0].mxu0
      %v1852 = vadd.f32 %v1799, %v1851
      %v1853 = vpop.f32.mrb[0].mxu0
      %v1854 = vadd.f32 %v1801, %v1853
      %v1855 = vpop.f32.mrb[0].mxu0
      %v1856 = vadd.f32 %v1803, %v1855
      %1857 = vdwg.mxu0
      %1858 = vmatprep.subr.bf16.mxu0 %v1562
      %1859 = vmatpush1.bf16.msra.mxu0 %v1584
      %1860 = vmatprep.subr.bf16.mxu0 %v1566
      %1861 = vmatpush1.bf16.msra.mxu0 %v1585
      %1862 = vmatprep.subr.bf16.mxu0 %v1570
      %1863 = vmatpush1.bf16.msra.mxu0 %v1586
      %1864 = vmatprep.subr.bf16.mxu0 %v1574
      %1865 = vmatpush1.bf16.msra.mxu0 %v1587
      %1866 = vmatprep.subr.bf16.mxu0 %v1578
      %1867 = vmatpush1.bf16.msra.mxu0 %v1588
      %1868 = vmatprep.subr.bf16.mxu0 %v1582
      %1869 = vmatpush1.bf16.msra.mxu0 %v1589
      %1870 = vmatprep.subr.bf16.mxu0 0
      %1871 = vmatpush1.bf16.msra.mxu0 0
      %1872 = vmatprep.subr.bf16.mxu0 0
      %1873 = vmatpush1.bf16.msra.mxu0 0
      %1874 = vmatprep.subr.bf16.mxu0 0
      %1875 = vmatpush1.bf16.msra.mxu0 0
      %1876 = vmatprep.subr.bf16.mxu0 0
      %1877 = vmatpush1.bf16.msra.mxu0 0
      %1878 = vmatprep.subr.bf16.mxu0 0
      %1879 = vmatpush1.bf16.msra.mxu0 0
      %1880 = vmatprep.subr.bf16.mxu0 0
      %1881 = vmatpush1.bf16.msra.mxu0 0
      %1882 = vmatprep.subr.bf16.mxu0 0
      %1883 = vmatpush1.bf16.msra.mxu0 0
      %1884 = vmatprep.subr.bf16.mxu0 0
      %1885 = vmatpush1.bf16.msra.mxu0 0
      %1886 = vmatprep.subr.bf16.mxu0 0
      %1887 = vmatpush1.bf16.msra.mxu0 0
      %1888 = vmatprep.subr.bf16.mxu0 0
      %1889 = vmatpush1.bf16.msra.mxu0 0
      %1890 = vmatprep.mubr.bf16.mxu0 0
      %1891 = vmatmul.mubr.bf16.gmra.mrb[0].mxu0 %v1694
      %v1892 = vpop.f32.mrb[0].mxu0
      %v1893 = vadd.f32 %v1840, %v1892
      %v1894 = vpop.f32.mrb[0].mxu0
      %v1895 = vadd.f32 %v1842, %v1894
      %v1896 = vpop.f32.mrb[0].mxu0
      %v1897 = vadd.f32 %v1844, %v1896
      %v1898 = vpop.f32.mrb[0].mxu0
      %v1899 = vadd.f32 %v1846, %v1898
      %1900 = vmatprep.mubr.bf16.mxu0 0
      %1901 = vmatmul.mubr.bf16.gmra.mrb[0].mxu0 %v1697
      %v1902 = vpop.f32.mrb[0].mxu0
      %v1903 = vadd.f32 %v1850, %v1902
      %v1904 = vpop.f32.mrb[0].mxu0
      %v1905 = vadd.f32 %v1852, %v1904
      %v1906 = vpop.f32.mrb[0].mxu0
      %v1907 = vadd.f32 %v1854, %v1906
      %v1908 = vpop.f32.mrb[0].mxu0
      %v1909 = vadd.f32 %v1856, %v1908
      %1910 = vdwg.mxu0
      %v1911 = vld [vmem:[%s5] sm:$0xff]
      %v1912 = vld [vmem:[%s5 + $0x8] sm:$0xf]
      %v1913 = vld [vmem:[%s5 + $0xc] sm:$0xff]
      %v1914 = vld [vmem:[%s5 + $0x14] sm:$0xf]
      %v1915 = vld [vmem:[%s5 + $0x18] sm:$0xff]
      %v1916 = vld [vmem:[%s5 + $0x20] sm:$0xf]
      %v1917 = vld [vmem:[%s5 + $0x24] sm:$0xff]
      %v1918 = vld [vmem:[%s5 + $0x2c] sm:$0xf]
      %v1919 = vld [vmem:[%s6] sm:$0xff]
      %v1920 = vld [vmem:[%s6 + $0x8] sm:$0xff]
      %v1921 = vld [vmem:[%s6 + $0x10] sm:$0xff]
      %v1922 = vld [vmem:[%s6 + $0x18] sm:$0xff]
      %1931 = vrot.lane.b32.xlu0 %v1893, 15
      %v1932 = vpop.permute.xlu0 %1931
      %1933 = vrot.lane.b32.xlu0 %v1895, 15
      %v1934 = vpop.permute.xlu0 %1933
      %1935 = vrot.lane.b32.xlu0 %v1897, 15
      %v1936 = vpop.permute.xlu0 %1935
      %1937 = vrot.lane.b32.xlu0 %v1899, 15
      %v1938 = vpop.permute.xlu0 %1937
      %1939 = vrot.lane.b32.xlu0 %v1903, 15
      %v1940 = vpop.permute.xlu0 %1939
      %1941 = vrot.lane.b32.xlu0 %v1905, 15
      %v1942 = vpop.permute.xlu0 %1941
      %1943 = vrot.lane.b32.xlu0 %v1907, 15
      %v1944 = vpop.permute.xlu0 %1943
      %1945 = vrot.lane.b32.xlu0 %v1909, 15
      %v1946 = vpop.permute.xlu0 %1945
      %v1947 = vsel %vm853, %v1932, %v1934
      %v1948 = vsel %vm853, %v1936, %v1938
      %v1949 = vsel %vm853, %v1940, %v1942
      %v1950 = vsel %vm853, %v1944, %v1946
      %v1959 = vsel %vm853, 0.0, %v1932
      %v1960 = vsel %vm853, 0.0, %v1936
      %v1961 = vsel %vm853, 0.0, %v1940
      %v1962 = vsel %vm853, 0.0, %v1944
      %v1963 = vsel %vm567, %v1947, 0.0
      %v1964 = vsel %vm567, %v1948, 0.0
      %v1965 = vsel %vm567, %v1949, 0.0
      %v1966 = vsel %vm567, %v1950, 0.0
      %v1967 = vmul.f32 %v1959, %v379
      %v1968 = vmul.f32 %v1963, %v380
      %v1969 = vmul.f32 %v1960, %v379
      %v1970 = vmul.f32 %v1964, %v380
      %v1971 = vmul.f32 %v1961, %v379
      %v1972 = vmul.f32 %v1965, %v380
      %v1973 = vmul.f32 %v1962, %v379
      %v1974 = vmul.f32 %v1966, %v380
      %v1975 = vpack.c.bf16 %v1969, %v1967
      %v1976 = vpack.c.bf16 %v1970, %v1968
      %v1977 = vpack.c.bf16 %v1973, %v1971
      %v1978 = vpack.c.bf16 %v1974, %v1972
      %v1979 = vpack.c.bf16 %v1960, %v1959
      %v1980 = vpack.c.bf16 %v1964, %v1963
      %v1981 = vpack.c.bf16 %v1962, %v1961
      %v1982 = vpack.c.bf16 %v1966, %v1965
      %v1983 = vmul.f32 %v1959, %v965
      %v1984 = vmul.f32 %v1963, %v969
      %v1985 = vmul.f32 %v1960, %v965
      %v1986 = vmul.f32 %v1964, %v969
      %v1987 = vmul.f32 %v1961, %v965
      %v1988 = vmul.f32 %v1965, %v969
      %v1989 = vmul.f32 %v1962, %v965
      %v1990 = vmul.f32 %v1966, %v969
      %v1991 = vpack.c.bf16 %v1985, %v1983
      %v1992 = vpack.c.bf16 %v1986, %v1984
      %v1993 = vpack.c.bf16 %v1989, %v1987
      %v1994 = vpack.c.bf16 %v1990, %v1988
      %v1995 = vmul.f32 %v1959, %v1011
      %v1996 = vmul.f32 %v1963, %v1015
      %v1997 = vmul.f32 %v1960, %v1011
      %v1998 = vmul.f32 %v1964, %v1015
      %v1999 = vmul.f32 %v1961, %v1011
      %v2000 = vmul.f32 %v1965, %v1015
      %v2001 = vmul.f32 %v1962, %v1011
      %v2002 = vmul.f32 %v1966, %v1015
      %v2003 = vpack.c.bf16 %v1997, %v1995
      %v2004 = vpack.c.bf16 %v1998, %v1996
      %v2005 = vpack.c.bf16 %v2001, %v1999
      %v2006 = vpack.c.bf16 %v2002, %v2000
      %v2007 = vmul.f32 %v1959, %v1055
      %v2008 = vmul.f32 %v1963, %v1059
      %v2009 = vmul.f32 %v1960, %v1055
      %v2010 = vmul.f32 %v1964, %v1059
      %v2011 = vmul.f32 %v1961, %v1055
      %v2012 = vmul.f32 %v1965, %v1059
      %v2013 = vmul.f32 %v1962, %v1055
      %v2014 = vmul.f32 %v1966, %v1059
      %v2015 = vpack.c.bf16 %v2009, %v2007
      %v2016 = vpack.c.bf16 %v2010, %v2008
      %v2017 = vpack.c.bf16 %v2013, %v2011
      %v2018 = vpack.c.bf16 %v2014, %v2012
      %v2019 = vmul.f32 %v1959, %v1099
      %v2020 = vmul.f32 %v1963, %v1103
      %v2021 = vmul.f32 %v1960, %v1099
      %v2022 = vmul.f32 %v1964, %v1103
      %v2023 = vmul.f32 %v1961, %v1099
      %v2024 = vmul.f32 %v1965, %v1103
      %v2025 = vmul.f32 %v1962, %v1099
      %v2026 = vmul.f32 %v1966, %v1103
      %v2027 = vpack.c.bf16 %v2021, %v2019
      %v2028 = vpack.c.bf16 %v2022, %v2020
      %v2029 = vpack.c.bf16 %v2025, %v2023
      %v2030 = vpack.c.bf16 %v2026, %v2024
      %v2031 = vmul.f32 %v1959, %v1143
      %v2032 = vmul.f32 %v1963, %v1147
      %v2033 = vmul.f32 %v1960, %v1143
      %v2034 = vmul.f32 %v1964, %v1147
      %v2035 = vmul.f32 %v1961, %v1143
      %v2036 = vmul.f32 %v1965, %v1147
      %v2037 = vmul.f32 %v1962, %v1143
      %v2038 = vmul.f32 %v1966, %v1147
      %v2039 = vpack.c.bf16 %v2033, %v2031
      %v2040 = vpack.c.bf16 %v2034, %v2032
      %v2041 = vpack.c.bf16 %v2037, %v2035
      %v2042 = vpack.c.bf16 %v2038, %v2036
      %2047 = vrot.lane.b32.xlu0 %v1979, 127
      %v2048 = vpop.permute.xlu0 %2047
      %2049 = vrot.lane.b32.xlu0 %v1980, 127
      %v2050 = vpop.permute.xlu0 %2049
      %2051 = vrot.lane.b32.xlu0 %v1981, 127
      %v2052 = vpop.permute.xlu0 %2051
      %2053 = vrot.lane.b32.xlu0 %v1982, 127
      %v2054 = vpop.permute.xlu0 %2053
      %v2055 = vsel %vm1222, %v2048, %v2050
      %v2056 = vsel %vm1222, %v2052, %v2054
      %2065 = vrot.lane.b32.xlu0 %v1991, 126
      %v2066 = vpop.permute.xlu0 %2065
      %2067 = vrot.lane.b32.xlu0 %v1992, 126
      %v2068 = vpop.permute.xlu0 %2067
      %2069 = vrot.lane.b32.xlu0 %v1993, 126
      %v2070 = vpop.permute.xlu0 %2069
      %2071 = vrot.lane.b32.xlu0 %v1994, 126
      %v2072 = vpop.permute.xlu0 %2071
      %v2073 = vsel %vm1277, %v2066, %v2068
      %v2074 = vsel %vm1277, %v2070, %v2072
      %2083 = vrot.lane.b32.xlu0 %v2003, 114
      %v2084 = vpop.permute.xlu0 %2083
      %2085 = vrot.lane.b32.xlu0 %v2004, 114
      %v2086 = vpop.permute.xlu0 %2085
      %2087 = vrot.lane.b32.xlu0 %v2005, 114
      %v2088 = vpop.permute.xlu0 %2087
      %2089 = vrot.lane.b32.xlu0 %v2006, 114
      %v2090 = vpop.permute.xlu0 %2089
      %v2091 = vsel %vm1332, %v2084, %v2086
      %v2092 = vsel %vm1332, %v2088, %v2090
      %2097 = vrot.lane.b32.xlu0 %v1979, 113
      %v2098 = vpop.permute.xlu0 %2097
      %2099 = vrot.lane.b32.xlu0 %v1980, 113
      %v2100 = vpop.permute.xlu0 %2099
      %2101 = vrot.lane.b32.xlu0 %v1981, 113
      %v2102 = vpop.permute.xlu0 %2101
      %2103 = vrot.lane.b32.xlu0 %v1982, 113
      %v2104 = vpop.permute.xlu0 %2103
      %v2105 = vsel %vm1375, %v2098, %v2100
      %v2106 = vsel %vm1375, %v2102, %v2104
      %2115 = vrot.lane.b32.xlu0 %v2015, 112
      %v2116 = vpop.permute.xlu0 %2115
      %2117 = vrot.lane.b32.xlu0 %v2016, 112
      %v2118 = vpop.permute.xlu0 %2117
      %2119 = vrot.lane.b32.xlu0 %v2017, 112
      %v2120 = vpop.permute.xlu0 %2119
      %2121 = vrot.lane.b32.xlu0 %v2018, 112
      %v2122 = vpop.permute.xlu0 %2121
      %v2123 = vsel %vm1430, %v2116, %v2118
      %v2124 = vsel %vm1430, %v2120, %v2122
      %2133 = vrot.lane.b32.xlu0 %v2027, 100
      %v2134 = vpop.permute.xlu0 %2133
      %2135 = vrot.lane.b32.xlu0 %v2028, 100
      %v2136 = vpop.permute.xlu0 %2135
      %2137 = vrot.lane.b32.xlu0 %v2029, 100
      %v2138 = vpop.permute.xlu0 %2137
      %2139 = vrot.lane.b32.xlu0 %v2030, 100
      %v2140 = vpop.permute.xlu0 %2139
      %v2141 = vsel %vm1485, %v2134, %v2136
      %v2142 = vsel %vm1485, %v2138, %v2140
      %2147 = vrot.lane.b32.xlu0 %v1979, 99
      %v2148 = vpop.permute.xlu0 %2147
      %2149 = vrot.lane.b32.xlu0 %v1980, 99
      %v2150 = vpop.permute.xlu0 %2149
      %2151 = vrot.lane.b32.xlu0 %v1981, 99
      %v2152 = vpop.permute.xlu0 %2151
      %2153 = vrot.lane.b32.xlu0 %v1982, 99
      %v2154 = vpop.permute.xlu0 %2153
      %v2155 = vsel %vm1528, %v2148, %v2150
      %v2156 = vsel %vm1528, %v2152, %v2154
      %2165 = vrot.lane.b32.xlu0 %v2039, 98
      %v2166 = vpop.permute.xlu0 %2165
      %2167 = vrot.lane.b32.xlu0 %v2040, 98
      %v2168 = vpop.permute.xlu0 %2167
      %2169 = vrot.lane.b32.xlu0 %v2041, 98
      %v2170 = vpop.permute.xlu0 %2169
      %2171 = vrot.lane.b32.xlu0 %v2042, 98
      %v2172 = vpop.permute.xlu0 %2171
      %v2173 = vsel %vm1583, %v2166, %v2168
      %v2174 = vsel %vm1583, %v2170, %v2172
      %2180 = vset.pattern.permute.xlu0 0
      %2181 = vperm.xlu0 %2180, %v1919
      %v2182 = vpop.permute.xlu0 %2181
      %2185 = vset.pattern.permute.xlu0 0
      %2186 = vperm.xlu0 %2185, %v1920
      %v2187 = vpop.permute.xlu0 %2186
      %2190 = vset.pattern.permute.xlu0 0
      %2191 = vperm.xlu0 %2190, %v1921
      %v2192 = vpop.permute.xlu0 %2191
      %2195 = vset.pattern.permute.xlu0 0
      %2196 = vperm.xlu0 %2195, %v1922
      %v2197 = vpop.permute.xlu0 %2196
      %v2207 = vunpack.c.l.b16 %v1911
      %v2208 = vunpack.c.h.b16 %v1911
      %v2209 = vunpack.c.l.b16 %v1912
      %v2210 = vunpack.c.l.b16 %v1913
      %v2211 = vunpack.c.h.b16 %v1913
      %v2212 = vunpack.c.l.b16 %v1914
      %v2213 = vunpack.c.l.b16 %v1915
      %v2214 = vunpack.c.h.b16 %v1915
      %v2215 = vunpack.c.l.b16 %v1916
      %v2216 = vunpack.c.l.b16 %v1917
      %v2217 = vunpack.c.h.b16 %v1917
      %v2218 = vunpack.c.l.b16 %v1918
      %v2219 = vpack.c.b16 %v2210, %v2207
      %v2220 = vpack.c.b16 %v2211, %v2208
      %v2221 = vpack.c.b16 %v2212, %v2209
      %v2222 = vpack.c.b16 %v2216, %v2213
      %v2223 = vpack.c.b16 %v2217, %v2214
      %v2224 = vpack.c.b16 %v2218, %v2215
      %vm2229 = vcmask 261120
      %v2231 = vsel %vm2229, %v2221, 0
      %v2234 = vsel %vm2229, %v2224, 0
      %2236 = vmatprep.subr.bf16.mxu0 %v1976
      %2237 = vmatpush1.bf16.msra.mxu0 %v1975
      %2238 = vmatprep.subr.bf16.mxu0 %v1978
      %2239 = vmatpush1.bf16.msra.mxu0 %v1977
      %2240 = vmatprep.subr.bf16.mxu0 %v2050
      %2241 = vmatpush1.bf16.msra.mxu0 %v2055
      %2242 = vmatprep.subr.bf16.mxu0 %v2054
      %2243 = vmatpush1.bf16.msra.mxu0 %v2056
      %2244 = vmatprep.subr.bf16.mxu0 %v2068
      %2245 = vmatpush1.bf16.msra.mxu0 %v2073
      %2246 = vmatprep.subr.bf16.mxu0 %v2072
      %2247 = vmatpush1.bf16.msra.mxu0 %v2074
      %2248 = vmatprep.subr.bf16.mxu0 %v2086
      %2249 = vmatpush1.bf16.msra.mxu0 %v2091
      %2250 = vmatprep.subr.bf16.mxu0 %v2090
      %2251 = vmatpush1.bf16.msra.mxu0 %v2092
      %2252 = vmatprep.subr.bf16.mxu0 %v2100
      %2253 = vmatpush1.bf16.msra.mxu0 %v2105
      %2254 = vmatprep.subr.bf16.mxu0 %v2104
      %2255 = vmatpush1.bf16.msra.mxu0 %v2106
      %2256 = vmatprep.subr.bf16.mxu0 %v2118
      %2257 = vmatpush1.bf16.msra.mxu0 %v2123
      %2258 = vmatprep.subr.bf16.mxu0 %v2122
      %2259 = vmatpush1.bf16.msra.mxu0 %v2124
      %2260 = vmatprep.subr.bf16.mxu0 %v2136
      %2261 = vmatpush1.bf16.msra.mxu0 %v2141
      %2262 = vmatprep.subr.bf16.mxu0 %v2140
      %2263 = vmatpush1.bf16.msra.mxu0 %v2142
      %2264 = vmatprep.subr.bf16.mxu0 %v2150
      %2265 = vmatpush1.bf16.msra.mxu0 %v2155
      %2266 = vmatprep.subr.bf16.mxu0 %v2154
      %2267 = vmatpush1.bf16.msra.mxu0 %v2156
      %2268 = vmatprep.mubr.bf16.mxu0 %v2220
      %2269 = vmatmul.mubr.bf16.gmra.mrb[0].mxu0 %v2219
      %v2270 = vpop.f32.mrb[0].mxu0
      %v2271 = vadd.f32 %v2182, %v2270
      %v2272 = vpop.f32.mrb[0].mxu0
      %v2273 = vadd.f32 %v2182, %v2272
      %v2274 = vpop.f32.mrb[0].mxu0
      %v2275 = vadd.f32 %v2187, %v2274
      %v2276 = vpop.f32.mrb[0].mxu0
      %v2277 = vadd.f32 %v2187, %v2276
      %2278 = vmatprep.mubr.bf16.mxu0 %v2223
      %2279 = vmatmul.mubr.bf16.gmra.mrb[0].mxu0 %v2222
      %v2280 = vpop.f32.mrb[0].mxu0
      %v2281 = vadd.f32 %v2192, %v2280
      %v2282 = vpop.f32.mrb[0].mxu0
      %v2283 = vadd.f32 %v2192, %v2282
      %v2284 = vpop.f32.mrb[0].mxu0
      %v2285 = vadd.f32 %v2197, %v2284
      %v2286 = vpop.f32.mrb[0].mxu0
      %v2287 = vadd.f32 %v2197, %v2286
      %2288 = vdwg.mxu0
      %2289 = vmatprep.subr.bf16.mxu0 %v2168
      %2290 = vmatpush1.bf16.msra.mxu0 %v2173
      %2291 = vmatprep.subr.bf16.mxu0 %v2172
      %2292 = vmatpush1.bf16.msra.mxu0 %v2174
      %2293 = vmatprep.subr.bf16.mxu0 0
      %2294 = vmatpush1.bf16.msra.mxu0 0
      %2295 = vmatprep.subr.bf16.mxu0 0
      %2296 = vmatpush1.bf16.msra.mxu0 0
      %2297 = vmatprep.subr.bf16.mxu0 0
      %2298 = vmatpush1.bf16.msra.mxu0 0
      %2299 = vmatprep.subr.bf16.mxu0 0
      %2300 = vmatpush1.bf16.msra.mxu0 0
      %2301 = vmatprep.subr.bf16.mxu0 0
      %2302 = vmatpush1.bf16.msra.mxu0 0
      %2303 = vmatprep.subr.bf16.mxu0 0
      %2304 = vmatpush1.bf16.msra.mxu0 0
      %2305 = vmatprep.subr.bf16.mxu0 0
      %2306 = vmatpush1.bf16.msra.mxu0 0
      %2307 = vmatprep.subr.bf16.mxu0 0
      %2308 = vmatpush1.bf16.msra.mxu0 0
      %2309 = vmatprep.subr.bf16.mxu0 0
      %2310 = vmatpush1.bf16.msra.mxu0 0
      %2311 = vmatprep.subr.bf16.mxu0 0
      %2312 = vmatpush1.bf16.msra.mxu0 0
      %2313 = vmatprep.subr.bf16.mxu0 0
      %2314 = vmatpush1.bf16.msra.mxu0 0
      %2315 = vmatprep.subr.bf16.mxu0 0
      %2316 = vmatpush1.bf16.msra.mxu0 0
      %2317 = vmatprep.subr.bf16.mxu0 0
      %2318 = vmatpush1.bf16.msra.mxu0 0
      %2319 = vmatprep.subr.bf16.mxu0 0
      %2320 = vmatpush1.bf16.msra.mxu0 0
      %2321 = vmatprep.mubr.bf16.mxu0 0
      %2322 = vmatmul.mubr.bf16.gmra.mrb[0].mxu0 %v2231
      %v2323 = vpop.f32.mrb[0].mxu0
      %v2324 = vadd.f32 %v2271, %v2323
      %v2325 = vpop.f32.mrb[0].mxu0
      %v2326 = vadd.f32 %v2273, %v2325
      %v2327 = vpop.f32.mrb[0].mxu0
      %v2328 = vadd.f32 %v2275, %v2327
      %v2329 = vpop.f32.mrb[0].mxu0
      %v2330 = vadd.f32 %v2277, %v2329
      %2331 = vmatprep.mubr.bf16.mxu0 0
      %2332 = vmatmul.mubr.bf16.gmra.mrb[0].mxu0 %v2234
      %v2333 = vpop.f32.mrb[0].mxu0
      %v2334 = vadd.f32 %v2281, %v2333
      %v2335 = vpop.f32.mrb[0].mxu0
      %v2336 = vadd.f32 %v2283, %v2335
      %v2337 = vpop.f32.mrb[0].mxu0
      %v2338 = vadd.f32 %v2285, %v2337
      %v2339 = vpop.f32.mrb[0].mxu0
      %v2340 = vadd.f32 %v2287, %v2339
      %2341 = vdwg.mxu0
      %vm2342 = vcmp.ge.f32.partialorder %v2324, 0.0
      %vm2343 = vcmp.ge.f32.partialorder %v2326, 0.0
      %vm2344 = vcmp.ge.f32.partialorder %v2328, 0.0
      %vm2345 = vcmp.ge.f32.partialorder %v2330, 0.0
      %vm2346 = vcmp.ge.f32.partialorder %v2334, 0.0
      %vm2347 = vcmp.ge.f32.partialorder %v2336, 0.0
      %vm2348 = vcmp.ge.f32.partialorder %v2338, 0.0
      %vm2349 = vcmp.ge.f32.partialorder %v2340, 0.0
      %v2350 = vmul.f32 %v2324, 0.01
      %v2351 = vmul.f32 %v2326, 0.01
      %v2352 = vmul.f32 %v2328, 0.01
      %v2353 = vmul.f32 %v2330, 0.01
      %v2354 = vmul.f32 %v2334, 0.01
      %v2355 = vmul.f32 %v2336, 0.01
      %v2356 = vmul.f32 %v2338, 0.01
      %v2357 = vmul.f32 %v2340, 0.01
      %v2358 = vsel %vm2342, %v2324, %v2350
      %v2359 = vsel %vm2343, %v2326, %v2351
      %v2360 = vsel %vm2344, %v2328, %v2352
      %v2361 = vsel %vm2345, %v2330, %v2353
      %v2362 = vsel %vm2346, %v2334, %v2354
      %v2363 = vsel %vm2347, %v2336, %v2355
      %v2364 = vsel %vm2348, %v2338, %v2356
      %v2365 = vsel %vm2349, %v2340, %v2357
      %s2366 = scalar_lea.vmem %s5, 48
      %v2367 = vld [vmem:[%s2366] sm:$0xff]
      %v2368 = vld [vmem:[%s2366 + $0x8] sm:$0xf]
      %v2369 = vld [vmem:[%s2366 + $0xc] sm:$0xff]
      %v2370 = vld [vmem:[%s2366 + $0x14] sm:$0xf]
      %v2371 = vld [vmem:[%s2366 + $0x18] sm:$0xff]
      %v2372 = vld [vmem:[%s2366 + $0x20] sm:$0xf]
      %v2373 = vld [vmem:[%s2366 + $0x24] sm:$0xff]
      %v2374 = vld [vmem:[%s2366 + $0x2c] sm:$0xf]
      %s2375 = scalar_lea.vmem %s6, 32
      %v2376 = vld [vmem:[%s2375] sm:$0xff]
      %v2377 = vld [vmem:[%s2375 + $0x8] sm:$0xff]
      %v2378 = vld [vmem:[%s2375 + $0x10] sm:$0xff]
      %v2379 = vld [vmem:[%s2375 + $0x18] sm:$0xff]
      %2388 = vrot.lane.b32.xlu0 %v2358, 15
      %v2389 = vpop.permute.xlu0 %2388
      %2390 = vrot.lane.b32.xlu0 %v2359, 15
      %v2391 = vpop.permute.xlu0 %2390
      %2392 = vrot.lane.b32.xlu0 %v2360, 15
      %v2393 = vpop.permute.xlu0 %2392
      %2394 = vrot.lane.b32.xlu0 %v2361, 15
      %v2395 = vpop.permute.xlu0 %2394
      %2396 = vrot.lane.b32.xlu0 %v2362, 15
      %v2397 = vpop.permute.xlu0 %2396
      %2398 = vrot.lane.b32.xlu0 %v2363, 15
      %v2399 = vpop.permute.xlu0 %2398
      %2400 = vrot.lane.b32.xlu0 %v2364, 15
      %v2401 = vpop.permute.xlu0 %2400
      %2402 = vrot.lane.b32.xlu0 %v2365, 15
      %v2403 = vpop.permute.xlu0 %2402
      %v2404 = vsel %vm853, %v2389, %v2391
      %v2405 = vsel %vm853, %v2393, %v2395
      %v2406 = vsel %vm853, %v2397, %v2399
      %v2407 = vsel %vm853, %v2401, %v2403
      %v2416 = vsel %vm853, 0.0, %v2389
      %v2417 = vsel %vm853, 0.0, %v2393
      %v2418 = vsel %vm853, 0.0, %v2397
      %v2419 = vsel %vm853, 0.0, %v2401
      %v2420 = vsel %vm567, %v2404, 0.0
      %v2421 = vsel %vm567, %v2405, 0.0
      %v2422 = vsel %vm567, %v2406, 0.0
      %v2423 = vsel %vm567, %v2407, 0.0
      %v2424 = vmul.f32 %v2416, %v379
      %v2425 = vmul.f32 %v2420, %v380
      %v2426 = vmul.f32 %v2417, %v379
      %v2427 = vmul.f32 %v2421, %v380
      %v2428 = vmul.f32 %v2418, %v379
      %v2429 = vmul.f32 %v2422, %v380
      %v2430 = vmul.f32 %v2419, %v379
      %v2431 = vmul.f32 %v2423, %v380
      %v2432 = vpack.c.bf16 %v2426, %v2424
      %v2433 = vpack.c.bf16 %v2427, %v2425
      %v2434 = vpack.c.bf16 %v2430, %v2428
      %v2435 = vpack.c.bf16 %v2431, %v2429
      %v2436 = vpack.c.bf16 %v2417, %v2416
      %v2437 = vpack.c.bf16 %v2421, %v2420
      %v2438 = vpack.c.bf16 %v2419, %v2418
      %v2439 = vpack.c.bf16 %v2423, %v2422
      %v2440 = vmul.f32 %v2416, %v965
      %v2441 = vmul.f32 %v2420, %v969
      %v2442 = vmul.f32 %v2417, %v965
      %v2443 = vmul.f32 %v2421, %v969
      %v2444 = vmul.f32 %v2418, %v965
      %v2445 = vmul.f32 %v2422, %v969
      %v2446 = vmul.f32 %v2419, %v965
      %v2447 = vmul.f32 %v2423, %v969
      %v2448 = vpack.c.bf16 %v2442, %v2440
      %v2449 = vpack.c.bf16 %v2443, %v2441
      %v2450 = vpack.c.bf16 %v2446, %v2444
      %v2451 = vpack.c.bf16 %v2447, %v2445
      %v2452 = vmul.f32 %v2416, %v1011
      %v2453 = vmul.f32 %v2420, %v1015
      %v2454 = vmul.f32 %v2417, %v1011
      %v2455 = vmul.f32 %v2421, %v1015
      %v2456 = vmul.f32 %v2418, %v1011
      %v2457 = vmul.f32 %v2422, %v1015
      %v2458 = vmul.f32 %v2419, %v1011
      %v2459 = vmul.f32 %v2423, %v1015
      %v2460 = vpack.c.bf16 %v2454, %v2452
      %v2461 = vpack.c.bf16 %v2455, %v2453
      %v2462 = vpack.c.bf16 %v2458, %v2456
      %v2463 = vpack.c.bf16 %v2459, %v2457
      %v2464 = vmul.f32 %v2416, %v1055
      %v2465 = vmul.f32 %v2420, %v1059
      %v2466 = vmul.f32 %v2417, %v1055
      %v2467 = vmul.f32 %v2421, %v1059
      %v2468 = vmul.f32 %v2418, %v1055
      %v2469 = vmul.f32 %v2422, %v1059
      %v2470 = vmul.f32 %v2419, %v1055
      %v2471 = vmul.f32 %v2423, %v1059
      %v2472 = vpack.c.bf16 %v2466, %v2464
      %v2473 = vpack.c.bf16 %v2467, %v2465
      %v2474 = vpack.c.bf16 %v2470, %v2468
      %v2475 = vpack.c.bf16 %v2471, %v2469
      %v2476 = vmul.f32 %v2416, %v1099
      %v2477 = vmul.f32 %v2420, %v1103
      %v2478 = vmul.f32 %v2417, %v1099
      %v2479 = vmul.f32 %v2421, %v1103
      %v2480 = vmul.f32 %v2418, %v1099
      %v2481 = vmul.f32 %v2422, %v1103
      %v2482 = vmul.f32 %v2419, %v1099
      %v2483 = vmul.f32 %v2423, %v1103
      %v2484 = vpack.c.bf16 %v2478, %v2476
      %v2485 = vpack.c.bf16 %v2479, %v2477
      %v2486 = vpack.c.bf16 %v2482, %v2480
      %v2487 = vpack.c.bf16 %v2483, %v2481
      %v2488 = vmul.f32 %v2416, %v1143
      %v2489 = vmul.f32 %v2420, %v1147
      %v2490 = vmul.f32 %v2417, %v1143
      %v2491 = vmul.f32 %v2421, %v1147
      %v2492 = vmul.f32 %v2418, %v1143
      %v2493 = vmul.f32 %v2422, %v1147
      %v2494 = vmul.f32 %v2419, %v1143
      %v2495 = vmul.f32 %v2423, %v1147
      %v2496 = vpack.c.bf16 %v2490, %v2488
      %v2497 = vpack.c.bf16 %v2491, %v2489
      %v2498 = vpack.c.bf16 %v2494, %v2492
      %v2499 = vpack.c.bf16 %v2495, %v2493
      %2504 = vrot.lane.b32.xlu0 %v2436, 127
      %v2505 = vpop.permute.xlu0 %2504
      %2506 = vrot.lane.b32.xlu0 %v2437, 127
      %v2507 = vpop.permute.xlu0 %2506
      %2508 = vrot.lane.b32.xlu0 %v2438, 127
      %v2509 = vpop.permute.xlu0 %2508
      %2510 = vrot.lane.b32.xlu0 %v2439, 127
      %v2511 = vpop.permute.xlu0 %2510
      %v2512 = vsel %vm1222, %v2505, %v2507
      %v2513 = vsel %vm1222, %v2509, %v2511
      %2522 = vrot.lane.b32.xlu0 %v2448, 126
      %v2523 = vpop.permute.xlu0 %2522
      %2524 = vrot.lane.b32.xlu0 %v2449, 126
      %v2525 = vpop.permute.xlu0 %2524
      %2526 = vrot.lane.b32.xlu0 %v2450, 126
      %v2527 = vpop.permute.xlu0 %2526
      %2528 = vrot.lane.b32.xlu0 %v2451, 126
      %v2529 = vpop.permute.xlu0 %2528
      %v2530 = vsel %vm1277, %v2523, %v2525
      %v2531 = vsel %vm1277, %v2527, %v2529
      %2540 = vrot.lane.b32.xlu0 %v2460, 114
      %v2541 = vpop.permute.xlu0 %2540
      %2542 = vrot.lane.b32.xlu0 %v2461, 114
      %v2543 = vpop.permute.xlu0 %2542
      %2544 = vrot.lane.b32.xlu0 %v2462, 114
      %v2545 = vpop.permute.xlu0 %2544
      %2546 = vrot.lane.b32.xlu0 %v2463, 114
      %v2547 = vpop.permute.xlu0 %2546
      %v2548 = vsel %vm1332, %v2541, %v2543
      %v2549 = vsel %vm1332, %v2545, %v2547
      %2554 = vrot.lane.b32.xlu0 %v2436, 113
      %v2555 = vpop.permute.xlu0 %2554
      %2556 = vrot.lane.b32.xlu0 %v2437, 113
      %v2557 = vpop.permute.xlu0 %2556
      %2558 = vrot.lane.b32.xlu0 %v2438, 113
      %v2559 = vpop.permute.xlu0 %2558
      %2560 = vrot.lane.b32.xlu0 %v2439, 113
      %v2561 = vpop.permute.xlu0 %2560
      %v2562 = vsel %vm1375, %v2555, %v2557
      %v2563 = vsel %vm1375, %v2559, %v2561
      %2572 = vrot.lane.b32.xlu0 %v2472, 112
      %v2573 = vpop.permute.xlu0 %2572
      %2574 = vrot.lane.b32.xlu0 %v2473, 112
      %v2575 = vpop.permute.xlu0 %2574
      %2576 = vrot.lane.b32.xlu0 %v2474, 112
      %v2577 = vpop.permute.xlu0 %2576
      %2578 = vrot.lane.b32.xlu0 %v2475, 112
      %v2579 = vpop.permute.xlu0 %2578
      %v2580 = vsel %vm1430, %v2573, %v2575
      %v2581 = vsel %vm1430, %v2577, %v2579
      %2590 = vrot.lane.b32.xlu0 %v2484, 100
      %v2591 = vpop.permute.xlu0 %2590
      %2592 = vrot.lane.b32.xlu0 %v2485, 100
      %v2593 = vpop.permute.xlu0 %2592
      %2594 = vrot.lane.b32.xlu0 %v2486, 100
      %v2595 = vpop.permute.xlu0 %2594
      %2596 = vrot.lane.b32.xlu0 %v2487, 100
      %v2597 = vpop.permute.xlu0 %2596
      %v2598 = vsel %vm1485, %v2591, %v2593
      %v2599 = vsel %vm1485, %v2595, %v2597
      %2604 = vrot.lane.b32.xlu0 %v2436, 99
      %v2605 = vpop.permute.xlu0 %2604
      %2606 = vrot.lane.b32.xlu0 %v2437, 99
      %v2607 = vpop.permute.xlu0 %2606
      %2608 = vrot.lane.b32.xlu0 %v2438, 99
      %v2609 = vpop.permute.xlu0 %2608
      %2610 = vrot.lane.b32.xlu0 %v2439, 99
      %v2611 = vpop.permute.xlu0 %2610
      %v2612 = vsel %vm1528, %v2605, %v2607
      %v2613 = vsel %vm1528, %v2609, %v2611
      %2622 = vrot.lane.b32.xlu0 %v2496, 98
      %v2623 = vpop.permute.xlu0 %2622
      %2624 = vrot.lane.b32.xlu0 %v2497, 98
      %v2625 = vpop.permute.xlu0 %2624
      %2626 = vrot.lane.b32.xlu0 %v2498, 98
      %v2627 = vpop.permute.xlu0 %2626
      %2628 = vrot.lane.b32.xlu0 %v2499, 98
      %v2629 = vpop.permute.xlu0 %2628
      %v2630 = vsel %vm1583, %v2623, %v2625
      %v2631 = vsel %vm1583, %v2627, %v2629
      %2637 = vset.pattern.permute.xlu0 0
      %2638 = vperm.xlu0 %2637, %v2376
      %v2639 = vpop.permute.xlu0 %2638
      %2642 = vset.pattern.permute.xlu0 0
      %2643 = vperm.xlu0 %2642, %v2377
      %v2644 = vpop.permute.xlu0 %2643
      %2647 = vset.pattern.permute.xlu0 0
      %2648 = vperm.xlu0 %2647, %v2378
      %v2649 = vpop.permute.xlu0 %2648
      %2652 = vset.pattern.permute.xlu0 0
      %2653 = vperm.xlu0 %2652, %v2379
      %v2654 = vpop.permute.xlu0 %2653
      %v2664 = vunpack.c.l.b16 %v2367
      %v2665 = vunpack.c.h.b16 %v2367
      %v2666 = vunpack.c.l.b16 %v2368
      %v2667 = vunpack.c.l.b16 %v2369
      %v2668 = vunpack.c.h.b16 %v2369
      %v2669 = vunpack.c.l.b16 %v2370
      %v2670 = vunpack.c.l.b16 %v2371
      %v2671 = vunpack.c.h.b16 %v2371
      %v2672 = vunpack.c.l.b16 %v2372
      %v2673 = vunpack.c.l.b16 %v2373
      %v2674 = vunpack.c.h.b16 %v2373
      %v2675 = vunpack.c.l.b16 %v2374
      %v2676 = vpack.c.b16 %v2667, %v2664
      %v2677 = vpack.c.b16 %v2668, %v2665
      %v2678 = vpack.c.b16 %v2669, %v2666
      %v2679 = vpack.c.b16 %v2673, %v2670
      %v2680 = vpack.c.b16 %v2674, %v2671
      %v2681 = vpack.c.b16 %v2675, %v2672
      %v2687 = vsel %vm2229, %v2678, 0
      %v2690 = vsel %vm2229, %v2681, 0
      %2692 = vmatprep.subr.bf16.mxu0 %v2433
      %2693 = vmatpush1.bf16.msra.mxu0 %v2432
      %2694 = vmatprep.subr.bf16.mxu0 %v2435
      %2695 = vmatpush1.bf16.msra.mxu0 %v2434
      %2696 = vmatprep.subr.bf16.mxu0 %v2507
      %2697 = vmatpush1.bf16.msra.mxu0 %v2512
      %2698 = vmatprep.subr.bf16.mxu0 %v2511
      %2699 = vmatpush1.bf16.msra.mxu0 %v2513
      %2700 = vmatprep.subr.bf16.mxu0 %v2525
      %2701 = vmatpush1.bf16.msra.mxu0 %v2530
      %2702 = vmatprep.subr.bf16.mxu0 %v2529
      %2703 = vmatpush1.bf16.msra.mxu0 %v2531
      %2704 = vmatprep.subr.bf16.mxu0 %v2543
      %2705 = vmatpush1.bf16.msra.mxu0 %v2548
      %2706 = vmatprep.subr.bf16.mxu0 %v2547
      %2707 = vmatpush1.bf16.msra.mxu0 %v2549
      %2708 = vmatprep.subr.bf16.mxu0 %v2557
      %2709 = vmatpush1.bf16.msra.mxu0 %v2562
      %2710 = vmatprep.subr.bf16.mxu0 %v2561
      %2711 = vmatpush1.bf16.msra.mxu0 %v2563
      %2712 = vmatprep.subr.bf16.mxu0 %v2575
      %2713 = vmatpush1.bf16.msra.mxu0 %v2580
      %2714 = vmatprep.subr.bf16.mxu0 %v2579
      %2715 = vmatpush1.bf16.msra.mxu0 %v2581
      %2716 = vmatprep.subr.bf16.mxu0 %v2593
      %2717 = vmatpush1.bf16.msra.mxu0 %v2598
      %2718 = vmatprep.subr.bf16.mxu0 %v2597
      %2719 = vmatpush1.bf16.msra.mxu0 %v2599
      %2720 = vmatprep.subr.bf16.mxu0 %v2607
      %2721 = vmatpush1.bf16.msra.mxu0 %v2612
      %2722 = vmatprep.subr.bf16.mxu0 %v2611
      %2723 = vmatpush1.bf16.msra.mxu0 %v2613
      %2724 = vmatprep.mubr.bf16.mxu0 %v2677
      %2725 = vmatmul.mubr.bf16.gmra.mrb[0].mxu0 %v2676
      %v2726 = vpop.f32.mrb[0].mxu0
      %v2727 = vadd.f32 %v2639, %v2726
      %v2728 = vpop.f32.mrb[0].mxu0
      %v2729 = vadd.f32 %v2639, %v2728
      %v2730 = vpop.f32.mrb[0].mxu0
      %v2731 = vadd.f32 %v2644, %v2730
      %v2732 = vpop.f32.mrb[0].mxu0
      %v2733 = vadd.f32 %v2644, %v2732
      %2734 = vmatprep.mubr.bf16.mxu0 %v2680
      %2735 = vmatmul.mubr.bf16.gmra.mrb[0].mxu0 %v2679
      %v2736 = vpop.f32.mrb[0].mxu0
      %v2737 = vadd.f32 %v2649, %v2736
      %v2738 = vpop.f32.mrb[0].mxu0
      %v2739 = vadd.f32 %v2649, %v2738
      %v2740 = vpop.f32.mrb[0].mxu0
      %v2741 = vadd.f32 %v2654, %v2740
      %v2742 = vpop.f32.mrb[0].mxu0
      %v2743 = vadd.f32 %v2654, %v2742
      %2744 = vdwg.mxu0
      %2745 = vmatprep.subr.bf16.mxu0 %v2625
      %2746 = vmatpush1.bf16.msra.mxu0 %v2630
      %2747 = vmatprep.subr.bf16.mxu0 %v2629
      %2748 = vmatpush1.bf16.msra.mxu0 %v2631
      %2749 = vmatprep.subr.bf16.mxu0 0
      %2750 = vmatpush1.bf16.msra.mxu0 0
      %2751 = vmatprep.subr.bf16.mxu0 0
      %2752 = vmatpush1.bf16.msra.mxu0 0
      %2753 = vmatprep.subr.bf16.mxu0 0
      %2754 = vmatpush1.bf16.msra.mxu0 0
      %2755 = vmatprep.subr.bf16.mxu0 0
      %2756 = vmatpush1.bf16.msra.mxu0 0
      %2757 = vmatprep.subr.bf16.mxu0 0
      %2758 = vmatpush1.bf16.msra.mxu0 0
      %2759 = vmatprep.subr.bf16.mxu0 0
      %2760 = vmatpush1.bf16.msra.mxu0 0
      %2761 = vmatprep.subr.bf16.mxu0 0
      %2762 = vmatpush1.bf16.msra.mxu0 0
      %2763 = vmatprep.subr.bf16.mxu0 0
      %2764 = vmatpush1.bf16.msra.mxu0 0
      %2765 = vmatprep.subr.bf16.mxu0 0
      %2766 = vmatpush1.bf16.msra.mxu0 0
      %2767 = vmatprep.subr.bf16.mxu0 0
      %2768 = vmatpush1.bf16.msra.mxu0 0
      %2769 = vmatprep.subr.bf16.mxu0 0
      %2770 = vmatpush1.bf16.msra.mxu0 0
      %2771 = vmatprep.subr.bf16.mxu0 0
      %2772 = vmatpush1.bf16.msra.mxu0 0
      %2773 = vmatprep.subr.bf16.mxu0 0
      %2774 = vmatpush1.bf16.msra.mxu0 0
      %2775 = vmatprep.subr.bf16.mxu0 0
      %2776 = vmatpush1.bf16.msra.mxu0 0
      %2777 = vmatprep.mubr.bf16.mxu0 0
      %2778 = vmatmul.mubr.bf16.gmra.mrb[0].mxu0 %v2687
      %v2779 = vpop.f32.mrb[0].mxu0
      %v2780 = vadd.f32 %v2727, %v2779
      %v2781 = vpop.f32.mrb[0].mxu0
      %v2782 = vadd.f32 %v2729, %v2781
      %v2783 = vpop.f32.mrb[0].mxu0
      %v2784 = vadd.f32 %v2731, %v2783
      %v2785 = vpop.f32.mrb[0].mxu0
      %v2786 = vadd.f32 %v2733, %v2785
      %2787 = vmatprep.mubr.bf16.mxu0 0
      %2788 = vmatmul.mubr.bf16.gmra.mrb[0].mxu0 %v2690
      %v2789 = vpop.f32.mrb[0].mxu0
      %v2790 = vadd.f32 %v2737, %v2789
      %v2791 = vpop.f32.mrb[0].mxu0
      %v2792 = vadd.f32 %v2739, %v2791
      %v2793 = vpop.f32.mrb[0].mxu0
      %v2794 = vadd.f32 %v2741, %v2793
      %v2795 = vpop.f32.mrb[0].mxu0
      %v2796 = vadd.f32 %v2743, %v2795
      %2797 = vdwg.mxu0
      %v2798 = vadd.f32 %v1893, %v2780
      %v2799 = vadd.f32 %v1895, %v2782
      %v2800 = vadd.f32 %v1897, %v2784
      %v2801 = vadd.f32 %v1899, %v2786
      %v2802 = vadd.f32 %v1903, %v2790
      %v2803 = vadd.f32 %v1905, %v2792
      %v2804 = vadd.f32 %v1907, %v2794
      %v2805 = vadd.f32 %v1909, %v2796
      %s2806 = scalar_lea.vmem %s5, 96
      %v2807 = vld [vmem:[%s2806] sm:$0xff]
      %v2808 = vld [vmem:[%s2806 + $0x8] sm:$0xf]
      %v2809 = vld [vmem:[%s2806 + $0xc] sm:$0xff]
      %v2810 = vld [vmem:[%s2806 + $0x14] sm:$0xf]
      %v2811 = vld [vmem:[%s2806 + $0x18] sm:$0xff]
      %v2812 = vld [vmem:[%s2806 + $0x20] sm:$0xf]
      %v2813 = vld [vmem:[%s2806 + $0x24] sm:$0xff]
      %v2814 = vld [vmem:[%s2806 + $0x2c] sm:$0xf]
      %s2815 = scalar_lea.vmem %s6, 64
      %v2816 = vld [vmem:[%s2815] sm:$0xff]
      %v2817 = vld [vmem:[%s2815 + $0x8] sm:$0xff]
      %v2818 = vld [vmem:[%s2815 + $0x10] sm:$0xff]
      %v2819 = vld [vmem:[%s2815 + $0x18] sm:$0xff]
      %2828 = vrot.lane.b32.xlu0 %v2798, 15
      %v2829 = vpop.permute.xlu0 %2828
      %2830 = vrot.lane.b32.xlu0 %v2799, 15
      %v2831 = vpop.permute.xlu0 %2830
      %2832 = vrot.lane.b32.xlu0 %v2800, 15
      %v2833 = vpop.permute.xlu0 %2832
      %2834 = vrot.lane.b32.xlu0 %v2801, 15
      %v2835 = vpop.permute.xlu0 %2834
      %2836 = vrot.lane.b32.xlu0 %v2802, 15
      %v2837 = vpop.permute.xlu0 %2836
      %2838 = vrot.lane.b32.xlu0 %v2803, 15
      %v2839 = vpop.permute.xlu0 %2838
      %2840 = vrot.lane.b32.xlu0 %v2804, 15
      %v2841 = vpop.permute.xlu0 %2840
      %2842 = vrot.lane.b32.xlu0 %v2805, 15
      %v2843 = vpop.permute.xlu0 %2842
      %v2844 = vsel %vm853, %v2829, %v2831
      %v2845 = vsel %vm853, %v2833, %v2835
      %v2846 = vsel %vm853, %v2837, %v2839
      %v2847 = vsel %vm853, %v2841, %v2843
      %v2856 = vsel %vm853, 0.0, %v2829
      %v2857 = vsel %vm853, 0.0, %v2833
      %v2858 = vsel %vm853, 0.0, %v2837
      %v2859 = vsel %vm853, 0.0, %v2841
      %v2860 = vsel %vm567, %v2844, 0.0
      %v2861 = vsel %vm567, %v2845, 0.0
      %v2862 = vsel %vm567, %v2846, 0.0
      %v2863 = vsel %vm567, %v2847, 0.0
      %v2864 = vmul.f32 %v2856, %v379
      %v2865 = vmul.f32 %v2860, %v380
      %v2866 = vmul.f32 %v2857, %v379
      %v2867 = vmul.f32 %v2861, %v380
      %v2868 = vmul.f32 %v2858, %v379
      %v2869 = vmul.f32 %v2862, %v380
      %v2870 = vmul.f32 %v2859, %v379
      %v2871 = vmul.f32 %v2863, %v380
      %v2872 = vpack.c.bf16 %v2866, %v2864
      %v2873 = vpack.c.bf16 %v2867, %v2865
      %v2874 = vpack.c.bf16 %v2870, %v2868
      %v2875 = vpack.c.bf16 %v2871, %v2869
      %v2876 = vpack.c.bf16 %v2857, %v2856
      %v2877 = vpack.c.bf16 %v2861, %v2860
      %v2878 = vpack.c.bf16 %v2859, %v2858
      %v2879 = vpack.c.bf16 %v2863, %v2862
      %v2880 = vmul.f32 %v2856, %v965
      %v2881 = vmul.f32 %v2860, %v969
      %v2882 = vmul.f32 %v2857, %v965
      %v2883 = vmul.f32 %v2861, %v969
      %v2884 = vmul.f32 %v2858, %v965
      %v2885 = vmul.f32 %v2862, %v969
      %v2886 = vmul.f32 %v2859, %v965
      %v2887 = vmul.f32 %v2863, %v969
      %v2888 = vpack.c.bf16 %v2882, %v2880
      %v2889 = vpack.c.bf16 %v2883, %v2881
      %v2890 = vpack.c.bf16 %v2886, %v2884
      %v2891 = vpack.c.bf16 %v2887, %v2885
      %v2892 = vmul.f32 %v2856, %v1011
      %v2893 = vmul.f32 %v2860, %v1015
      %v2894 = vmul.f32 %v2857, %v1011
      %v2895 = vmul.f32 %v2861, %v1015
      %v2896 = vmul.f32 %v2858, %v1011
      %v2897 = vmul.f32 %v2862, %v1015
      %v2898 = vmul.f32 %v2859, %v1011
      %v2899 = vmul.f32 %v2863, %v1015
      %v2900 = vpack.c.bf16 %v2894, %v2892
      %v2901 = vpack.c.bf16 %v2895, %v2893
      %v2902 = vpack.c.bf16 %v2898, %v2896
      %v2903 = vpack.c.bf16 %v2899, %v2897
      %v2904 = vmul.f32 %v2856, %v1055
      %v2905 = vmul.f32 %v2860, %v1059
      %v2906 = vmul.f32 %v2857, %v1055
      %v2907 = vmul.f32 %v2861, %v1059
      %v2908 = vmul.f32 %v2858, %v1055
      %v2909 = vmul.f32 %v2862, %v1059
      %v2910 = vmul.f32 %v2859, %v1055
      %v2911 = vmul.f32 %v2863, %v1059
      %v2912 = vpack.c.bf16 %v2906, %v2904
      %v2913 = vpack.c.bf16 %v2907, %v2905
      %v2914 = vpack.c.bf16 %v2910, %v2908
      %v2915 = vpack.c.bf16 %v2911, %v2909
      %v2916 = vmul.f32 %v2856, %v1099
      %v2917 = vmul.f32 %v2860, %v1103
      %v2918 = vmul.f32 %v2857, %v1099
      %v2919 = vmul.f32 %v2861, %v1103
      %v2920 = vmul.f32 %v2858, %v1099
      %v2921 = vmul.f32 %v2862, %v1103
      %v2922 = vmul.f32 %v2859, %v1099
      %v2923 = vmul.f32 %v2863, %v1103
      %v2924 = vpack.c.bf16 %v2918, %v2916
      %v2925 = vpack.c.bf16 %v2919, %v2917
      %v2926 = vpack.c.bf16 %v2922, %v2920
      %v2927 = vpack.c.bf16 %v2923, %v2921
      %v2928 = vmul.f32 %v2856, %v1143
      %v2929 = vmul.f32 %v2860, %v1147
      %v2930 = vmul.f32 %v2857, %v1143
      %v2931 = vmul.f32 %v2861, %v1147
      %v2932 = vmul.f32 %v2858, %v1143
      %v2933 = vmul.f32 %v2862, %v1147
      %v2934 = vmul.f32 %v2859, %v1143
      %v2935 = vmul.f32 %v2863, %v1147
      %v2936 = vpack.c.bf16 %v2930, %v2928
      %v2937 = vpack.c.bf16 %v2931, %v2929
      %v2938 = vpack.c.bf16 %v2934, %v2932
      %v2939 = vpack.c.bf16 %v2935, %v2933
      %2944 = vrot.lane.b32.xlu0 %v2876, 127
      %v2945 = vpop.permute.xlu0 %2944
      %2946 = vrot.lane.b32.xlu0 %v2877, 127
      %v2947 = vpop.permute.xlu0 %2946
      %2948 = vrot.lane.b32.xlu0 %v2878, 127
      %v2949 = vpop.permute.xlu0 %2948
      %2950 = vrot.lane.b32.xlu0 %v2879, 127
      %v2951 = vpop.permute.xlu0 %2950
      %v2952 = vsel %vm1222, %v2945, %v2947
      %v2953 = vsel %vm1222, %v2949, %v2951
      %2962 = vrot.lane.b32.xlu0 %v2888, 126
      %v2963 = vpop.permute.xlu0 %2962
      %2964 = vrot.lane.b32.xlu0 %v2889, 126
      %v2965 = vpop.permute.xlu0 %2964
      %2966 = vrot.lane.b32.xlu0 %v2890, 126
      %v2967 = vpop.permute.xlu0 %2966
      %2968 = vrot.lane.b32.xlu0 %v2891, 126
      %v2969 = vpop.permute.xlu0 %2968
      %v2970 = vsel %vm1277, %v2963, %v2965
      %v2971 = vsel %vm1277, %v2967, %v2969
      %2980 = vrot.lane.b32.xlu0 %v2900, 114
      %v2981 = vpop.permute.xlu0 %2980
      %2982 = vrot.lane.b32.xlu0 %v2901, 114
      %v2983 = vpop.permute.xlu0 %2982
      %2984 = vrot.lane.b32.xlu0 %v2902, 114
      %v2985 = vpop.permute.xlu0 %2984
      %2986 = vrot.lane.b32.xlu0 %v2903, 114
      %v2987 = vpop.permute.xlu0 %2986
      %v2988 = vsel %vm1332, %v2981, %v2983
      %v2989 = vsel %vm1332, %v2985, %v2987
      %2994 = vrot.lane.b32.xlu0 %v2876, 113
      %v2995 = vpop.permute.xlu0 %2994
      %2996 = vrot.lane.b32.xlu0 %v2877, 113
      %v2997 = vpop.permute.xlu0 %2996
      %2998 = vrot.lane.b32.xlu0 %v2878, 113
      %v2999 = vpop.permute.xlu0 %2998
      %3000 = vrot.lane.b32.xlu0 %v2879, 113
      %v3001 = vpop.permute.xlu0 %3000
      %v3002 = vsel %vm1375, %v2995, %v2997
      %v3003 = vsel %vm1375, %v2999, %v3001
      %3012 = vrot.lane.b32.xlu0 %v2912, 112
      %v3013 = vpop.permute.xlu0 %3012
      %3014 = vrot.lane.b32.xlu0 %v2913, 112
      %v3015 = vpop.permute.xlu0 %3014
      %3016 = vrot.lane.b32.xlu0 %v2914, 112
      %v3017 = vpop.permute.xlu0 %3016
      %3018 = vrot.lane.b32.xlu0 %v2915, 112
      %v3019 = vpop.permute.xlu0 %3018
      %v3020 = vsel %vm1430, %v3013, %v3015
      %v3021 = vsel %vm1430, %v3017, %v3019
      %3030 = vrot.lane.b32.xlu0 %v2924, 100
      %v3031 = vpop.permute.xlu0 %3030
      %3032 = vrot.lane.b32.xlu0 %v2925, 100
      %v3033 = vpop.permute.xlu0 %3032
      %3034 = vrot.lane.b32.xlu0 %v2926, 100
      %v3035 = vpop.permute.xlu0 %3034
      %3036 = vrot.lane.b32.xlu0 %v2927, 100
      %v3037 = vpop.permute.xlu0 %3036
      %v3038 = vsel %vm1485, %v3031, %v3033
      %v3039 = vsel %vm1485, %v3035, %v3037
      %3044 = vrot.lane.b32.xlu0 %v2876, 99
      %v3045 = vpop.permute.xlu0 %3044
      %3046 = vrot.lane.b32.xlu0 %v2877, 99
      %v3047 = vpop.permute.xlu0 %3046
      %3048 = vrot.lane.b32.xlu0 %v2878, 99
      %v3049 = vpop.permute.xlu0 %3048
      %3050 = vrot.lane.b32.xlu0 %v2879, 99
      %v3051 = vpop.permute.xlu0 %3050
      %v3052 = vsel %vm1528, %v3045, %v3047
      %v3053 = vsel %vm1528, %v3049, %v3051
      %3062 = vrot.lane.b32.xlu0 %v2936, 98
      %v3063 = vpop.permute.xlu0 %3062
      %3064 = vrot.lane.b32.xlu0 %v2937, 98
      %v3065 = vpop.permute.xlu0 %3064
      %3066 = vrot.lane.b32.xlu0 %v2938, 98
      %v3067 = vpop.permute.xlu0 %3066
      %3068 = vrot.lane.b32.xlu0 %v2939, 98
      %v3069 = vpop.permute.xlu0 %3068
      %v3070 = vsel %vm1583, %v3063, %v3065
      %v3071 = vsel %vm1583, %v3067, %v3069
      %3077 = vset.pattern.permute.xlu0 0
      %3078 = vperm.xlu0 %3077, %v2816
      %v3079 = vpop.permute.xlu0 %3078
      %3082 = vset.pattern.permute.xlu0 0
      %3083 = vperm.xlu0 %3082, %v2817
      %v3084 = vpop.permute.xlu0 %3083
      %3087 = vset.pattern.permute.xlu0 0
      %3088 = vperm.xlu0 %3087, %v2818
      %v3089 = vpop.permute.xlu0 %3088
      %3092 = vset.pattern.permute.xlu0 0
      %3093 = vperm.xlu0 %3092, %v2819
      %v3094 = vpop.permute.xlu0 %3093
      %v3104 = vunpack.c.l.b16 %v2807
      %v3105 = vunpack.c.h.b16 %v2807
      %v3106 = vunpack.c.l.b16 %v2808
      %v3107 = vunpack.c.l.b16 %v2809
      %v3108 = vunpack.c.h.b16 %v2809
      %v3109 = vunpack.c.l.b16 %v2810
      %v3110 = vunpack.c.l.b16 %v2811
      %v3111 = vunpack.c.h.b16 %v2811
      %v3112 = vunpack.c.l.b16 %v2812
      %v3113 = vunpack.c.l.b16 %v2813
      %v3114 = vunpack.c.h.b16 %v2813
      %v3115 = vunpack.c.l.b16 %v2814
      %v3116 = vpack.c.b16 %v3107, %v3104
      %v3117 = vpack.c.b16 %v3108, %v3105
      %v3118 = vpack.c.b16 %v3109, %v3106
      %v3119 = vpack.c.b16 %v3113, %v3110
      %v3120 = vpack.c.b16 %v3114, %v3111
      %v3121 = vpack.c.b16 %v3115, %v3112
      %v3127 = vsel %vm2229, %v3118, 0
      %v3130 = vsel %vm2229, %v3121, 0
      %3132 = vmatprep.subr.bf16.mxu0 %v2873
      %3133 = vmatpush1.bf16.msra.mxu0 %v2872
      %3134 = vmatprep.subr.bf16.mxu0 %v2875
      %3135 = vmatpush1.bf16.msra.mxu0 %v2874
      %3136 = vmatprep.subr.bf16.mxu0 %v2947
      %3137 = vmatpush1.bf16.msra.mxu0 %v2952
      %3138 = vmatprep.subr.bf16.mxu0 %v2951
      %3139 = vmatpush1.bf16.msra.mxu0 %v2953
      %3140 = vmatprep.subr.bf16.mxu0 %v2965
      %3141 = vmatpush1.bf16.msra.mxu0 %v2970
      %3142 = vmatprep.subr.bf16.mxu0 %v2969
      %3143 = vmatpush1.bf16.msra.mxu0 %v2971
      %3144 = vmatprep.subr.bf16.mxu0 %v2983
      %3145 = vmatpush1.bf16.msra.mxu0 %v2988
      %3146 = vmatprep.subr.bf16.mxu0 %v2987
      %3147 = vmatpush1.bf16.msra.mxu0 %v2989
      %3148 = vmatprep.subr.bf16.mxu0 %v2997
      %3149 = vmatpush1.bf16.msra.mxu0 %v3002
      %3150 = vmatprep.subr.bf16.mxu0 %v3001
      %3151 = vmatpush1.bf16.msra.mxu0 %v3003
      %3152 = vmatprep.subr.bf16.mxu0 %v3015
      %3153 = vmatpush1.bf16.msra.mxu0 %v3020
      %3154 = vmatprep.subr.bf16.mxu0 %v3019
      %3155 = vmatpush1.bf16.msra.mxu0 %v3021
      %3156 = vmatprep.subr.bf16.mxu0 %v3033
      %3157 = vmatpush1.bf16.msra.mxu0 %v3038
      %3158 = vmatprep.subr.bf16.mxu0 %v3037
      %3159 = vmatpush1.bf16.msra.mxu0 %v3039
      %3160 = vmatprep.subr.bf16.mxu0 %v3047
      %3161 = vmatpush1.bf16.msra.mxu0 %v3052
      %3162 = vmatprep.subr.bf16.mxu0 %v3051
      %3163 = vmatpush1.bf16.msra.mxu0 %v3053
      %3164 = vmatprep.mubr.bf16.mxu0 %v3117
      %3165 = vmatmul.mubr.bf16.gmra.mrb[0].mxu0 %v3116
      %v3166 = vpop.f32.mrb[0].mxu0
      %v3167 = vadd.f32 %v3079, %v3166
      %v3168 = vpop.f32.mrb[0].mxu0
      %v3169 = vadd.f32 %v3079, %v3168
      %v3170 = vpop.f32.mrb[0].mxu0
      %v3171 = vadd.f32 %v3084, %v3170
      %v3172 = vpop.f32.mrb[0].mxu0
      %v3173 = vadd.f32 %v3084, %v3172
      %3174 = vmatprep.mubr.bf16.mxu0 %v3120
      %3175 = vmatmul.mubr.bf16.gmra.mrb[0].mxu0 %v3119
      %v3176 = vpop.f32.mrb[0].mxu0
      %v3177 = vadd.f32 %v3089, %v3176
      %v3178 = vpop.f32.mrb[0].mxu0
      %v3179 = vadd.f32 %v3089, %v3178
      %v3180 = vpop.f32.mrb[0].mxu0
      %v3181 = vadd.f32 %v3094, %v3180
      %v3182 = vpop.f32.mrb[0].mxu0
      %v3183 = vadd.f32 %v3094, %v3182
      %3184 = vdwg.mxu0
      %3185 = vmatprep.subr.bf16.mxu0 %v3065
      %3186 = vmatpush1.bf16.msra.mxu0 %v3070
      %3187 = vmatprep.subr.bf16.mxu0 %v3069
      %3188 = vmatpush1.bf16.msra.mxu0 %v3071
      %3189 = vmatprep.subr.bf16.mxu0 0
      %3190 = vmatpush1.bf16.msra.mxu0 0
      %3191 = vmatprep.subr.bf16.mxu0 0
      %3192 = vmatpush1.bf16.msra.mxu0 0
      %3193 = vmatprep.subr.bf16.mxu0 0
      %3194 = vmatpush1.bf16.msra.mxu0 0
      %3195 = vmatprep.subr.bf16.mxu0 0
      %3196 = vmatpush1.bf16.msra.mxu0 0
      %3197 = vmatprep.subr.bf16.mxu0 0
      %3198 = vmatpush1.bf16.msra.mxu0 0
      %3199 = vmatprep.subr.bf16.mxu0 0
      %3200 = vmatpush1.bf16.msra.mxu0 0
      %3201 = vmatprep.subr.bf16.mxu0 0
      %3202 = vmatpush1.bf16.msra.mxu0 0
      %3203 = vmatprep.subr.bf16.mxu0 0
      %3204 = vmatpush1.bf16.msra.mxu0 0
      %3205 = vmatprep.subr.bf16.mxu0 0
      %3206 = vmatpush1.bf16.msra.mxu0 0
      %3207 = vmatprep.subr.bf16.mxu0 0
      %3208 = vmatpush1.bf16.msra.mxu0 0
      %3209 = vmatprep.subr.bf16.mxu0 0
      %3210 = vmatpush1.bf16.msra.mxu0 0
      %3211 = vmatprep.subr.bf16.mxu0 0
      %3212 = vmatpush1.bf16.msra.mxu0 0
      %3213 = vmatprep.subr.bf16.mxu0 0
      %3214 = vmatpush1.bf16.msra.mxu0 0
      %3215 = vmatprep.subr.bf16.mxu0 0
      %3216 = vmatpush1.bf16.msra.mxu0 0
      %3217 = vmatprep.mubr.bf16.mxu0 0
      %3218 = vmatmul.mubr.bf16.gmra.mrb[0].mxu0 %v3127
      %v3219 = vpop.f32.mrb[0].mxu0
      %v3220 = vadd.f32 %v3167, %v3219
      %v3221 = vpop.f32.mrb[0].mxu0
      %v3222 = vadd.f32 %v3169, %v3221
      %v3223 = vpop.f32.mrb[0].mxu0
      %v3224 = vadd.f32 %v3171, %v3223
      %v3225 = vpop.f32.mrb[0].mxu0
      %v3226 = vadd.f32 %v3173, %v3225
      %3227 = vmatprep.mubr.bf16.mxu0 0
      %3228 = vmatmul.mubr.bf16.gmra.mrb[0].mxu0 %v3130
      %v3229 = vpop.f32.mrb[0].mxu0
      %v3230 = vadd.f32 %v3177, %v3229
      %v3231 = vpop.f32.mrb[0].mxu0
      %v3232 = vadd.f32 %v3179, %v3231
      %v3233 = vpop.f32.mrb[0].mxu0
      %v3234 = vadd.f32 %v3181, %v3233
      %v3235 = vpop.f32.mrb[0].mxu0
      %v3236 = vadd.f32 %v3183, %v3235
      %3237 = vdwg.mxu0
      %vm3238 = vcmp.ge.f32.partialorder %v3220, 0.0
      %vm3239 = vcmp.ge.f32.partialorder %v3222, 0.0
      %vm3240 = vcmp.ge.f32.partialorder %v3224, 0.0
      %vm3241 = vcmp.ge.f32.partialorder %v3226, 0.0
      %vm3242 = vcmp.ge.f32.partialorder %v3230, 0.0
      %vm3243 = vcmp.ge.f32.partialorder %v3232, 0.0
      %vm3244 = vcmp.ge.f32.partialorder %v3234, 0.0
      %vm3245 = vcmp.ge.f32.partialorder %v3236, 0.0
      %v3246 = vmul.f32 %v3220, 0.01
      %v3247 = vmul.f32 %v3222, 0.01
      %v3248 = vmul.f32 %v3224, 0.01
      %v3249 = vmul.f32 %v3226, 0.01
      %v3250 = vmul.f32 %v3230, 0.01
      %v3251 = vmul.f32 %v3232, 0.01
      %v3252 = vmul.f32 %v3234, 0.01
      %v3253 = vmul.f32 %v3236, 0.01
      %v3254 = vsel %vm3238, %v3220, %v3246
      %v3255 = vsel %vm3239, %v3222, %v3247
      %v3256 = vsel %vm3240, %v3224, %v3248
      %v3257 = vsel %vm3241, %v3226, %v3249
      %v3258 = vsel %vm3242, %v3230, %v3250
      %v3259 = vsel %vm3243, %v3232, %v3251
      %v3260 = vsel %vm3244, %v3234, %v3252
      %v3261 = vsel %vm3245, %v3236, %v3253
      %v3262 = vld [vmem:[%s7] sm:$0x7]
      %v3263 = vld [vmem:[#allocation2] sm:$0x1]
      %3272 = vrot.lane.b32.xlu0 %v3254, 15
      %v3273 = vpop.permute.xlu0 %3272
      %3274 = vrot.lane.b32.xlu0 %v3255, 15
      %v3275 = vpop.permute.xlu0 %3274
      %3276 = vrot.lane.b32.xlu0 %v3256, 15
      %v3277 = vpop.permute.xlu0 %3276
      %3278 = vrot.lane.b32.xlu0 %v3257, 15
      %v3279 = vpop.permute.xlu0 %3278
      %3280 = vrot.lane.b32.xlu0 %v3258, 15
      %v3281 = vpop.permute.xlu0 %3280
      %3282 = vrot.lane.b32.xlu0 %v3259, 15
      %v3283 = vpop.permute.xlu0 %3282
      %3284 = vrot.lane.b32.xlu0 %v3260, 15
      %v3285 = vpop.permute.xlu0 %3284
      %3286 = vrot.lane.b32.xlu0 %v3261, 15
      %v3287 = vpop.permute.xlu0 %3286
      %v3288 = vsel %vm853, %v3273, %v3275
      %v3289 = vsel %vm853, %v3277, %v3279
      %v3290 = vsel %vm853, %v3281, %v3283
      %v3291 = vsel %vm853, %v3285, %v3287
      %v3300 = vsel %vm853, 0.0, %v3273
      %v3301 = vsel %vm853, 0.0, %v3277
      %v3302 = vsel %vm853, 0.0, %v3281
      %v3303 = vsel %vm853, 0.0, %v3285
      %v3304 = vsel %vm567, %v3288, 0.0
      %v3305 = vsel %vm567, %v3289, 0.0
      %v3306 = vsel %vm567, %v3290, 0.0
      %v3307 = vsel %vm567, %v3291, 0.0
      %v3308 = vmul.f32 %v3300, %v379
      %v3309 = vmul.f32 %v3304, %v380
      %v3310 = vmul.f32 %v3301, %v379
      %v3311 = vmul.f32 %v3305, %v380
      %v3312 = vmul.f32 %v3302, %v379
      %v3313 = vmul.f32 %v3306, %v380
      %v3314 = vmul.f32 %v3303, %v379
      %v3315 = vmul.f32 %v3307, %v380
      %v3316 = vpack.c.bf16 %v3310, %v3308
      %v3317 = vpack.c.bf16 %v3311, %v3309
      %v3318 = vpack.c.bf16 %v3314, %v3312
      %v3319 = vpack.c.bf16 %v3315, %v3313
      %v3320 = vpack.c.bf16 %v3301, %v3300
      %v3321 = vpack.c.bf16 %v3305, %v3304
      %v3322 = vpack.c.bf16 %v3303, %v3302
      %v3323 = vpack.c.bf16 %v3307, %v3306
      %v3324 = vmul.f32 %v3300, %v965
      %v3325 = vmul.f32 %v3304, %v969
      %v3326 = vmul.f32 %v3301, %v965
      %v3327 = vmul.f32 %v3305, %v969
      %v3328 = vmul.f32 %v3302, %v965
      %v3329 = vmul.f32 %v3306, %v969
      %v3330 = vmul.f32 %v3303, %v965
      %v3331 = vmul.f32 %v3307, %v969
      %v3332 = vpack.c.bf16 %v3326, %v3324
      %v3333 = vpack.c.bf16 %v3327, %v3325
      %v3334 = vpack.c.bf16 %v3330, %v3328
      %v3335 = vpack.c.bf16 %v3331, %v3329
      %v3336 = vmul.f32 %v3300, %v1011
      %v3337 = vmul.f32 %v3304, %v1015
      %v3338 = vmul.f32 %v3301, %v1011
      %v3339 = vmul.f32 %v3305, %v1015
      %v3340 = vmul.f32 %v3302, %v1011
      %v3341 = vmul.f32 %v3306, %v1015
      %v3342 = vmul.f32 %v3303, %v1011
      %v3343 = vmul.f32 %v3307, %v1015
      %v3344 = vpack.c.bf16 %v3338, %v3336
      %v3345 = vpack.c.bf16 %v3339, %v3337
      %v3346 = vpack.c.bf16 %v3342, %v3340
      %v3347 = vpack.c.bf16 %v3343, %v3341
      %v3348 = vmul.f32 %v3300, %v1055
      %v3349 = vmul.f32 %v3304, %v1059
      %v3350 = vmul.f32 %v3301, %v1055
      %v3351 = vmul.f32 %v3305, %v1059
      %v3352 = vmul.f32 %v3302, %v1055
      %v3353 = vmul.f32 %v3306, %v1059
      %v3354 = vmul.f32 %v3303, %v1055
      %v3355 = vmul.f32 %v3307, %v1059
      %v3356 = vpack.c.bf16 %v3350, %v3348
      %v3357 = vpack.c.bf16 %v3351, %v3349
      %v3358 = vpack.c.bf16 %v3354, %v3352
      %v3359 = vpack.c.bf16 %v3355, %v3353
      %v3360 = vmul.f32 %v3300, %v1099
      %v3361 = vmul.f32 %v3304, %v1103
      %v3362 = vmul.f32 %v3301, %v1099
      %v3363 = vmul.f32 %v3305, %v1103
      %v3364 = vmul.f32 %v3302, %v1099
      %v3365 = vmul.f32 %v3306, %v1103
      %v3366 = vmul.f32 %v3303, %v1099
      %v3367 = vmul.f32 %v3307, %v1103
      %v3368 = vpack.c.bf16 %v3362, %v3360
      %v3369 = vpack.c.bf16 %v3363, %v3361
      %v3370 = vpack.c.bf16 %v3366, %v3364
      %v3371 = vpack.c.bf16 %v3367, %v3365
      %v3372 = vmul.f32 %v3300, %v1143
      %v3373 = vmul.f32 %v3304, %v1147
      %v3374 = vmul.f32 %v3301, %v1143
      %v3375 = vmul.f32 %v3305, %v1147
      %v3376 = vmul.f32 %v3302, %v1143
      %v3377 = vmul.f32 %v3306, %v1147
      %v3378 = vmul.f32 %v3303, %v1143
      %v3379 = vmul.f32 %v3307, %v1147
      %v3380 = vpack.c.bf16 %v3374, %v3372
      %v3381 = vpack.c.bf16 %v3375, %v3373
      %v3382 = vpack.c.bf16 %v3378, %v3376
      %v3383 = vpack.c.bf16 %v3379, %v3377
      %3388 = vrot.lane.b32.xlu0 %v3320, 127
      %v3389 = vpop.permute.xlu0 %3388
      %3390 = vrot.lane.b32.xlu0 %v3321, 127
      %v3391 = vpop.permute.xlu0 %3390
      %3392 = vrot.lane.b32.xlu0 %v3322, 127
      %v3393 = vpop.permute.xlu0 %3392
      %3394 = vrot.lane.b32.xlu0 %v3323, 127
      %v3395 = vpop.permute.xlu0 %3394
      %v3396 = vsel %vm1222, %v3389, %v3391
      %v3397 = vsel %vm1222, %v3393, %v3395
      %3406 = vrot.lane.b32.xlu0 %v3332, 126
      %v3407 = vpop.permute.xlu0 %3406
      %3408 = vrot.lane.b32.xlu0 %v3333, 126
      %v3409 = vpop.permute.xlu0 %3408
      %3410 = vrot.lane.b32.xlu0 %v3334, 126
      %v3411 = vpop.permute.xlu0 %3410
      %3412 = vrot.lane.b32.xlu0 %v3335, 126
      %v3413 = vpop.permute.xlu0 %3412
      %v3414 = vsel %vm1277, %v3407, %v3409
      %v3415 = vsel %vm1277, %v3411, %v3413
      %3424 = vrot.lane.b32.xlu0 %v3344, 114
      %v3425 = vpop.permute.xlu0 %3424
      %3426 = vrot.lane.b32.xlu0 %v3345, 114
      %v3427 = vpop.permute.xlu0 %3426
      %3428 = vrot.lane.b32.xlu0 %v3346, 114
      %v3429 = vpop.permute.xlu0 %3428
      %3430 = vrot.lane.b32.xlu0 %v3347, 114
      %v3431 = vpop.permute.xlu0 %3430
      %v3432 = vsel %vm1332, %v3425, %v3427
      %v3433 = vsel %vm1332, %v3429, %v3431
      %3438 = vrot.lane.b32.xlu0 %v3320, 113
      %v3439 = vpop.permute.xlu0 %3438
      %3440 = vrot.lane.b32.xlu0 %v3321, 113
      %v3441 = vpop.permute.xlu0 %3440
      %3442 = vrot.lane.b32.xlu0 %v3322, 113
      %v3443 = vpop.permute.xlu0 %3442
      %3444 = vrot.lane.b32.xlu0 %v3323, 113
      %v3445 = vpop.permute.xlu0 %3444
      %v3446 = vsel %vm1375, %v3439, %v3441
      %v3447 = vsel %vm1375, %v3443, %v3445
      %3456 = vrot.lane.b32.xlu0 %v3356, 112
      %v3457 = vpop.permute.xlu0 %3456
      %3458 = vrot.lane.b32.xlu0 %v3357, 112
      %v3459 = vpop.permute.xlu0 %3458
      %3460 = vrot.lane.b32.xlu0 %v3358, 112
      %v3461 = vpop.permute.xlu0 %3460
      %3462 = vrot.lane.b32.xlu0 %v3359, 112
      %v3463 = vpop.permute.xlu0 %3462
      %v3464 = vsel %vm1430, %v3457, %v3459
      %v3465 = vsel %vm1430, %v3461, %v3463
      %3474 = vrot.lane.b32.xlu0 %v3368, 100
      %v3475 = vpop.permute.xlu0 %3474
      %3476 = vrot.lane.b32.xlu0 %v3369, 100
      %v3477 = vpop.permute.xlu0 %3476
      %3478 = vrot.lane.b32.xlu0 %v3370, 100
      %v3479 = vpop.permute.xlu0 %3478
      %3480 = vrot.lane.b32.xlu0 %v3371, 100
      %v3481 = vpop.permute.xlu0 %3480
      %v3482 = vsel %vm1485, %v3475, %v3477
      %v3483 = vsel %vm1485, %v3479, %v3481
      %3488 = vrot.lane.b32.xlu0 %v3320, 99
      %v3489 = vpop.permute.xlu0 %3488
      %3490 = vrot.lane.b32.xlu0 %v3321, 99
      %v3491 = vpop.permute.xlu0 %3490
      %3492 = vrot.lane.b32.xlu0 %v3322, 99
      %v3493 = vpop.permute.xlu0 %3492
      %3494 = vrot.lane.b32.xlu0 %v3323, 99
      %v3495 = vpop.permute.xlu0 %3494
      %v3496 = vsel %vm1528, %v3489, %v3491
      %v3497 = vsel %vm1528, %v3493, %v3495
      %3506 = vrot.lane.b32.xlu0 %v3380, 98
      %v3507 = vpop.permute.xlu0 %3506
      %3508 = vrot.lane.b32.xlu0 %v3381, 98
      %v3509 = vpop.permute.xlu0 %3508
      %3510 = vrot.lane.b32.xlu0 %v3382, 98
      %v3511 = vpop.permute.xlu0 %3510
      %3512 = vrot.lane.b32.xlu0 %v3383, 98
      %v3513 = vpop.permute.xlu0 %3512
      %v3514 = vsel %vm1583, %v3507, %v3509
      %v3515 = vsel %vm1583, %v3511, %v3513
      %3521 = vset.pattern.permute.xlu0 0
      %3522 = vperm.xlu0 %3521, %v3263
      %v3523 = vpop.permute.xlu0 %3522
      %v3525 = vlaneseq
      %v3526 = vshrl.u32 %v3525, 7
      %v3527 = vsub.s32 0, %v3526
      %v3528 = vrot.slane %v3523, %v3527
      %v3531 = vunpack.c.l.s4 1966171168
      %v3532 = vunpack.c.0.s8 %v3531
      %v3533 = vlaneseq
      %v3534 = vshrl.u32 %v3533, 7
      %v3535 = vsub.s32 %v3532, %v3534
      %v3536 = vrot.slane %v3262, %v3535
      %v3537 = vcombine.high %v3536, %v3536
      %v3539 = vunpack.c.l.s4 1966171168
      %v3540 = vunpack.c.0.s8 %v3539
      %v3541 = vlaneseq
      %v3542 = vshrl.u32 %v3541, 7
      %v3543 = vsub.s32 %v3540, %v3542
      %v3544 = vrot.slane %v3536, %v3543
      %v3546 = vunpack.c.l.s4 1966171168
      %v3547 = vunpack.c.0.s8 %v3546
      %v3548 = vlaneseq
      %v3549 = vshrl.u32 %v3548, 7
      %v3550 = vsub.s32 %v3547, %v3549
      %v3551 = vrot.slane %v3537, %v3550
      %v3552 = vcombine.high %v3544, %v3544
      %v3556 = vsel %vm2229, %v3552, 0
      %3558 = vmatprep.subr.bf16.mxu0 %v3317
      %3559 = vmatpush1.bf16.msra.mxu0 %v3316
      %3560 = vmatprep.subr.bf16.mxu0 %v3319
      %3561 = vmatpush1.bf16.msra.mxu0 %v3318
      %3562 = vmatprep.subr.bf16.mxu0 %v3391
      %3563 = vmatpush1.bf16.msra.mxu0 %v3396
      %3564 = vmatprep.subr.bf16.mxu0 %v3395
      %3565 = vmatpush1.bf16.msra.mxu0 %v3397
      %3566 = vmatprep.subr.bf16.mxu0 %v3409
      %3567 = vmatpush1.bf16.msra.mxu0 %v3414
      %3568 = vmatprep.subr.bf16.mxu0 %v3413
      %3569 = vmatpush1.bf16.msra.mxu0 %v3415
      %3570 = vmatprep.subr.bf16.mxu0 %v3427
      %3571 = vmatpush1.bf16.msra.mxu0 %v3432
      %3572 = vmatprep.subr.bf16.mxu0 %v3431
      %3573 = vmatpush1.bf16.msra.mxu0 %v3433
      %3574 = vmatprep.subr.bf16.mxu0 %v3441
      %3575 = vmatpush1.bf16.msra.mxu0 %v3446
      %3576 = vmatprep.subr.bf16.mxu0 %v3445
      %3577 = vmatpush1.bf16.msra.mxu0 %v3447
      %3578 = vmatprep.subr.bf16.mxu0 %v3459
      %3579 = vmatpush1.bf16.msra.mxu0 %v3464
      %3580 = vmatprep.subr.bf16.mxu0 %v3463
      %3581 = vmatpush1.bf16.msra.mxu0 %v3465
      %3582 = vmatprep.subr.bf16.mxu0 %v3477
      %3583 = vmatpush1.bf16.msra.mxu0 %v3482
      %3584 = vmatprep.subr.bf16.mxu0 %v3481
      %3585 = vmatpush1.bf16.msra.mxu0 %v3483
      %3586 = vmatprep.subr.bf16.mxu0 %v3491
      %3587 = vmatpush1.bf16.msra.mxu0 %v3496
      %3588 = vmatprep.subr.bf16.mxu0 %v3495
      %3589 = vmatpush1.bf16.msra.mxu0 %v3497
      %3590 = vmatprep.mubr.bf16.mxu0 %v3551
      %3591 = vmatmul.mubr.bf16.gmra.mrb[0].mxu0 %v3544
      %v3592 = vpop.f32.mrb[0].mxu0
      %v3593 = vadd.f32 %v3528, %v3592
      %v3594 = vpop.f32.mrb[0].mxu0
      %v3595 = vadd.f32 %v3528, %v3594
      %v3596 = vpop.f32.mrb[0].mxu0
      %v3597 = vpop.f32.mrb[0].mxu0
      %3598 = vdwg.mxu0
      %3599 = vmatprep.subr.bf16.mxu0 %v3509
      %3600 = vmatpush1.bf16.msra.mxu0 %v3514
      %3601 = vmatprep.subr.bf16.mxu0 %v3513
      %3602 = vmatpush1.bf16.msra.mxu0 %v3515
      %3603 = vmatprep.subr.bf16.mxu0 0
      %3604 = vmatpush1.bf16.msra.mxu0 0
      %3605 = vmatprep.subr.bf16.mxu0 0
      %3606 = vmatpush1.bf16.msra.mxu0 0
      %3607 = vmatprep.subr.bf16.mxu0 0
      %3608 = vmatpush1.bf16.msra.mxu0 0
      %3609 = vmatprep.subr.bf16.mxu0 0
      %3610 = vmatpush1.bf16.msra.mxu0 0
      %3611 = vmatprep.subr.bf16.mxu0 0
      %3612 = vmatpush1.bf16.msra.mxu0 0
      %3613 = vmatprep.subr.bf16.mxu0 0
      %3614 = vmatpush1.bf16.msra.mxu0 0
      %3615 = vmatprep.subr.bf16.mxu0 0
      %3616 = vmatpush1.bf16.msra.mxu0 0
      %3617 = vmatprep.subr.bf16.mxu0 0
      %3618 = vmatpush1.bf16.msra.mxu0 0
      %3619 = vmatprep.subr.bf16.mxu0 0
      %3620 = vmatpush1.bf16.msra.mxu0 0
      %3621 = vmatprep.subr.bf16.mxu0 0
      %3622 = vmatpush1.bf16.msra.mxu0 0
      %3623 = vmatprep.subr.bf16.mxu0 0
      %3624 = vmatpush1.bf16.msra.mxu0 0
      %3625 = vmatprep.subr.bf16.mxu0 0
      %3626 = vmatpush1.bf16.msra.mxu0 0
      %3627 = vmatprep.subr.bf16.mxu0 0
      %3628 = vmatpush1.bf16.msra.mxu0 0
      %3629 = vmatprep.subr.bf16.mxu0 0
      %3630 = vmatpush1.bf16.msra.mxu0 0
      %3631 = vmatprep.mubr.bf16.mxu0 0
      %3632 = vmatmul.mubr.bf16.gmra.mrb[0].mxu0 %v3556
      %v3633 = vpop.f32.mrb[0].mxu0
      %v3634 = vadd.f32 %v3593, %v3633
      %v3635 = vpop.f32.mrb[0].mxu0
      %v3636 = vadd.f32 %v3595, %v3635
      %v3637 = vpop.f32.mrb[0].mxu0
      %v3638 = vpop.f32.mrb[0].mxu0
      %3639 = vdwg.mxu0
      %v3642 = vcombine.low %v3634, %v3636
      %v3644 = vunpack.c.l.s4 1966171168
      %v3645 = vunpack.c.0.s8 %v3644
      %v3646 = vlaneseq
      %v3647 = vshrl.u32 %v3646, 7
      %v3648 = vsub.s32 %v3645, %v3647
      %v3649 = vrot.slane %v3642, %v3648
      %v3651 = vunpack.c.l.s4 1966171168
      %v3652 = vunpack.c.0.s8 %v3651
      %v3653 = vlaneseq
      %v3654 = vshrl.u32 %v3653, 7
      %v3655 = vsub.s32 %v3652, %v3654
      %v3656 = vrot.slane %v3649, %v3655
      %v3658 = vlaneseq
      %vm3659 = vcmp.ge.s32.totalorder %v3658, 0
      %vm3660 = vcmp.lt.s32.totalorder %v3658, 196
      %vm3661 = vmand %vm3659, %vm3660
      %3662 = vst.msk [vmem:[%s332] sm:$0x3] %vm3661, %v3656
      %p3663 = scmp.lt.s32.totalorder %s22, 1
      %s3664 = scalar_select %p3663, %s22, 1
      %s3665 = smul.addr %s3664, 2
      %s3666 = scalar_lea.vmem %s9, %s3665
      // Predicated region
      $region57: #{cnnp_forward.1} parent=55 // pred_check
        %p3667 = pneg %p234
      $region58: #{cnnp_forward.1} parent=55 // pred_check_branch
        %3669 = sbr.rel (%p3667) target = $region60
      $region59: #{cnnp_forward.1} parent=55 // pred_region
        _
      $region60: #{cnnp_forward.1} parent=55 // pred_fallthru
        _
    $region56: #{cnnp_forward.1} parent=5 // pred_fallthru
      _
    %p3670 = scmp.le.s32.totalorder 2, %s17
    // Predicated region
    $region61: #{cnnp_forward.1} parent=5 // pred_check
      %p3671 = pneg %p3670
    $region62: #{cnnp_forward.1} parent=5 // pred_check_branch
      %3673 = sbr.rel (%p3671) target = $region64
    $region63: #{cnnp_forward.1} parent=5 // pred_region
      %s3674 = ssub.s32 %s17, 2
      // Predicated region
      $region65: #{cnnp_forward.1} parent=63 // pred_check
        %p3675 = pneg %p240
      $region66: #{cnnp_forward.1} parent=63 // pred_check_branch
        %3677 = sbr.rel (%p3675) target = $region68
      $region67: #{cnnp_forward.1} parent=63 // pred_region
        %p3678 = scmp.lt.s32.totalorder %s23, 1
        %s3679 = scalar_select %p3678, %s23, 1
        %s3680 = smul.addr %s3679, 2
        %s3681 = scalar_lea.vmem %s9, %s3680
      $region68: #{cnnp_forward.1} parent=63 // pred_fallthru
        _
    $region64: #{cnnp_forward.1} parent=5 // pred_fallthru
      _
  $region6: #{cnnp_forward.1} parent=0 // loop_footer
    %s21 = sadd.s32 1, %s17
  $region7: #{cnnp_forward.1} parent=0 // loop_footer_branch
    %16 = sbr.rel target = $region3
  $region8: #{cnnp_forward.1} parent=0 // loop_exit
    _

</llo_original>
